<compile_context>
chip_gen: v7x
topology: tpu7x:2x2x1
jax: 0.10.0
libtpu: 0.0.40
codegen_flags: <defaults>
</compile_context>

<pallas_src>
import functools
import math
import numpy as np

import jax
import jax.numpy as jnp
from jax import lax
from jax.experimental import pallas as pl
from jax.experimental.pallas import tpu as pltpu


_VMEM = pl.BlockSpec(memory_space=pltpu.MemorySpace.VMEM)
_LN_EPS = 1e-5


def _row_tile(m):
    """Largest row tile (<=512, multiple of 8) that divides m, else m (single block)."""
    for t in (512, 256, 128, 64, 32, 16, 8):
        if m % t == 0:
            return t
    return m


def _bf(x):
    return x.astype(jnp.bfloat16)


def _ln(x, g, b):
    m = jnp.mean(x, axis=-1, keepdims=True)
    c = x - m
    v = jnp.mean(c * c, axis=-1, keepdims=True)
    return c * lax.rsqrt(v + _LN_EPS) * g + b


# ----------------------------------------------------------------------------
# Kernels
# ----------------------------------------------------------------------------

def _frontend_kernel(x_ref, w1_ref, b1_ref, w2_ref, b2_ref, o_ref):
    """fc1 fused with the conformer input projection: o = (x@w1+b1)@w2+b2."""
    h = jnp.dot(_bf(x_ref[...]), w1_ref[...],
                preferred_element_type=jnp.float32) + b1_ref[...]
    o_ref[...] = jnp.dot(_bf(h), w2_ref[...],
                         preferred_element_type=jnp.float32) + b2_ref[...]


def _linear_kernel(x_ref, w_ref, b_ref, o_ref):
    o_ref[...] = jnp.dot(_bf(x_ref[...]), w_ref[...],
                         preferred_element_type=jnp.float32) + b_ref[...]


def _ffn_kernel(x_ref, g_ref, b_ref, w1_ref, b1_ref, w2_ref, b2_ref,
                fg_ref, fb_ref, o_ref, *, final_ln):
    """Fused FFN module: LN -> W1 -> SiLU -> W2 -> x + 0.5*h [-> block-final LN]."""
    x = x_ref[...]
    h = _ln(x, g_ref[...], b_ref[...])
    h = jnp.dot(_bf(h), w1_ref[...],
                preferred_element_type=jnp.float32) + b1_ref[...]
    h = h * jax.nn.sigmoid(h)                                    # SiLU (f32 VPU/EUP)
    h = jnp.dot(_bf(h), w2_ref[...],
                preferred_element_type=jnp.float32) + b2_ref[...]
    r = x + 0.5 * h
    if final_ln:
        r = _ln(r, fg_ref[...], fb_ref[...])
    o_ref[...] = r


def _mhsa_kernel(x_ref, g_ref, b_ref, wqkv_ref, bqkv_ref, wo_ref, bo_ref,
                 o_ref, *, B, T, H, Dh):
    """Fused MHSA module: LN -> fused QKV -> per-(batch,head) attention ->
    per-head folded output projection -> residual add."""
    D = H * Dh
    scale = 1.0 / math.sqrt(Dh)
    x = x_ref[...]
    h = _ln(x, g_ref[...], b_ref[...])
    qkv = jnp.dot(_bf(h), wqkv_ref[...],
                  preferred_element_type=jnp.float32) + bqkv_ref[...]   # (M, 3D)
    # TODO(synk): at realistic T this should become a flash-style tiled attention
    #             over a (q-block, kv-block) grid; at toy sizes a static unroll
    #             over (batch, head) with 2D MXU dots is cheapest.
    for b in range(B):
        r0 = b * T
        y = jnp.zeros((T, D), jnp.float32)
        for hh in range(H):
            c0 = hh * Dh
            q = _bf(qkv[r0:r0 + T, c0:c0 + Dh])
            k = _bf(qkv[r0:r0 + T, D + c0:D + c0 + Dh])
            v = _bf(qkv[r0:r0 + T, 2 * D + c0:2 * D + c0 + Dh])
            s = lax.dot_general(q, k, (((1,), (1,)), ((), ())),
                                preferred_element_type=jnp.float32) * scale
            p = jax.nn.softmax(s, axis=-1)
            o_h = jnp.dot(_bf(p), v, preferred_element_type=jnp.float32)
            # concat_h(o_h) @ Wo  ==  sum_h  o_h @ Wo[h*Dh:(h+1)*Dh, :]
            y = y + jnp.dot(_bf(o_h), wo_ref[c0:c0 + Dh, :],
                            preferred_element_type=jnp.float32)
        o_ref[r0:r0 + T, :] = x[r0:r0 + T, :] + y + bo_ref[...]


def _conv_module_kernel(x_ref, g_ref, b_ref, wa_ref, ba_ref, wg_ref, bg_ref,
                        dww_ref, dwb_ref, bns_ref, bnb_ref, w2_ref, b2_ref,
                        o_ref, hp_ref, *, B, T, K, LPAD):
    """Fused conv module: LN -> pointwise GLU (pre-split weights) -> depthwise
    conv (zero padding kept in a VMEM scratch) -> BatchNorm(eval) -> SiLU ->
    pointwise -> residual add."""
    pad = (K - 1) // 2
    D = x_ref.shape[-1]
    x = x_ref[...]
    h = _ln(x, g_ref[...], b_ref[...])
    hb = _bf(h)
    a = jnp.dot(hb, wa_ref[...], preferred_element_type=jnp.float32) + ba_ref[...]
    g = jnp.dot(hb, wg_ref[...], preferred_element_type=jnp.float32) + bg_ref[...]
    glu = a * jax.nn.sigmoid(g)                                   # GLU

    # Zero-padded copy of the GLU output lives only in VMEM (no HBM round trip).
    # Store offset LPAD is 8-row aligned; tap reads may be unaligned (cheap).
    hp_ref[...] = jnp.zeros_like(hp_ref)
    for b in range(B):
        hp_ref[b, LPAD:LPAD + T, :] = glu[b * T:(b + 1) * T, :]

    w = dww_ref[...]                                              # (K, D) f32
    outs = []
    for b in range(B):
        acc = jnp.zeros((T, D), jnp.float32)
        for k in range(K):
            off = LPAD - pad + k
            acc = acc + hp_ref[b, off:off + T, :] * w[k:k + 1, :]
        outs.append(acc)
    y = jnp.concatenate(outs, axis=0) + dwb_ref[...]
    # TODO(synk): eval-mode BatchNorm folded to an affine with placeholder
    #             running stats (mean=0, var=1), not trained statistics.
    y = y * bns_ref[...] + bnb_ref[...]
    y = y * jax.nn.sigmoid(y)                                     # SiLU
    y = jnp.dot(_bf(y), w2_ref[...],
                preferred_element_type=jnp.float32) + b2_ref[...]
    o_ref[...] = x + y


# ----------------------------------------------------------------------------
# Wrappers
# ----------------------------------------------------------------------------

def pallas_frontend(x, w1, b1, w2, b2):
    M, K = x.shape
    N1, N2 = w1.shape[1], w2.shape[1]
    tm = _row_tile(M)
    return pl.pallas_call(
        _frontend_kernel,
        out_shape=jax.ShapeDtypeStruct((M, N2), jnp.float32),
        grid=(M // tm,),
        in_specs=[pl.BlockSpec((tm, K), lambda i: (i, 0)),
                  pl.BlockSpec((K, N1), lambda i: (0, 0)),
                  pl.BlockSpec((1, N1), lambda i: (0, 0)),
                  pl.BlockSpec((N1, N2), lambda i: (0, 0)),
                  pl.BlockSpec((1, N2), lambda i: (0, 0))],
        out_specs=pl.BlockSpec((tm, N2), lambda i: (i, 0)),
        compiler_params=pltpu.CompilerParams(dimension_semantics=("parallel",)),
    )(x, w1, b1.reshape(1, N1), w2, b2.reshape(1, N2))


def pallas_linear(x, w, b):
    M, K = x.shape
    N = w.shape[1]
    tm = _row_tile(M)
    return pl.pallas_call(
        _linear_kernel,
        out_shape=jax.ShapeDtypeStruct((M, N), jnp.float32),
        grid=(M // tm,),
        in_specs=[pl.BlockSpec((tm, K), lambda i: (i, 0)),
                  pl.BlockSpec((K, N), lambda i: (0, 0)),
                  pl.BlockSpec((1, N), lambda i: (0, 0))],
        out_specs=pl.BlockSpec((tm, N), lambda i: (i, 0)),
        compiler_params=pltpu.CompilerParams(dimension_semantics=("parallel",)),
    )(x, w, b.reshape(1, N))


def ffn_module(x, g, b, w1, b1, w2, b2, final_g=None, final_b=None):
    M, D = x.shape
    F = w1.shape[1]
    tm = _row_tile(M)
    final_ln = final_g is not None
    if not final_ln:  # dummies (unused when final_ln=False)
        final_g = jnp.ones((D,), jnp.float32)
        final_b = jnp.zeros((D,), jnp.float32)
    return pl.pallas_call(
        functools.partial(_ffn_kernel, final_ln=final_ln),
        out_shape=jax.ShapeDtypeStruct((M, D), jnp.float32),
        grid=(M // tm,),
        in_specs=[pl.BlockSpec((tm, D), lambda i: (i, 0)),
                  pl.BlockSpec((1, D), lambda i: (0, 0)),
                  pl.BlockSpec((1, D), lambda i: (0, 0)),
                  pl.BlockSpec((D, F), lambda i: (0, 0)),
                  pl.BlockSpec((1, F), lambda i: (0, 0)),
                  pl.BlockSpec((F, D), lambda i: (0, 0)),
                  pl.BlockSpec((1, D), lambda i: (0, 0)),
                  pl.BlockSpec((1, D), lambda i: (0, 0)),
                  pl.BlockSpec((1, D), lambda i: (0, 0))],
        out_specs=pl.BlockSpec((tm, D), lambda i: (i, 0)),
        compiler_params=pltpu.CompilerParams(dimension_semantics=("parallel",)),
    )(x, g.reshape(1, D), b.reshape(1, D), w1, b1.reshape(1, F), w2,
      b2.reshape(1, D), final_g.reshape(1, D), final_b.reshape(1, D))


def mhsa_module(x, p, *, batch, seq, num_heads):
    M, D = x.shape
    Dh = D // num_heads
    return pl.pallas_call(
        functools.partial(_mhsa_kernel, B=batch, T=seq, H=num_heads, Dh=Dh),
        out_shape=jax.ShapeDtypeStruct((M, D), jnp.float32),
        in_specs=[_VMEM] * 7,
        out_specs=_VMEM,
    )(x, p["mhsa_ln_g"].reshape(1, D), p["mhsa_ln_b"].reshape(1, D),
      p["wqkv"], p["bqkv"].reshape(1, 3 * D), p["wo"], p["bo"].reshape(1, D))


def conv_module(x, p, *, batch, seq, dw_kernel):
    M, D = x.shape
    pad = (dw_kernel - 1) // 2
    lpad = ((pad + 7) // 8) * 8          # 8-row aligned left pad for the scratch
    return pl.pallas_call(
        functools.partial(_conv_module_kernel, B=batch, T=seq, K=dw_kernel,
                          LPAD=lpad),
        out_shape=jax.ShapeDtypeStruct((M, D), jnp.float32),
        in_specs=[_VMEM] * 13,
        out_specs=_VMEM,
        scratch_shapes=[pltpu.VMEM((batch, lpad + seq + pad, D), jnp.float32)],
    )(x, p["conv_ln_g"].reshape(1, D), p["conv_ln_b"].reshape(1, D),
      p["pw1_wa"], p["pw1_ba"].reshape(1, D),
      p["pw1_wg"], p["pw1_bg"].reshape(1, D),
      p["dw_w"], p["dw_b"].reshape(1, D),
      p["bn_scale"].reshape(1, D), p["bn_bias"].reshape(1, D),
      p["pw2_w"], p["pw2_b"].reshape(1, D))


# ----------------------------------------------------------------------------
# Conformer block + full model
# ----------------------------------------------------------------------------

def conformer_block(x, p, *, batch, seq, num_heads, dw_kernel):
    x = ffn_module(x, p["ffn1_ln_g"], p["ffn1_ln_b"],
                   p["ffn1_w1"], p["ffn1_b1"], p["ffn1_w2"], p["ffn1_b2"])
    x = mhsa_module(x, p, batch=batch, seq=seq, num_heads=num_heads)
    x = conv_module(x, p, batch=batch, seq=seq, dw_kernel=dw_kernel)
    x = ffn_module(x, p["ffn2_ln_g"], p["ffn2_ln_b"],
                   p["ffn2_w1"], p["ffn2_b1"], p["ffn2_w2"], p["ffn2_b2"],
                   final_g=p["final_ln_g"], final_b=p["final_ln_b"])
    return x


def _adaptive_avgpool_matrix(t_in, t_out):
    m = np.zeros((t_in, t_out), np.float32)
    for i in range(t_out):
        s = (i * t_in) // t_out
        e = -((-(i + 1) * t_in) // t_out)  # ceil
        m[s:e, i] = 1.0 / (e - s)
    return jnp.asarray(m)


def _linear_interp_matrix(t_in, t_out):
    # PyTorch F.interpolate(mode='linear', align_corners=False)
    m = np.zeros((t_in, t_out), np.float32)
    for i in range(t_out):
        src = (i + 0.5) * t_in / t_out - 0.5
        src = min(max(src, 0.0), t_in - 1)
        i0 = int(np.floor(src))
        i1 = min(i0 + 1, t_in - 1)
        w1 = src - i0
        m[i0, i] += 1.0 - w1
        m[i1, i] += w1
    return jnp.asarray(m)


def conformer_feature_extractor(x, params, *, out_size, num_heads, dw_kernel):
    """x: (B, in_channels, T)  ->  (B, 1, hidden, out_size)"""
    B, Cin, T = x.shape

    # AdaptiveAvgPool2d((None, out_size)) over time: tiny constant matmul, left
    # to plain XLA so it fuses with the adjacent transpose/reshape.
    pool_m = _adaptive_avgpool_matrix(T, out_size)                  # (T, out)
    xp = jnp.einsum("bct,to->bco", x, pool_m)                       # (B, Cin, out)
    h = xp.transpose(0, 2, 1).reshape(B * out_size, Cin)            # (M, Cin)

    # fc1 fused with the conformer encoder input projection.
    h = pallas_frontend(h, params["fc1_w"], params["fc1_b"],
                        params["in_proj_w"], params["in_proj_b"])   # (M, enc_dim)

    for lp in params["layers"]:
        h = conformer_block(h, lp, batch=B, seq=out_size,
                            num_heads=num_heads, dw_kernel=dw_kernel)

    D = h.shape[-1]
    # F.interpolate(mode='linear', align_corners=False) over time (identity when
    # T' == out_size); tiny constant matmul -> plain jnp.
    interp_m = _linear_interp_matrix(out_size, out_size)            # (T', out)
    h3 = jnp.einsum("btd,to->bod", h.reshape(B, out_size, D), interp_m)

    # fc2
    h2 = pallas_linear(h3.reshape(B * out_size, D),
                       params["fc2_w"], params["fc2_b"])            # (M, hidden)
    out = h2.reshape(B, out_size, -1).transpose(0, 2, 1)            # (B, hidden, out)
    return out[:, None, :, :]                                       # (B, 1, hidden, out)


# ----------------------------------------------------------------------------
# Deterministic parameter construction (matmul weights in bf16, rest f32)
# ----------------------------------------------------------------------------

def init_params(key, in_channels, hidden, num_layers, enc_dim, ffn_dim, dw_kernel):
    keys = iter(jax.random.split(key, 8 + 32 * num_layers))

    def nrm(shape, scale=0.02):
        return scale * jax.random.normal(next(keys), shape, jnp.float32)

    def unif(shape, r=0.1):
        return jax.random.uniform(next(keys), shape, jnp.float32, -r, r)

    bf = lambda a: a.astype(jnp.bfloat16)   # MXU weights in bf16 (f32 accumulation)
    z = lambda n: jnp.zeros((n,), jnp.float32)
    o = lambda n: jnp.ones((n,), jnp.float32)

    params = {
        "fc1_w": bf(unif((in_channels, hidden))), "fc1_b": z(hidden),   # init_weights()
        "fc2_w": bf(unif((enc_dim, hidden))), "fc2_b": z(hidden),
        "in_proj_w": bf(nrm((hidden, enc_dim))), "in_proj_b": z(enc_dim),
        "layers": [],
    }
    bn_eps = 1e-5
    for _ in range(num_layers):
        wq = nrm((enc_dim, enc_dim))
        wk = nrm((enc_dim, enc_dim))
        wv = nrm((enc_dim, enc_dim))
        lp = dict(
            ffn1_ln_g=o(enc_dim), ffn1_ln_b=z(enc_dim),
            ffn1_w1=bf(nrm((enc_dim, ffn_dim))), ffn1_b1=z(ffn_dim),
            ffn1_w2=bf(nrm((ffn_dim, enc_dim))), ffn1_b2=z(enc_dim),
            mhsa_ln_g=o(enc_dim), mhsa_ln_b=z(enc_dim),
            wqkv=bf(jnp.concatenate([wq, wk, wv], axis=1)),     # fused (D, 3D)
            bqkv=z(3 * enc_dim),
            wo=bf(nrm((enc_dim, enc_dim))), bo=z(enc_dim),
            conv_ln_g=o(enc_dim), conv_ln_b=z(enc_dim),
            pw1_wa=bf(nrm((enc_dim, enc_dim))), pw1_ba=z(enc_dim),   # GLU pre-split
            pw1_wg=bf(nrm((enc_dim, enc_dim))), pw1_bg=z(enc_dim),
            dw_w=nrm((dw_kernel, enc_dim)), dw_b=z(enc_dim),
            bn_scale=jnp.full((enc_dim,), 1.0 / np.sqrt(1.0 + bn_eps), jnp.float32),
            bn_bias=z(enc_dim),
            pw2_w=bf(nrm((enc_dim, enc_dim))), pw2_b=z(enc_dim),
            ffn2_ln_g=o(enc_dim), ffn2_ln_b=z(enc_dim),
            ffn2_w1=bf(nrm((enc_dim, ffn_dim))), ffn2_b1=z(ffn_dim),
            ffn2_w2=bf(nrm((ffn_dim, enc_dim))), ffn2_b2=z(enc_dim),
            final_ln_g=o(enc_dim), final_ln_b=z(enc_dim),
        )
        params["layers"].append(lp)
    return params


# ----------------------------------------------------------------------------
# Main
# ----------------------------------------------------------------------------

if __name__ == "__main__":
    B = 2
    IN_CHANNELS = 4
    T = 16
    HIDDEN = 32
    NUM_LAYERS = 2
    OUT_SIZE = 8
    ENC_DIM = 2 * HIDDEN       # conformer encoder_dim = 2 * hidden_size
    FFN_DIM = 4 * ENC_DIM
    NUM_HEADS = 4
    DW_KERNEL = 7              # small depthwise kernel for the small example shapes

    key = jax.random.PRNGKey(0)
    pkey, xkey = jax.random.split(key)
    params = init_params(pkey, IN_CHANNELS, HIDDEN, NUM_LAYERS,
                         ENC_DIM, FFN_DIM, DW_KERNEL)

    x = jax.random.normal(xkey, (B, IN_CHANNELS, T), jnp.float32)

    fwd = jax.jit(functools.partial(conformer_feature_extractor,
                                    out_size=OUT_SIZE, num_heads=NUM_HEADS,
                                    dw_kernel=DW_KERNEL))
    out = jax.block_until_ready(fwd(x, params))

    assert out.shape == (B, 1, HIDDEN, OUT_SIZE), out.shape
    assert out.dtype == jnp.float32
    assert bool(jnp.all(jnp.isfinite(out)))
    print("KERNEL_OK")
</pallas_src>

<mosaic_0001>
module attributes {stable_mosaic.version = 11 : i64} {
  func.func @_frontend_kernel(%arg0: i32, %arg1: memref<16x4xf32, #tpu.memory_space<vmem>>, %arg2: memref<4x32xbf16, #tpu.memory_space<vmem>>, %arg3: memref<1x32xf32, #tpu.memory_space<vmem>>, %arg4: memref<32x64xbf16, #tpu.memory_space<vmem>>, %arg5: memref<1x64xf32, #tpu.memory_space<vmem>>, %arg6: memref<16x64xf32, #tpu.memory_space<vmem>>) attributes {dimension_semantics = [#tpu.dimension_semantics<parallel>], iteration_bounds = array<i64: 1>, scalar_prefetch = 0 : i64, scratch_operands = 0 : i64, tpu.core_type = #tpu.core_type<tc>, window_params = [{transform_indices = @transform_0, window_bounds = array<i64: 16, 4>}, {pipeline_mode = #tpu.pipeline_mode<synchronous>, transform_indices = @transform_1, window_bounds = array<i64: 4, 32>}, {pipeline_mode = #tpu.pipeline_mode<synchronous>, transform_indices = @transform_2, window_bounds = array<i64: 1, 32>}, {pipeline_mode = #tpu.pipeline_mode<synchronous>, transform_indices = @transform_3, window_bounds = array<i64: 32, 64>}, {pipeline_mode = #tpu.pipeline_mode<synchronous>, transform_indices = @transform_4, window_bounds = array<i64: 1, 64>}, {transform_indices = @transform_5, window_bounds = array<i64: 16, 64>}]} {
    %c0 = arith.constant 0 : index
    %c0_0 = arith.constant 0 : index
    %0 = vector.load %arg1[%c0, %c0_0] : memref<16x4xf32, #tpu.memory_space<vmem>>, vector<16x4xf32>
    %1 = arith.truncf %0 : vector<16x4xf32> to vector<16x4xbf16>
    %c0_1 = arith.constant 0 : index
    %c0_2 = arith.constant 0 : index
    %2 = vector.load %arg2[%c0_1, %c0_2] : memref<4x32xbf16, #tpu.memory_space<vmem>>, vector<4x32xbf16>
    %cst = arith.constant dense<0.000000e+00> : vector<16x32xf32>
    %3 = tpu.matmul %1, %2, %cst {dimension_numbers = #tpu.dot_dimension_numbers<[1], [0], [0], [1], [0, 0, 1, 1], [], []>} : vector<16x4xbf16>, vector<4x32xbf16>, vector<16x32xf32> -> vector<16x32xf32>
    %c0_3 = arith.constant 0 : index
    %c0_4 = arith.constant 0 : index
    %4 = vector.load %arg3[%c0_3, %c0_4] : memref<1x32xf32, #tpu.memory_space<vmem>>, vector<1x32xf32>
    %5 = vector.broadcast %4 : vector<1x32xf32> to vector<16x32xf32>
    %6 = arith.addf %3, %5 : vector<16x32xf32>
    %7 = arith.truncf %6 : vector<16x32xf32> to vector<16x32xbf16>
    %c0_5 = arith.constant 0 : index
    %c0_6 = arith.constant 0 : index
    %8 = vector.load %arg4[%c0_5, %c0_6] : memref<32x64xbf16, #tpu.memory_space<vmem>>, vector<32x64xbf16>
    %cst_7 = arith.constant dense<0.000000e+00> : vector<16x64xf32>
    %9 = tpu.matmul %7, %8, %cst_7 {dimension_numbers = #tpu.dot_dimension_numbers<[1], [0], [0], [1], [0, 0, 1, 1], [], []>} : vector<16x32xbf16>, vector<32x64xbf16>, vector<16x64xf32> -> vector<16x64xf32>
    %c0_8 = arith.constant 0 : index
    %c0_9 = arith.constant 0 : index
    %10 = vector.load %arg5[%c0_8, %c0_9] : memref<1x64xf32, #tpu.memory_space<vmem>>, vector<1x64xf32>
    %11 = vector.broadcast %10 : vector<1x64xf32> to vector<16x64xf32>
    %12 = arith.addf %9, %11 : vector<16x64xf32>
    %c0_10 = arith.constant 0 : index
    %c0_11 = arith.constant 0 : index
    %13 = vector.load %arg6[%c0_10, %c0_11] : memref<16x64xf32, #tpu.memory_space<vmem>>, vector<16x64xf32>
    tpu.vector_store %arg6[%c0_10, %c0_11], %12 {strides = array<i32>} : memref<16x64xf32, #tpu.memory_space<vmem>>, vector<16x64xf32>,
    return
  }
  func.func @transform_0(%arg0: i32) -> (i32, i32) {
    %c0_i32 = arith.constant 0 : i32
    %c0_i32_0 = arith.constant 0 : i32
    return %arg0, %c0_i32 : i32, i32
  }
  func.func @transform_1(%arg0: i32) -> (i32, i32) {
    %c0_i32 = arith.constant 0 : i32
    %c0_i32_0 = arith.constant 0 : i32
    %c0_i32_1 = arith.constant 0 : i32
    return %c0_i32, %c0_i32_0 : i32, i32
  }
  func.func @transform_2(%arg0: i32) -> (i32, i32) {
    %c0_i32 = arith.constant 0 : i32
    %c0_i32_0 = arith.constant 0 : i32
    %c0_i32_1 = arith.constant 0 : i32
    return %c0_i32, %c0_i32_0 : i32, i32
  }
  func.func @transform_3(%arg0: i32) -> (i32, i32) {
    %c0_i32 = arith.constant 0 : i32
    %c0_i32_0 = arith.constant 0 : i32
    %c0_i32_1 = arith.constant 0 : i32
    return %c0_i32, %c0_i32_0 : i32, i32
  }
  func.func @transform_4(%arg0: i32) -> (i32, i32) {
    %c0_i32 = arith.constant 0 : i32
    %c0_i32_0 = arith.constant 0 : i32
    %c0_i32_1 = arith.constant 0 : i32
    return %c0_i32, %c0_i32_0 : i32, i32
  }
  func.func @transform_5(%arg0: i32) -> (i32, i32) {
    %c0_i32 = arith.constant 0 : i32
    %c0_i32_0 = arith.constant 0 : i32
    return %arg0, %c0_i32 : i32, i32
  }
}

module attributes {stable_mosaic.version = 11 : i64} {
  func.func @_ffn_kernel(%arg0: i32, %arg1: memref<16x64xf32, #tpu.memory_space<vmem>>, %arg2: memref<1x64xf32, #tpu.memory_space<vmem>>, %arg3: memref<1x64xf32, #tpu.memory_space<vmem>>, %arg4: memref<64x256xbf16, #tpu.memory_space<vmem>>, %arg5: memref<1x256xf32, #tpu.memory_space<vmem>>, %arg6: memref<256x64xbf16, #tpu.memory_space<vmem>>, %arg7: memref<1x64xf32, #tpu.memory_space<vmem>>, %arg8: memref<1x64xf32, #tpu.memory_space<vmem>>, %arg9: memref<1x64xf32, #tpu.memory_space<vmem>>, %arg10: memref<16x64xf32, #tpu.memory_space<vmem>>) attributes {dimension_semantics = [#tpu.dimension_semantics<parallel>], iteration_bounds = array<i64: 1>, scalar_prefetch = 0 : i64, scratch_operands = 0 : i64, tpu.core_type = #tpu.core_type<tc>, window_params = [{transform_indices = @transform_0, window_bounds = array<i64: 16, 64>}, {pipeline_mode = #tpu.pipeline_mode<synchronous>, transform_indices = @transform_1, window_bounds = array<i64: 1, 64>}, {pipeline_mode = #tpu.pipeline_mode<synchronous>, transform_indices = @transform_2, window_bounds = array<i64: 1, 64>}, {pipeline_mode = #tpu.pipeline_mode<synchronous>, transform_indices = @transform_3, window_bounds = array<i64: 64, 256>}, {pipeline_mode = #tpu.pipeline_mode<synchronous>, transform_indices = @transform_4, window_bounds = array<i64: 1, 256>}, {pipeline_mode = #tpu.pipeline_mode<synchronous>, transform_indices = @transform_5, window_bounds = array<i64: 256, 64>}, {pipeline_mode = #tpu.pipeline_mode<synchronous>, transform_indices = @transform_6, window_bounds = array<i64: 1, 64>}, {pipeline_mode = #tpu.pipeline_mode<synchronous>, transform_indices = @transform_7, window_bounds = array<i64: 1, 64>}, {pipeline_mode = #tpu.pipeline_mode<synchronous>, transform_indices = @transform_8, window_bounds = array<i64: 1, 64>}, {transform_indices = @transform_9, window_bounds = array<i64: 16, 64>}]} {
    %c0 = arith.constant 0 : index
    %c0_0 = arith.constant 0 : index
    %0 = vector.load %arg1[%c0, %c0_0] : memref<16x64xf32, #tpu.memory_space<vmem>>, vector<16x64xf32>
    %c0_1 = arith.constant 0 : index
    %c0_2 = arith.constant 0 : index
    %1 = vector.load %arg2[%c0_1, %c0_2] : memref<1x64xf32, #tpu.memory_space<vmem>>, vector<1x64xf32>
    %c0_3 = arith.constant 0 : index
    %c0_4 = arith.constant 0 : index
    %2 = vector.load %arg3[%c0_3, %c0_4] : memref<1x64xf32, #tpu.memory_space<vmem>>, vector<1x64xf32>
    %cst = arith.constant dense<0.000000e+00> : vector<16xf32>
    %3 = vector.multi_reduction <add>, %0, %cst [1] : vector<16x64xf32> to vector<16xf32>
    %4 = vector.shape_cast %3 : vector<16xf32> to vector<16x1xf32>
    %cst_5 = arith.constant 6.400000e+01 : f32
    %5 = vector.broadcast %cst_5 : f32 to vector<16x1xf32>
    %6 = arith.divf %4, %5 : vector<16x1xf32>
    %7 = vector.broadcast %6 : vector<16x1xf32> to vector<16x64xf32>
    %8 = arith.subf %0, %7 : vector<16x64xf32>
    %9 = arith.mulf %8, %8 : vector<16x64xf32>
    %cst_6 = arith.constant dense<0.000000e+00> : vector<16xf32>
    %10 = vector.multi_reduction <add>, %9, %cst_6 [1] : vector<16x64xf32> to vector<16xf32>
    %11 = vector.shape_cast %10 : vector<16xf32> to vector<16x1xf32>
    %cst_7 = arith.constant 6.400000e+01 : f32
    %12 = vector.broadcast %cst_7 : f32 to vector<16x1xf32>
    %13 = arith.divf %11, %12 : vector<16x1xf32>
    %cst_8 = arith.constant 9.99999974E-6 : f32
    %14 = vector.broadcast %cst_8 : f32 to vector<16x1xf32>
    %15 = arith.addf %13, %14 : vector<16x1xf32>
    %16 = math.rsqrt %15 : vector<16x1xf32>
    %17 = vector.broadcast %16 : vector<16x1xf32> to vector<16x64xf32>
    %18 = arith.mulf %8, %17 : vector<16x64xf32>
    %19 = vector.broadcast %1 : vector<1x64xf32> to vector<16x64xf32>
    %20 = arith.mulf %18, %19 : vector<16x64xf32>
    %21 = vector.broadcast %2 : vector<1x64xf32> to vector<16x64xf32>
    %22 = arith.addf %20, %21 : vector<16x64xf32>
    %23 = arith.truncf %22 : vector<16x64xf32> to vector<16x64xbf16>
    %c0_9 = arith.constant 0 : index
    %c0_10 = arith.constant 0 : index
    %24 = vector.load %arg4[%c0_9, %c0_10] : memref<64x256xbf16, #tpu.memory_space<vmem>>, vector<64x256xbf16>
    %cst_11 = arith.constant dense<0.000000e+00> : vector<16x256xf32>
    %25 = tpu.matmul %23, %24, %cst_11 {dimension_numbers = #tpu.dot_dimension_numbers<[1], [0], [0], [1], [0, 0, 1, 1], [], []>} : vector<16x64xbf16>, vector<64x256xbf16>, vector<16x256xf32> -> vector<16x256xf32>
    %c0_12 = arith.constant 0 : index
    %c0_13 = arith.constant 0 : index
    %26 = vector.load %arg5[%c0_12, %c0_13] : memref<1x256xf32, #tpu.memory_space<vmem>>, vector<1x256xf32>
    %27 = vector.broadcast %26 : vector<1x256xf32> to vector<16x256xf32>
    %28 = arith.addf %25, %27 : vector<16x256xf32>
    %29 = arith.negf %28 : vector<16x256xf32>
    %30 = math.exp %29 : vector<16x256xf32>
    %cst_14 = arith.constant 1.000000e+00 : f32
    %31 = vector.broadcast %cst_14 : f32 to vector<16x256xf32>
    %32 = arith.addf %31, %30 : vector<16x256xf32>
    %33 = arith.divf %31, %32 : vector<16x256xf32>
    %34 = arith.mulf %28, %33 : vector<16x256xf32>
    %35 = arith.truncf %34 : vector<16x256xf32> to vector<16x256xbf16>
    %c0_15 = arith.constant 0 : index
    %c0_16 = arith.constant 0 : index
    %36 = vector.load %arg6[%c0_15, %c0_16] : memref<256x64xbf16, #tpu.memory_space<vmem>>, vector<256x64xbf16>
    %cst_17 = arith.constant dense<0.000000e+00> : vector<16x64xf32>
    %37 = tpu.matmul %35, %36, %cst_17 {dimension_numbers = #tpu.dot_dimension_numbers<[1], [0], [0], [1], [0, 0, 1, 1], [], []>} : vector<16x256xbf16>, vector<256x64xbf16>, vector<16x64xf32> -> vector<16x64xf32>
    %c0_18 = arith.constant 0 : index
    %c0_19 = arith.constant 0 : index
    %38 = vector.load %arg7[%c0_18, %c0_19] : memref<1x64xf32, #tpu.memory_space<vmem>>, vector<1x64xf32>
    %39 = vector.broadcast %38 : vector<1x64xf32> to vector<16x64xf32>
    %40 = arith.addf %37, %39 : vector<16x64xf32>
    %cst_20 = arith.constant 5.000000e-01 : f32
    %41 = vector.broadcast %cst_20 : f32 to vector<16x64xf32>
    %42 = arith.mulf %41, %40 : vector<16x64xf32>
    %43 = arith.addf %0, %42 : vector<16x64xf32>
    %c0_21 = arith.constant 0 : index
    %c0_22 = arith.constant 0 : index
    %44 = vector.load %arg10[%c0_21, %c0_22] : memref<16x64xf32, #tpu.memory_space<vmem>>, vector<16x64xf32>
    tpu.vector_store %arg10[%c0_21, %c0_22], %43 {strides = array<i32>} : memref<16x64xf32, #tpu.memory_space<vmem>>, vector<16x64xf32>,
    return
  }
  func.func @transform_0(%arg0: i32) -> (i32, i32) {
    %c0_i32 = arith.constant 0 : i32
    %c0_i32_0 = arith.constant 0 : i32
    return %arg0, %c0_i32 : i32, i32
  }
  func.func @transform_1(%arg0: i32) -> (i32, i32) {
    %c0_i32 = arith.constant 0 : i32
    %c0_i32_0 = arith.constant 0 : i32
    %c0_i32_1 = arith.constant 0 : i32
    return %c0_i32, %c0_i32_0 : i32, i32
  }
  func.func @transform_2(%arg0: i32) -> (i32, i32) {
    %c0_i32 = arith.constant 0 : i32
    %c0_i32_0 = arith.constant 0 : i32
    %c0_i32_1 = arith.constant 0 : i32
    return %c0_i32, %c0_i32_0 : i32, i32
  }
  func.func @transform_3(%arg0: i32) -> (i32, i32) {
    %c0_i32 = arith.constant 0 : i32
    %c0_i32_0 = arith.constant 0 : i32
    %c0_i32_1 = arith.constant 0 : i32
    return %c0_i32, %c0_i32_0 : i32, i32
  }
  func.func @transform_4(%arg0: i32) -> (i32, i32) {
    %c0_i32 = arith.constant 0 : i32
    %c0_i32_0 = arith.constant 0 : i32
    %c0_i32_1 = arith.constant 0 : i32
    return %c0_i32, %c0_i32_0 : i32, i32
  }
  func.func @transform_5(%arg0: i32) -> (i32, i32) {
    %c0_i32 = arith.constant 0 : i32
    %c0_i32_0 = arith.constant 0 : i32
    %c0_i32_1 = arith.constant 0 : i32
    return %c0_i32, %c0_i32_0 : i32, i32
  }
  func.func @transform_6(%arg0: i32) -> (i32, i32) {
    %c0_i32 = arith.constant 0 : i32
    %c0_i32_0 = arith.constant 0 : i32
    %c0_i32_1 = arith.constant 0 : i32
    return %c0_i32, %c0_i32_0 : i32, i32
  }
  func.func @transform_7(%arg0: i32) -> (i32, i32) {
    %c0_i32 = arith.constant 0 : i32
    %c0_i32_0 = arith.constant 0 : i32
    %c0_i32_1 = arith.constant 0 : i32
    return %c0_i32, %c0_i32_0 : i32, i32
  }
  func.func @transform_8(%arg0: i32) -> (i32, i32) {
    %c0_i32 = arith.constant 0 : i32
    %c0_i32_0 = arith.constant 0 : i32
    %c0_i32_1 = arith.constant 0 : i32
    return %c0_i32, %c0_i32_0 : i32, i32
  }
  func.func @transform_9(%arg0: i32) -> (i32, i32) {
    %c0_i32 = arith.constant 0 : i32
    %c0_i32_0 = arith.constant 0 : i32
    return %arg0, %c0_i32 : i32, i32
  }
}

module attributes {stable_mosaic.version = 11 : i64} {
  func.func @_mhsa_kernel(%arg0: memref<16x64xf32, #tpu.memory_space<vmem>>, %arg1: memref<1x64xf32, #tpu.memory_space<vmem>>, %arg2: memref<1x64xf32, #tpu.memory_space<vmem>>, %arg3: memref<64x192xbf16, #tpu.memory_space<vmem>>, %arg4: memref<1x192xf32, #tpu.memory_space<vmem>>, %arg5: memref<64x64xbf16, #tpu.memory_space<vmem>>, %arg6: memref<1x64xf32, #tpu.memory_space<vmem>>, %arg7: memref<16x64xf32, #tpu.memory_space<vmem>>) attributes {dimension_semantics = [], scalar_prefetch = 0 : i64, scratch_operands = 0 : i64, tpu.core_type = #tpu.core_type<tc>} {
    %c0 = arith.constant 0 : index
    %c0_0 = arith.constant 0 : index
    %0 = vector.load %arg0[%c0, %c0_0] : memref<16x64xf32, #tpu.memory_space<vmem>>, vector<16x64xf32>
    %c0_1 = arith.constant 0 : index
    %c0_2 = arith.constant 0 : index
    %1 = vector.load %arg1[%c0_1, %c0_2] : memref<1x64xf32, #tpu.memory_space<vmem>>, vector<1x64xf32>
    %c0_3 = arith.constant 0 : index
    %c0_4 = arith.constant 0 : index
    %2 = vector.load %arg2[%c0_3, %c0_4] : memref<1x64xf32, #tpu.memory_space<vmem>>, vector<1x64xf32>
    %cst = arith.constant dense<0.000000e+00> : vector<16xf32>
    %3 = vector.multi_reduction <add>, %0, %cst [1] : vector<16x64xf32> to vector<16xf32>
    %4 = vector.shape_cast %3 : vector<16xf32> to vector<16x1xf32>
    %cst_5 = arith.constant 6.400000e+01 : f32
    %5 = vector.broadcast %cst_5 : f32 to vector<16x1xf32>
    %6 = arith.divf %4, %5 : vector<16x1xf32>
    %7 = vector.broadcast %6 : vector<16x1xf32> to vector<16x64xf32>
    %8 = arith.subf %0, %7 : vector<16x64xf32>
    %9 = arith.mulf %8, %8 : vector<16x64xf32>
    %cst_6 = arith.constant dense<0.000000e+00> : vector<16xf32>
    %10 = vector.multi_reduction <add>, %9, %cst_6 [1] : vector<16x64xf32> to vector<16xf32>
    %11 = vector.shape_cast %10 : vector<16xf32> to vector<16x1xf32>
    %cst_7 = arith.constant 6.400000e+01 : f32
    %12 = vector.broadcast %cst_7 : f32 to vector<16x1xf32>
    %13 = arith.divf %11, %12 : vector<16x1xf32>
    %cst_8 = arith.constant 9.99999974E-6 : f32
    %14 = vector.broadcast %cst_8 : f32 to vector<16x1xf32>
    %15 = arith.addf %13, %14 : vector<16x1xf32>
    %16 = math.rsqrt %15 : vector<16x1xf32>
    %17 = vector.broadcast %16 : vector<16x1xf32> to vector<16x64xf32>
    %18 = arith.mulf %8, %17 : vector<16x64xf32>
    %19 = vector.broadcast %1 : vector<1x64xf32> to vector<16x64xf32>
    %20 = arith.mulf %18, %19 : vector<16x64xf32>
    %21 = vector.broadcast %2 : vector<1x64xf32> to vector<16x64xf32>
    %22 = arith.addf %20, %21 : vector<16x64xf32>
    %23 = arith.truncf %22 : vector<16x64xf32> to vector<16x64xbf16>
    %c0_9 = arith.constant 0 : index
    %c0_10 = arith.constant 0 : index
    %24 = vector.load %arg3[%c0_9, %c0_10] : memref<64x192xbf16, #tpu.memory_space<vmem>>, vector<64x192xbf16>
    %cst_11 = arith.constant dense<0.000000e+00> : vector<16x192xf32>
    %25 = tpu.matmul %23, %24, %cst_11 {dimension_numbers = #tpu.dot_dimension_numbers<[1], [0], [0], [1], [0, 0, 1, 1], [], []>} : vector<16x64xbf16>, vector<64x192xbf16>, vector<16x192xf32> -> vector<16x192xf32>
    %c0_12 = arith.constant 0 : index
    %c0_13 = arith.constant 0 : index
    %26 = vector.load %arg4[%c0_12, %c0_13] : memref<1x192xf32, #tpu.memory_space<vmem>>, vector<1x192xf32>
    %27 = vector.broadcast %26 : vector<1x192xf32> to vector<16x192xf32>
    %28 = arith.addf %25, %27 : vector<16x192xf32>
    %cst_14 = arith.constant 0.000000e+00 : f32
    %29 = vector.broadcast %cst_14 : f32 to vector<8x64xf32>
    %30 = vector.extract_strided_slice %28 {offsets = [0, 0], sizes = [8, 16], strides = [1, 1]} : vector<16x192xf32> to vector<8x16xf32>
    %31 = arith.truncf %30 : vector<8x16xf32> to vector<8x16xbf16>
    %32 = vector.extract_strided_slice %28 {offsets = [0, 64], sizes = [8, 16], strides = [1, 1]} : vector<16x192xf32> to vector<8x16xf32>
    %33 = arith.truncf %32 : vector<8x16xf32> to vector<8x16xbf16>
    %34 = vector.extract_strided_slice %28 {offsets = [0, 128], sizes = [8, 16], strides = [1, 1]} : vector<16x192xf32> to vector<8x16xf32>
    %35 = arith.truncf %34 : vector<8x16xf32> to vector<8x16xbf16>
    %cst_15 = arith.constant dense<0.000000e+00> : vector<8x8xf32>
    %36 = tpu.matmul %31, %33, %cst_15 {dimension_numbers = #tpu.dot_dimension_numbers<[1], [1], [0], [0], [0, 0, 1, 0], [], []>} : vector<8x16xbf16>, vector<8x16xbf16>, vector<8x8xf32> -> vector<8x8xf32>
    %cst_16 = arith.constant 2.500000e-01 : f32
    %37 = vector.broadcast %cst_16 : f32 to vector<8x8xf32>
    %38 = arith.mulf %36, %37 : vector<8x8xf32>
    %cst_17 = arith.constant dense<0xFF800000> : vector<8xf32>
    %39 = vector.multi_reduction <maximumf>, %38, %cst_17 [1] : vector<8x8xf32> to vector<8xf32>
    %cst_18 = arith.constant 0xFF800000 : f32
    %40 = vector.broadcast %cst_18 : f32 to vector<8xf32>
    %41 = arith.maximumf %40, %39 : vector<8xf32>
    %42 = vector.shape_cast %41 : vector<8xf32> to vector<8x1xf32>
    %43 = vector.broadcast %42 : vector<8x1xf32> to vector<8x8xf32>
    %44 = arith.subf %38, %43 : vector<8x8xf32>
    %45 = math.exp %44 : vector<8x8xf32>
    %cst_19 = arith.constant dense<0.000000e+00> : vector<8xf32>
    %46 = vector.multi_reduction <add>, %45, %cst_19 [1] : vector<8x8xf32> to vector<8xf32>
    %47 = vector.shape_cast %46 : vector<8xf32> to vector<8x1xf32>
    %48 = vector.broadcast %47 : vector<8x1xf32> to vector<8x8xf32>
    %49 = arith.divf %45, %48 : vector<8x8xf32>
    %50 = arith.truncf %49 : vector<8x8xf32> to vector<8x8xbf16>
    %cst_20 = arith.constant dense<0.000000e+00> : vector<8x16xf32>
    %51 = tpu.matmul %50, %35, %cst_20 {dimension_numbers = #tpu.dot_dimension_numbers<[1], [0], [0], [1], [0, 0, 1, 1], [], []>} : vector<8x8xbf16>, vector<8x16xbf16>, vector<8x16xf32> -> vector<8x16xf32>
    %52 = arith.truncf %51 : vector<8x16xf32> to vector<8x16xbf16>
    %c0_21 = arith.constant 0 : index
    %c0_22 = arith.constant 0 : index
    %53 = vector.load %arg5[%c0_21, %c0_22] : memref<64x64xbf16, #tpu.memory_space<vmem>>, vector<16x64xbf16>
    %cst_23 = arith.constant dense<0.000000e+00> : vector<8x64xf32>
    %54 = tpu.matmul %52, %53, %cst_23 {dimension_numbers = #tpu.dot_dimension_numbers<[1], [0], [0], [1], [0, 0, 1, 1], [], []>} : vector<8x16xbf16>, vector<16x64xbf16>, vector<8x64xf32> -> vector<8x64xf32>
    %55 = arith.addf %29, %54 : vector<8x64xf32>
    %56 = vector.extract_strided_slice %28 {offsets = [0, 16], sizes = [8, 16], strides = [1, 1]} : vector<16x192xf32> to vector<8x16xf32>
    %57 = arith.truncf %56 : vector<8x16xf32> to vector<8x16xbf16>
    %58 = vector.extract_strided_slice %28 {offsets = [0, 80], sizes = [8, 16], strides = [1, 1]} : vector<16x192xf32> to vector<8x16xf32>
    %59 = arith.truncf %58 : vector<8x16xf32> to vector<8x16xbf16>
    %60 = vector.extract_strided_slice %28 {offsets = [0, 144], sizes = [8, 16], strides = [1, 1]} : vector<16x192xf32> to vector<8x16xf32>
    %61 = arith.truncf %60 : vector<8x16xf32> to vector<8x16xbf16>
    %cst_24 = arith.constant dense<0.000000e+00> : vector<8x8xf32>
    %62 = tpu.matmul %57, %59, %cst_24 {dimension_numbers = #tpu.dot_dimension_numbers<[1], [1], [0], [0], [0, 0, 1, 0], [], []>} : vector<8x16xbf16>, vector<8x16xbf16>, vector<8x8xf32> -> vector<8x8xf32>
    %cst_25 = arith.constant 2.500000e-01 : f32
    %63 = vector.broadcast %cst_25 : f32 to vector<8x8xf32>
    %64 = arith.mulf %62, %63 : vector<8x8xf32>
    %cst_26 = arith.constant dense<0xFF800000> : vector<8xf32>
    %65 = vector.multi_reduction <maximumf>, %64, %cst_26 [1] : vector<8x8xf32> to vector<8xf32>
    %cst_27 = arith.constant 0xFF800000 : f32
    %66 = vector.broadcast %cst_27 : f32 to vector<8xf32>
    %67 = arith.maximumf %66, %65 : vector<8xf32>
    %68 = vector.shape_cast %67 : vector<8xf32> to vector<8x1xf32>
    %69 = vector.broadcast %68 : vector<8x1xf32> to vector<8x8xf32>
    %70 = arith.subf %64, %69 : vector<8x8xf32>
    %71 = math.exp %70 : vector<8x8xf32>
    %cst_28 = arith.constant dense<0.000000e+00> : vector<8xf32>
    %72 = vector.multi_reduction <add>, %71, %cst_28 [1] : vector<8x8xf32> to vector<8xf32>
    %73 = vector.shape_cast %72 : vector<8xf32> to vector<8x1xf32>
    %74 = vector.broadcast %73 : vector<8x1xf32> to vector<8x8xf32>
    %75 = arith.divf %71, %74 : vector<8x8xf32>
    %76 = arith.truncf %75 : vector<8x8xf32> to vector<8x8xbf16>
    %cst_29 = arith.constant dense<0.000000e+00> : vector<8x16xf32>
    %77 = tpu.matmul %76, %61, %cst_29 {dimension_numbers = #tpu.dot_dimension_numbers<[1], [0], [0], [1], [0, 0, 1, 1], [], []>} : vector<8x8xbf16>, vector<8x16xbf16>, vector<8x16xf32> -> vector<8x16xf32>
    %78 = arith.truncf %77 : vector<8x16xf32> to vector<8x16xbf16>
    %c16 = arith.constant 16 : index
    %c0_30 = arith.constant 0 : index
    %79 = vector.load %arg5[%c16, %c0_30] : memref<64x64xbf16, #tpu.memory_space<vmem>>, vector<16x64xbf16>
    %cst_31 = arith.constant dense<0.000000e+00> : vector<8x64xf32>
    %80 = tpu.matmul %78, %79, %cst_31 {dimension_numbers = #tpu.dot_dimension_numbers<[1], [0], [0], [1], [0, 0, 1, 1], [], []>} : vector<8x16xbf16>, vector<16x64xbf16>, vector<8x64xf32> -> vector<8x64xf32>
    %81 = arith.addf %55, %80 : vector<8x64xf32>
    %82 = vector.extract_strided_slice %28 {offsets = [0, 32], sizes = [8, 16], strides = [1, 1]} : vector<16x192xf32> to vector<8x16xf32>
    %83 = arith.truncf %82 : vector<8x16xf32> to vector<8x16xbf16>
    %84 = vector.extract_strided_slice %28 {offsets = [0, 96], sizes = [8, 16], strides = [1, 1]} : vector<16x192xf32> to vector<8x16xf32>
    %85 = arith.truncf %84 : vector<8x16xf32> to vector<8x16xbf16>
    %86 = vector.extract_strided_slice %28 {offsets = [0, 160], sizes = [8, 16], strides = [1, 1]} : vector<16x192xf32> to vector<8x16xf32>
    %87 = arith.truncf %86 : vector<8x16xf32> to vector<8x16xbf16>
    %cst_32 = arith.constant dense<0.000000e+00> : vector<8x8xf32>
    %88 = tpu.matmul %83, %85, %cst_32 {dimension_numbers = #tpu.dot_dimension_numbers<[1], [1], [0], [0], [0, 0, 1, 0], [], []>} : vector<8x16xbf16>, vector<8x16xbf16>, vector<8x8xf32> -> vector<8x8xf32>
    %cst_33 = arith.constant 2.500000e-01 : f32
    %89 = vector.broadcast %cst_33 : f32 to vector<8x8xf32>
    %90 = arith.mulf %88, %89 : vector<8x8xf32>
    %cst_34 = arith.constant dense<0xFF800000> : vector<8xf32>
    %91 = vector.multi_reduction <maximumf>, %90, %cst_34 [1] : vector<8x8xf32> to vector<8xf32>
    %cst_35 = arith.constant 0xFF800000 : f32
    %92 = vector.broadcast %cst_35 : f32 to vector<8xf32>
    %93 = arith.maximumf %92, %91 : vector<8xf32>
    %94 = vector.shape_cast %93 : vector<8xf32> to vector<8x1xf32>
    %95 = vector.broadcast %94 : vector<8x1xf32> to vector<8x8xf32>
    %96 = arith.subf %90, %95 : vector<8x8xf32>
    %97 = math.exp %96 : vector<8x8xf32>
    %cst_36 = arith.constant dense<0.000000e+00> : vector<8xf32>
    %98 = vector.multi_reduction <add>, %97, %cst_36 [1] : vector<8x8xf32> to vector<8xf32>
    %99 = vector.shape_cast %98 : vector<8xf32> to vector<8x1xf32>
    %100 = vector.broadcast %99 : vector<8x1xf32> to vector<8x8xf32>
    %101 = arith.divf %97, %100 : vector<8x8xf32>
    %102 = arith.truncf %101 : vector<8x8xf32> to vector<8x8xbf16>
    %cst_37 = arith.constant dense<0.000000e+00> : vector<8x16xf32>
    %103 = tpu.matmul %102, %87, %cst_37 {dimension_numbers = #tpu.dot_dimension_numbers<[1], [0], [0], [1], [0, 0, 1, 1], [], []>} : vector<8x8xbf16>, vector<8x16xbf16>, vector<8x16xf32> -> vector<8x16xf32>
    %104 = arith.truncf %103 : vector<8x16xf32> to vector<8x16xbf16>
    %c32 = arith.constant 32 : index
    %c0_38 = arith.constant 0 : index
    %105 = vector.load %arg5[%c32, %c0_38] : memref<64x64xbf16, #tpu.memory_space<vmem>>, vector<16x64xbf16>
    %cst_39 = arith.constant dense<0.000000e+00> : vector<8x64xf32>
    %106 = tpu.matmul %104, %105, %cst_39 {dimension_numbers = #tpu.dot_dimension_numbers<[1], [0], [0], [1], [0, 0, 1, 1], [], []>} : vector<8x16xbf16>, vector<16x64xbf16>, vector<8x64xf32> -> vector<8x64xf32>
    %107 = arith.addf %81, %106 : vector<8x64xf32>
    %108 = vector.extract_strided_slice %28 {offsets = [0, 48], sizes = [8, 16], strides = [1, 1]} : vector<16x192xf32> to vector<8x16xf32>
    %109 = arith.truncf %108 : vector<8x16xf32> to vector<8x16xbf16>
    %110 = vector.extract_strided_slice %28 {offsets = [0, 112], sizes = [8, 16], strides = [1, 1]} : vector<16x192xf32> to vector<8x16xf32>
    %111 = arith.truncf %110 : vector<8x16xf32> to vector<8x16xbf16>
    %112 = vector.extract_strided_slice %28 {offsets = [0, 176], sizes = [8, 16], strides = [1, 1]} : vector<16x192xf32> to vector<8x16xf32>
    %113 = arith.truncf %112 : vector<8x16xf32> to vector<8x16xbf16>
    %cst_40 = arith.constant dense<0.000000e+00> : vector<8x8xf32>
    %114 = tpu.matmul %109, %111, %cst_40 {dimension_numbers = #tpu.dot_dimension_numbers<[1], [1], [0], [0], [0, 0, 1, 0], [], []>} : vector<8x16xbf16>, vector<8x16xbf16>, vector<8x8xf32> -> vector<8x8xf32>
    %cst_41 = arith.constant 2.500000e-01 : f32
    %115 = vector.broadcast %cst_41 : f32 to vector<8x8xf32>
    %116 = arith.mulf %114, %115 : vector<8x8xf32>
    %cst_42 = arith.constant dense<0xFF800000> : vector<8xf32>
    %117 = vector.multi_reduction <maximumf>, %116, %cst_42 [1] : vector<8x8xf32> to vector<8xf32>
    %cst_43 = arith.constant 0xFF800000 : f32
    %118 = vector.broadcast %cst_43 : f32 to vector<8xf32>
    %119 = arith.maximumf %118, %117 : vector<8xf32>
    %120 = vector.shape_cast %119 : vector<8xf32> to vector<8x1xf32>
    %121 = vector.broadcast %120 : vector<8x1xf32> to vector<8x8xf32>
    %122 = arith.subf %116, %121 : vector<8x8xf32>
    %123 = math.exp %122 : vector<8x8xf32>
    %cst_44 = arith.constant dense<0.000000e+00> : vector<8xf32>
    %124 = vector.multi_reduction <add>, %123, %cst_44 [1] : vector<8x8xf32> to vector<8xf32>
    %125 = vector.shape_cast %124 : vector<8xf32> to vector<8x1xf32>
    %126 = vector.broadcast %125 : vector<8x1xf32> to vector<8x8xf32>
    %127 = arith.divf %123, %126 : vector<8x8xf32>
    %128 = arith.truncf %127 : vector<8x8xf32> to vector<8x8xbf16>
    %cst_45 = arith.constant dense<0.000000e+00> : vector<8x16xf32>
    %129 = tpu.matmul %128, %113, %cst_45 {dimension_numbers = #tpu.dot_dimension_numbers<[1], [0], [0], [1], [0, 0, 1, 1], [], []>} : vector<8x8xbf16>, vector<8x16xbf16>, vector<8x16xf32> -> vector<8x16xf32>
    %130 = arith.truncf %129 : vector<8x16xf32> to vector<8x16xbf16>
    %c48 = arith.constant 48 : index
    %c0_46 = arith.constant 0 : index
    %131 = vector.load %arg5[%c48, %c0_46] : memref<64x64xbf16, #tpu.memory_space<vmem>>, vector<16x64xbf16>
    %cst_47 = arith.constant dense<0.000000e+00> : vector<8x64xf32>
    %132 = tpu.matmul %130, %131, %cst_47 {dimension_numbers = #tpu.dot_dimension_numbers<[1], [0], [0], [1], [0, 0, 1, 1], [], []>} : vector<8x16xbf16>, vector<16x64xbf16>, vector<8x64xf32> -> vector<8x64xf32>
    %133 = arith.addf %107, %132 : vector<8x64xf32>
    %134 = vector.extract_strided_slice %0 {offsets = [0, 0], sizes = [8, 64], strides = [1, 1]} : vector<16x64xf32> to vector<8x64xf32>
    %135 = arith.addf %134, %133 : vector<8x64xf32>
    %c0_48 = arith.constant 0 : index
    %c0_49 = arith.constant 0 : index
    %136 = vector.load %arg6[%c0_48, %c0_49] : memref<1x64xf32, #tpu.memory_space<vmem>>, vector<1x64xf32>
    %137 = vector.broadcast %136 : vector<1x64xf32> to vector<8x64xf32>
    %138 = arith.addf %135, %137 : vector<8x64xf32>
    %c0_50 = arith.constant 0 : index
    %c0_51 = arith.constant 0 : index
    %139 = vector.load %arg7[%c0_50, %c0_51] : memref<16x64xf32, #tpu.memory_space<vmem>>, vector<8x64xf32>
    tpu.vector_store %arg7[%c0_50, %c0_51], %138 {strides = array<i32>} : memref<16x64xf32, #tpu.memory_space<vmem>>, vector<8x64xf32>,
    %cst_52 = arith.constant 0.000000e+00 : f32
    %140 = vector.broadcast %cst_52 : f32 to vector<8x64xf32>
    %141 = vector.extract_strided_slice %28 {offsets = [8, 0], sizes = [8, 16], strides = [1, 1]} : vector<16x192xf32> to vector<8x16xf32>
    %142 = arith.truncf %141 : vector<8x16xf32> to vector<8x16xbf16>
    %143 = vector.extract_strided_slice %28 {offsets = [8, 64], sizes = [8, 16], strides = [1, 1]} : vector<16x192xf32> to vector<8x16xf32>
    %144 = arith.truncf %143 : vector<8x16xf32> to vector<8x16xbf16>
    %145 = vector.extract_strided_slice %28 {offsets = [8, 128], sizes = [8, 16], strides = [1, 1]} : vector<16x192xf32> to vector<8x16xf32>
    %146 = arith.truncf %145 : vector<8x16xf32> to vector<8x16xbf16>
    %cst_53 = arith.constant dense<0.000000e+00> : vector<8x8xf32>
    %147 = tpu.matmul %142, %144, %cst_53 {dimension_numbers = #tpu.dot_dimension_numbers<[1], [1], [0], [0], [0, 0, 1, 0], [], []>} : vector<8x16xbf16>, vector<8x16xbf16>, vector<8x8xf32> -> vector<8x8xf32>
    %cst_54 = arith.constant 2.500000e-01 : f32
    %148 = vector.broadcast %cst_54 : f32 to vector<8x8xf32>
    %149 = arith.mulf %147, %148 : vector<8x8xf32>
    %cst_55 = arith.constant dense<0xFF800000> : vector<8xf32>
    %150 = vector.multi_reduction <maximumf>, %149, %cst_55 [1] : vector<8x8xf32> to vector<8xf32>
    %cst_56 = arith.constant 0xFF800000 : f32
    %151 = vector.broadcast %cst_56 : f32 to vector<8xf32>
    %152 = arith.maximumf %151, %150 : vector<8xf32>
    %153 = vector.shape_cast %152 : vector<8xf32> to vector<8x1xf32>
    %154 = vector.broadcast %153 : vector<8x1xf32> to vector<8x8xf32>
    %155 = arith.subf %149, %154 : vector<8x8xf32>
    %156 = math.exp %155 : vector<8x8xf32>
    %cst_57 = arith.constant dense<0.000000e+00> : vector<8xf32>
    %157 = vector.multi_reduction <add>, %156, %cst_57 [1] : vector<8x8xf32> to vector<8xf32>
    %158 = vector.shape_cast %157 : vector<8xf32> to vector<8x1xf32>
    %159 = vector.broadcast %158 : vector<8x1xf32> to vector<8x8xf32>
    %160 = arith.divf %156, %159 : vector<8x8xf32>
    %161 = arith.truncf %160 : vector<8x8xf32> to vector<8x8xbf16>
    %cst_58 = arith.constant dense<0.000000e+00> : vector<8x16xf32>
    %162 = tpu.matmul %161, %146, %cst_58 {dimension_numbers = #tpu.dot_dimension_numbers<[1], [0], [0], [1], [0, 0, 1, 1], [], []>} : vector<8x8xbf16>, vector<8x16xbf16>, vector<8x16xf32> -> vector<8x16xf32>
    %163 = arith.truncf %162 : vector<8x16xf32> to vector<8x16xbf16>
    %c0_59 = arith.constant 0 : index
    %c0_60 = arith.constant 0 : index
    %164 = vector.load %arg5[%c0_59, %c0_60] : memref<64x64xbf16, #tpu.memory_space<vmem>>, vector<16x64xbf16>
    %cst_61 = arith.constant dense<0.000000e+00> : vector<8x64xf32>
    %165 = tpu.matmul %163, %164, %cst_61 {dimension_numbers = #tpu.dot_dimension_numbers<[1], [0], [0], [1], [0, 0, 1, 1], [], []>} : vector<8x16xbf16>, vector<16x64xbf16>, vector<8x64xf32> -> vector<8x64xf32>
    %166 = arith.addf %140, %165 : vector<8x64xf32>
    %167 = vector.extract_strided_slice %28 {offsets = [8, 16], sizes = [8, 16], strides = [1, 1]} : vector<16x192xf32> to vector<8x16xf32>
    %168 = arith.truncf %167 : vector<8x16xf32> to vector<8x16xbf16>
    %169 = vector.extract_strided_slice %28 {offsets = [8, 80], sizes = [8, 16], strides = [1, 1]} : vector<16x192xf32> to vector<8x16xf32>
    %170 = arith.truncf %169 : vector<8x16xf32> to vector<8x16xbf16>
    %171 = vector.extract_strided_slice %28 {offsets = [8, 144], sizes = [8, 16], strides = [1, 1]} : vector<16x192xf32> to vector<8x16xf32>
    %172 = arith.truncf %171 : vector<8x16xf32> to vector<8x16xbf16>
    %cst_62 = arith.constant dense<0.000000e+00> : vector<8x8xf32>
    %173 = tpu.matmul %168, %170, %cst_62 {dimension_numbers = #tpu.dot_dimension_numbers<[1], [1], [0], [0], [0, 0, 1, 0], [], []>} : vector<8x16xbf16>, vector<8x16xbf16>, vector<8x8xf32> -> vector<8x8xf32>
    %cst_63 = arith.constant 2.500000e-01 : f32
    %174 = vector.broadcast %cst_63 : f32 to vector<8x8xf32>
    %175 = arith.mulf %173, %174 : vector<8x8xf32>
    %cst_64 = arith.constant dense<0xFF800000> : vector<8xf32>
    %176 = vector.multi_reduction <maximumf>, %175, %cst_64 [1] : vector<8x8xf32> to vector<8xf32>
    %cst_65 = arith.constant 0xFF800000 : f32
    %177 = vector.broadcast %cst_65 : f32 to vector<8xf32>
    %178 = arith.maximumf %177, %176 : vector<8xf32>
    %179 = vector.shape_cast %178 : vector<8xf32> to vector<8x1xf32>
    %180 = vector.broadcast %179 : vector<8x1xf32> to vector<8x8xf32>
    %181 = arith.subf %175, %180 : vector<8x8xf32>
    %182 = math.exp %181 : vector<8x8xf32>
    %cst_66 = arith.constant dense<0.000000e+00> : vector<8xf32>
    %183 = vector.multi_reduction <add>, %182, %cst_66 [1] : vector<8x8xf32> to vector<8xf32>
    %184 = vector.shape_cast %183 : vector<8xf32> to vector<8x1xf32>
    %185 = vector.broadcast %184 : vector<8x1xf32> to vector<8x8xf32>
    %186 = arith.divf %182, %185 : vector<8x8xf32>
    %187 = arith.truncf %186 : vector<8x8xf32> to vector<8x8xbf16>
    %cst_67 = arith.constant dense<0.000000e+00> : vector<8x16xf32>
    %188 = tpu.matmul %187, %172, %cst_67 {dimension_numbers = #tpu.dot_dimension_numbers<[1], [0], [0], [1], [0, 0, 1, 1], [], []>} : vector<8x8xbf16>, vector<8x16xbf16>, vector<8x16xf32> -> vector<8x16xf32>
    %189 = arith.truncf %188 : vector<8x16xf32> to vector<8x16xbf16>
    %c16_68 = arith.constant 16 : index
    %c0_69 = arith.constant 0 : index
    %190 = vector.load %arg5[%c16_68, %c0_69] : memref<64x64xbf16, #tpu.memory_space<vmem>>, vector<16x64xbf16>
    %cst_70 = arith.constant dense<0.000000e+00> : vector<8x64xf32>
    %191 = tpu.matmul %189, %190, %cst_70 {dimension_numbers = #tpu.dot_dimension_numbers<[1], [0], [0], [1], [0, 0, 1, 1], [], []>} : vector<8x16xbf16>, vector<16x64xbf16>, vector<8x64xf32> -> vector<8x64xf32>
    %192 = arith.addf %166, %191 : vector<8x64xf32>
    %193 = vector.extract_strided_slice %28 {offsets = [8, 32], sizes = [8, 16], strides = [1, 1]} : vector<16x192xf32> to vector<8x16xf32>
    %194 = arith.truncf %193 : vector<8x16xf32> to vector<8x16xbf16>
    %195 = vector.extract_strided_slice %28 {offsets = [8, 96], sizes = [8, 16], strides = [1, 1]} : vector<16x192xf32> to vector<8x16xf32>
    %196 = arith.truncf %195 : vector<8x16xf32> to vector<8x16xbf16>
    %197 = vector.extract_strided_slice %28 {offsets = [8, 160], sizes = [8, 16], strides = [1, 1]} : vector<16x192xf32> to vector<8x16xf32>
    %198 = arith.truncf %197 : vector<8x16xf32> to vector<8x16xbf16>
    %cst_71 = arith.constant dense<0.000000e+00> : vector<8x8xf32>
    %199 = tpu.matmul %194, %196, %cst_71 {dimension_numbers = #tpu.dot_dimension_numbers<[1], [1], [0], [0], [0, 0, 1, 0], [], []>} : vector<8x16xbf16>, vector<8x16xbf16>, vector<8x8xf32> -> vector<8x8xf32>
    %cst_72 = arith.constant 2.500000e-01 : f32
    %200 = vector.broadcast %cst_72 : f32 to vector<8x8xf32>
    %201 = arith.mulf %199, %200 : vector<8x8xf32>
    %cst_73 = arith.constant dense<0xFF800000> : vector<8xf32>
    %202 = vector.multi_reduction <maximumf>, %201, %cst_73 [1] : vector<8x8xf32> to vector<8xf32>
    %cst_74 = arith.constant 0xFF800000 : f32
    %203 = vector.broadcast %cst_74 : f32 to vector<8xf32>
    %204 = arith.maximumf %203, %202 : vector<8xf32>
    %205 = vector.shape_cast %204 : vector<8xf32> to vector<8x1xf32>
    %206 = vector.broadcast %205 : vector<8x1xf32> to vector<8x8xf32>
    %207 = arith.subf %201, %206 : vector<8x8xf32>
    %208 = math.exp %207 : vector<8x8xf32>
    %cst_75 = arith.constant dense<0.000000e+00> : vector<8xf32>
    %209 = vector.multi_reduction <add>, %208, %cst_75 [1] : vector<8x8xf32> to vector<8xf32>
    %210 = vector.shape_cast %209 : vector<8xf32> to vector<8x1xf32>
    %211 = vector.broadcast %210 : vector<8x1xf32> to vector<8x8xf32>
    %212 = arith.divf %208, %211 : vector<8x8xf32>
    %213 = arith.truncf %212 : vector<8x8xf32> to vector<8x8xbf16>
    %cst_76 = arith.constant dense<0.000000e+00> : vector<8x16xf32>
    %214 = tpu.matmul %213, %198, %cst_76 {dimension_numbers = #tpu.dot_dimension_numbers<[1], [0], [0], [1], [0, 0, 1, 1], [], []>} : vector<8x8xbf16>, vector<8x16xbf16>, vector<8x16xf32> -> vector<8x16xf32>
    %215 = arith.truncf %214 : vector<8x16xf32> to vector<8x16xbf16>
    %c32_77 = arith.constant 32 : index
    %c0_78 = arith.constant 0 : index
    %216 = vector.load %arg5[%c32_77, %c0_78] : memref<64x64xbf16, #tpu.memory_space<vmem>>, vector<16x64xbf16>
    %cst_79 = arith.constant dense<0.000000e+00> : vector<8x64xf32>
    %217 = tpu.matmul %215, %216, %cst_79 {dimension_numbers = #tpu.dot_dimension_numbers<[1], [0], [0], [1], [0, 0, 1, 1], [], []>} : vector<8x16xbf16>, vector<16x64xbf16>, vector<8x64xf32> -> vector<8x64xf32>
    %218 = arith.addf %192, %217 : vector<8x64xf32>
    %219 = vector.extract_strided_slice %28 {offsets = [8, 48], sizes = [8, 16], strides = [1, 1]} : vector<16x192xf32> to vector<8x16xf32>
    %220 = arith.truncf %219 : vector<8x16xf32> to vector<8x16xbf16>
    %221 = vector.extract_strided_slice %28 {offsets = [8, 112], sizes = [8, 16], strides = [1, 1]} : vector<16x192xf32> to vector<8x16xf32>
    %222 = arith.truncf %221 : vector<8x16xf32> to vector<8x16xbf16>
    %223 = vector.extract_strided_slice %28 {offsets = [8, 176], sizes = [8, 16], strides = [1, 1]} : vector<16x192xf32> to vector<8x16xf32>
    %224 = arith.truncf %223 : vector<8x16xf32> to vector<8x16xbf16>
    %cst_80 = arith.constant dense<0.000000e+00> : vector<8x8xf32>
    %225 = tpu.matmul %220, %222, %cst_80 {dimension_numbers = #tpu.dot_dimension_numbers<[1], [1], [0], [0], [0, 0, 1, 0], [], []>} : vector<8x16xbf16>, vector<8x16xbf16>, vector<8x8xf32> -> vector<8x8xf32>
    %cst_81 = arith.constant 2.500000e-01 : f32
    %226 = vector.broadcast %cst_81 : f32 to vector<8x8xf32>
    %227 = arith.mulf %225, %226 : vector<8x8xf32>
    %cst_82 = arith.constant dense<0xFF800000> : vector<8xf32>
    %228 = vector.multi_reduction <maximumf>, %227, %cst_82 [1] : vector<8x8xf32> to vector<8xf32>
    %cst_83 = arith.constant 0xFF800000 : f32
    %229 = vector.broadcast %cst_83 : f32 to vector<8xf32>
    %230 = arith.maximumf %229, %228 : vector<8xf32>
    %231 = vector.shape_cast %230 : vector<8xf32> to vector<8x1xf32>
    %232 = vector.broadcast %231 : vector<8x1xf32> to vector<8x8xf32>
    %233 = arith.subf %227, %232 : vector<8x8xf32>
    %234 = math.exp %233 : vector<8x8xf32>
    %cst_84 = arith.constant dense<0.000000e+00> : vector<8xf32>
    %235 = vector.multi_reduction <add>, %234, %cst_84 [1] : vector<8x8xf32> to vector<8xf32>
    %236 = vector.shape_cast %235 : vector<8xf32> to vector<8x1xf32>
    %237 = vector.broadcast %236 : vector<8x1xf32> to vector<8x8xf32>
    %238 = arith.divf %234, %237 : vector<8x8xf32>
    %239 = arith.truncf %238 : vector<8x8xf32> to vector<8x8xbf16>
    %cst_85 = arith.constant dense<0.000000e+00> : vector<8x16xf32>
    %240 = tpu.matmul %239, %224, %cst_85 {dimension_numbers = #tpu.dot_dimension_numbers<[1], [0], [0], [1], [0, 0, 1, 1], [], []>} : vector<8x8xbf16>, vector<8x16xbf16>, vector<8x16xf32> -> vector<8x16xf32>
    %241 = arith.truncf %240 : vector<8x16xf32> to vector<8x16xbf16>
    %c48_86 = arith.constant 48 : index
    %c0_87 = arith.constant 0 : index
    %242 = vector.load %arg5[%c48_86, %c0_87] : memref<64x64xbf16, #tpu.memory_space<vmem>>, vector<16x64xbf16>
    %cst_88 = arith.constant dense<0.000000e+00> : vector<8x64xf32>
    %243 = tpu.matmul %241, %242, %cst_88 {dimension_numbers = #tpu.dot_dimension_numbers<[1], [0], [0], [1], [0, 0, 1, 1], [], []>} : vector<8x16xbf16>, vector<16x64xbf16>, vector<8x64xf32> -> vector<8x64xf32>
    %244 = arith.addf %218, %243 : vector<8x64xf32>
    %245 = vector.extract_strided_slice %0 {offsets = [8, 0], sizes = [8, 64], strides = [1, 1]} : vector<16x64xf32> to vector<8x64xf32>
    %246 = arith.addf %245, %244 : vector<8x64xf32>
    %c0_89 = arith.constant 0 : index
    %c0_90 = arith.constant 0 : index
    %247 = vector.load %arg6[%c0_89, %c0_90] : memref<1x64xf32, #tpu.memory_space<vmem>>, vector<1x64xf32>
    %248 = vector.broadcast %247 : vector<1x64xf32> to vector<8x64xf32>
    %249 = arith.addf %246, %248 : vector<8x64xf32>
    %c8 = arith.constant 8 : index
    %c0_91 = arith.constant 0 : index
    %250 = vector.load %arg7[%c8, %c0_91] : memref<16x64xf32, #tpu.memory_space<vmem>>, vector<8x64xf32>
    tpu.vector_store %arg7[%c8, %c0_91], %249 {strides = array<i32>} : memref<16x64xf32, #tpu.memory_space<vmem>>, vector<8x64xf32>,
    return
  }
}

module attributes {stable_mosaic.version = 11 : i64} {
  func.func @_conv_module_kernel(%arg0: memref<16x64xf32, #tpu.memory_space<vmem>>, %arg1: memref<1x64xf32, #tpu.memory_space<vmem>>, %arg2: memref<1x64xf32, #tpu.memory_space<vmem>>, %arg3: memref<64x64xbf16, #tpu.memory_space<vmem>>, %arg4: memref<1x64xf32, #tpu.memory_space<vmem>>, %arg5: memref<64x64xbf16, #tpu.memory_space<vmem>>, %arg6: memref<1x64xf32, #tpu.memory_space<vmem>>, %arg7: memref<7x64xf32, #tpu.memory_space<vmem>>, %arg8: memref<1x64xf32, #tpu.memory_space<vmem>>, %arg9: memref<1x64xf32, #tpu.memory_space<vmem>>, %arg10: memref<1x64xf32, #tpu.memory_space<vmem>>, %arg11: memref<64x64xbf16, #tpu.memory_space<vmem>>, %arg12: memref<1x64xf32, #tpu.memory_space<vmem>>, %arg13: memref<16x64xf32, #tpu.memory_space<vmem>>, %arg14: memref<2x19x64xf32, #tpu.memory_space<vmem>>) attributes {dimension_semantics = [], scalar_prefetch = 0 : i64, scratch_operands = 1 : i64, tpu.core_type = #tpu.core_type<tc>} {
    %c0 = arith.constant 0 : index
    %c0_0 = arith.constant 0 : index
    %0 = vector.load %arg0[%c0, %c0_0] : memref<16x64xf32, #tpu.memory_space<vmem>>, vector<16x64xf32>
    %c0_1 = arith.constant 0 : index
    %c0_2 = arith.constant 0 : index
    %1 = vector.load %arg1[%c0_1, %c0_2] : memref<1x64xf32, #tpu.memory_space<vmem>>, vector<1x64xf32>
    %c0_3 = arith.constant 0 : index
    %c0_4 = arith.constant 0 : index
    %2 = vector.load %arg2[%c0_3, %c0_4] : memref<1x64xf32, #tpu.memory_space<vmem>>, vector<1x64xf32>
    %cst = arith.constant dense<0.000000e+00> : vector<16xf32>
    %3 = vector.multi_reduction <add>, %0, %cst [1] : vector<16x64xf32> to vector<16xf32>
    %4 = vector.shape_cast %3 : vector<16xf32> to vector<16x1xf32>
    %cst_5 = arith.constant 6.400000e+01 : f32
    %5 = vector.broadcast %cst_5 : f32 to vector<16x1xf32>
    %6 = arith.divf %4, %5 : vector<16x1xf32>
    %7 = vector.broadcast %6 : vector<16x1xf32> to vector<16x64xf32>
    %8 = arith.subf %0, %7 : vector<16x64xf32>
    %9 = arith.mulf %8, %8 : vector<16x64xf32>
    %cst_6 = arith.constant dense<0.000000e+00> : vector<16xf32>
    %10 = vector.multi_reduction <add>, %9, %cst_6 [1] : vector<16x64xf32> to vector<16xf32>
    %11 = vector.shape_cast %10 : vector<16xf32> to vector<16x1xf32>
    %cst_7 = arith.constant 6.400000e+01 : f32
    %12 = vector.broadcast %cst_7 : f32 to vector<16x1xf32>
    %13 = arith.divf %11, %12 : vector<16x1xf32>
    %cst_8 = arith.constant 9.99999974E-6 : f32
    %14 = vector.broadcast %cst_8 : f32 to vector<16x1xf32>
    %15 = arith.addf %13, %14 : vector<16x1xf32>
    %16 = math.rsqrt %15 : vector<16x1xf32>
    %17 = vector.broadcast %16 : vector<16x1xf32> to vector<16x64xf32>
    %18 = arith.mulf %8, %17 : vector<16x64xf32>
    %19 = vector.broadcast %1 : vector<1x64xf32> to vector<16x64xf32>
    %20 = arith.mulf %18, %19 : vector<16x64xf32>
    %21 = vector.broadcast %2 : vector<1x64xf32> to vector<16x64xf32>
    %22 = arith.addf %20, %21 : vector<16x64xf32>
    %23 = arith.truncf %22 : vector<16x64xf32> to vector<16x64xbf16>
    %c0_9 = arith.constant 0 : index
    %c0_10 = arith.constant 0 : index
    %24 = vector.load %arg3[%c0_9, %c0_10] : memref<64x64xbf16, #tpu.memory_space<vmem>>, vector<64x64xbf16>
    %cst_11 = arith.constant dense<0.000000e+00> : vector<16x64xf32>
    %25 = tpu.matmul %23, %24, %cst_11 {dimension_numbers = #tpu.dot_dimension_numbers<[1], [0], [0], [1], [0, 0, 1, 1], [], []>} : vector<16x64xbf16>, vector<64x64xbf16>, vector<16x64xf32> -> vector<16x64xf32>
    %c0_12 = arith.constant 0 : index
    %c0_13 = arith.constant 0 : index
    %26 = vector.load %arg4[%c0_12, %c0_13] : memref<1x64xf32, #tpu.memory_space<vmem>>, vector<1x64xf32>
    %27 = vector.broadcast %26 : vector<1x64xf32> to vector<16x64xf32>
    %28 = arith.addf %25, %27 : vector<16x64xf32>
    %c0_14 = arith.constant 0 : index
    %c0_15 = arith.constant 0 : index
    %29 = vector.load %arg5[%c0_14, %c0_15] : memref<64x64xbf16, #tpu.memory_space<vmem>>, vector<64x64xbf16>
    %cst_16 = arith.constant dense<0.000000e+00> : vector<16x64xf32>
    %30 = tpu.matmul %23, %29, %cst_16 {dimension_numbers = #tpu.dot_dimension_numbers<[1], [0], [0], [1], [0, 0, 1, 1], [], []>} : vector<16x64xbf16>, vector<64x64xbf16>, vector<16x64xf32> -> vector<16x64xf32>
    %c0_17 = arith.constant 0 : index
    %c0_18 = arith.constant 0 : index
    %31 = vector.load %arg6[%c0_17, %c0_18] : memref<1x64xf32, #tpu.memory_space<vmem>>, vector<1x64xf32>
    %32 = vector.broadcast %31 : vector<1x64xf32> to vector<16x64xf32>
    %33 = arith.addf %30, %32 : vector<16x64xf32>
    %34 = arith.negf %33 : vector<16x64xf32>
    %35 = math.exp %34 : vector<16x64xf32>
    %cst_19 = arith.constant 1.000000e+00 : f32
    %36 = vector.broadcast %cst_19 : f32 to vector<16x64xf32>
    %37 = arith.addf %36, %35 : vector<16x64xf32>
    %38 = arith.divf %36, %37 : vector<16x64xf32>
    %39 = arith.mulf %28, %38 : vector<16x64xf32>
    %cst_20 = arith.constant 0.000000e+00 : f32
    %40 = vector.broadcast %cst_20 : f32 to vector<2x19x64xf32>
    %c0_21 = arith.constant 0 : index
    %c0_22 = arith.constant 0 : index
    %c0_23 = arith.constant 0 : index
    %41 = vector.load %arg14[%c0_21, %c0_22, %c0_23] : memref<2x19x64xf32, #tpu.memory_space<vmem>>, vector<2x19x64xf32>
    tpu.vector_store %arg14[%c0_21, %c0_22, %c0_23], %40 {strides = array<i32>} : memref<2x19x64xf32, #tpu.memory_space<vmem>>, vector<2x19x64xf32>,
    %42 = vector.extract_strided_slice %39 {offsets = [0, 0], sizes = [8, 64], strides = [1, 1]} : vector<16x64xf32> to vector<8x64xf32>
    %c0_24 = arith.constant 0 : index
    %c8 = arith.constant 8 : index
    %c0_25 = arith.constant 0 : index
    %43 = vector.load %arg14[%c0_24, %c8, %c0_25] : memref<2x19x64xf32, #tpu.memory_space<vmem>>, vector<1x8x64xf32>
    %44 = vector.shape_cast %43 : vector<1x8x64xf32> to vector<8x64xf32>
    %45 = vector.shape_cast %42 : vector<8x64xf32> to vector<1x8x64xf32>
    tpu.vector_store %arg14[%c0_24, %c8, %c0_25], %45 {strides = array<i32>} : memref<2x19x64xf32, #tpu.memory_space<vmem>>, vector<1x8x64xf32>,
    %46 = vector.extract_strided_slice %39 {offsets = [8, 0], sizes = [8, 64], strides = [1, 1]} : vector<16x64xf32> to vector<8x64xf32>
    %c1 = arith.constant 1 : index
    %c8_26 = arith.constant 8 : index
    %c0_27 = arith.constant 0 : index
    %47 = vector.load %arg14[%c1, %c8_26, %c0_27] : memref<2x19x64xf32, #tpu.memory_space<vmem>>, vector<1x8x64xf32>
    %48 = vector.shape_cast %47 : vector<1x8x64xf32> to vector<8x64xf32>
    %49 = vector.shape_cast %46 : vector<8x64xf32> to vector<1x8x64xf32>
    tpu.vector_store %arg14[%c1, %c8_26, %c0_27], %49 {strides = array<i32>} : memref<2x19x64xf32, #tpu.memory_space<vmem>>, vector<1x8x64xf32>,
    %c0_28 = arith.constant 0 : index
    %c0_29 = arith.constant 0 : index
    %50 = vector.load %arg7[%c0_28, %c0_29] : memref<7x64xf32, #tpu.memory_space<vmem>>, vector<7x64xf32>
    %cst_30 = arith.constant 0.000000e+00 : f32
    %51 = vector.broadcast %cst_30 : f32 to vector<8x64xf32>
    %c0_31 = arith.constant 0 : index
    %c5 = arith.constant 5 : index
    %c0_32 = arith.constant 0 : index
    %52 = vector.load %arg14[%c0_31, %c5, %c0_32] : memref<2x19x64xf32, #tpu.memory_space<vmem>>, vector<1x8x64xf32>
    %53 = vector.shape_cast %52 : vector<1x8x64xf32> to vector<8x64xf32>
    %54 = vector.extract_strided_slice %50 {offsets = [0, 0], sizes = [1, 64], strides = [1, 1]} : vector<7x64xf32> to vector<1x64xf32>
    %55 = vector.broadcast %54 : vector<1x64xf32> to vector<8x64xf32>
    %56 = arith.mulf %53, %55 : vector<8x64xf32>
    %57 = arith.addf %51, %56 : vector<8x64xf32>
    %c0_33 = arith.constant 0 : index
    %c6 = arith.constant 6 : index
    %c0_34 = arith.constant 0 : index
    %58 = vector.load %arg14[%c0_33, %c6, %c0_34] : memref<2x19x64xf32, #tpu.memory_space<vmem>>, vector<1x8x64xf32>
    %59 = vector.shape_cast %58 : vector<1x8x64xf32> to vector<8x64xf32>
    %60 = vector.extract_strided_slice %50 {offsets = [1, 0], sizes = [1, 64], strides = [1, 1]} : vector<7x64xf32> to vector<1x64xf32>
    %61 = vector.broadcast %60 : vector<1x64xf32> to vector<8x64xf32>
    %62 = arith.mulf %59, %61 : vector<8x64xf32>
    %63 = arith.addf %57, %62 : vector<8x64xf32>
    %c0_35 = arith.constant 0 : index
    %c7 = arith.constant 7 : index
    %c0_36 = arith.constant 0 : index
    %64 = vector.load %arg14[%c0_35, %c7, %c0_36] : memref<2x19x64xf32, #tpu.memory_space<vmem>>, vector<1x8x64xf32>
    %65 = vector.shape_cast %64 : vector<1x8x64xf32> to vector<8x64xf32>
    %66 = vector.extract_strided_slice %50 {offsets = [2, 0], sizes = [1, 64], strides = [1, 1]} : vector<7x64xf32> to vector<1x64xf32>
    %67 = vector.broadcast %66 : vector<1x64xf32> to vector<8x64xf32>
    %68 = arith.mulf %65, %67 : vector<8x64xf32>
    %69 = arith.addf %63, %68 : vector<8x64xf32>
    %c0_37 = arith.constant 0 : index
    %c8_38 = arith.constant 8 : index
    %c0_39 = arith.constant 0 : index
    %70 = vector.load %arg14[%c0_37, %c8_38, %c0_39] : memref<2x19x64xf32, #tpu.memory_space<vmem>>, vector<1x8x64xf32>
    %71 = vector.shape_cast %70 : vector<1x8x64xf32> to vector<8x64xf32>
    %72 = vector.extract_strided_slice %50 {offsets = [3, 0], sizes = [1, 64], strides = [1, 1]} : vector<7x64xf32> to vector<1x64xf32>
    %73 = vector.broadcast %72 : vector<1x64xf32> to vector<8x64xf32>
    %74 = arith.mulf %71, %73 : vector<8x64xf32>
    %75 = arith.addf %69, %74 : vector<8x64xf32>
    %c0_40 = arith.constant 0 : index
    %c9 = arith.constant 9 : index
    %c0_41 = arith.constant 0 : index
    %76 = vector.load %arg14[%c0_40, %c9, %c0_41] : memref<2x19x64xf32, #tpu.memory_space<vmem>>, vector<1x8x64xf32>
    %77 = vector.shape_cast %76 : vector<1x8x64xf32> to vector<8x64xf32>
    %78 = vector.extract_strided_slice %50 {offsets = [4, 0], sizes = [1, 64], strides = [1, 1]} : vector<7x64xf32> to vector<1x64xf32>
    %79 = vector.broadcast %78 : vector<1x64xf32> to vector<8x64xf32>
    %80 = arith.mulf %77, %79 : vector<8x64xf32>
    %81 = arith.addf %75, %80 : vector<8x64xf32>
    %c0_42 = arith.constant 0 : index
    %c10 = arith.constant 10 : index
    %c0_43 = arith.constant 0 : index
    %82 = vector.load %arg14[%c0_42, %c10, %c0_43] : memref<2x19x64xf32, #tpu.memory_space<vmem>>, vector<1x8x64xf32>
    %83 = vector.shape_cast %82 : vector<1x8x64xf32> to vector<8x64xf32>
    %84 = vector.extract_strided_slice %50 {offsets = [5, 0], sizes = [1, 64], strides = [1, 1]} : vector<7x64xf32> to vector<1x64xf32>
    %85 = vector.broadcast %84 : vector<1x64xf32> to vector<8x64xf32>
    %86 = arith.mulf %83, %85 : vector<8x64xf32>
    %87 = arith.addf %81, %86 : vector<8x64xf32>
    %c0_44 = arith.constant 0 : index
    %c11 = arith.constant 11 : index
    %c0_45 = arith.constant 0 : index
    %88 = vector.load %arg14[%c0_44, %c11, %c0_45] : memref<2x19x64xf32, #tpu.memory_space<vmem>>, vector<1x8x64xf32>
    %89 = vector.shape_cast %88 : vector<1x8x64xf32> to vector<8x64xf32>
    %90 = vector.extract_strided_slice %50 {offsets = [6, 0], sizes = [1, 64], strides = [1, 1]} : vector<7x64xf32> to vector<1x64xf32>
    %91 = vector.broadcast %90 : vector<1x64xf32> to vector<8x64xf32>
    %92 = arith.mulf %89, %91 : vector<8x64xf32>
    %93 = arith.addf %87, %92 : vector<8x64xf32>
    %cst_46 = arith.constant 0.000000e+00 : f32
    %94 = vector.broadcast %cst_46 : f32 to vector<8x64xf32>
    %c1_47 = arith.constant 1 : index
    %c5_48 = arith.constant 5 : index
    %c0_49 = arith.constant 0 : index
    %95 = vector.load %arg14[%c1_47, %c5_48, %c0_49] : memref<2x19x64xf32, #tpu.memory_space<vmem>>, vector<1x8x64xf32>
    %96 = vector.shape_cast %95 : vector<1x8x64xf32> to vector<8x64xf32>
    %97 = vector.extract_strided_slice %50 {offsets = [0, 0], sizes = [1, 64], strides = [1, 1]} : vector<7x64xf32> to vector<1x64xf32>
    %98 = vector.broadcast %97 : vector<1x64xf32> to vector<8x64xf32>
    %99 = arith.mulf %96, %98 : vector<8x64xf32>
    %100 = arith.addf %94, %99 : vector<8x64xf32>
    %c1_50 = arith.constant 1 : index
    %c6_51 = arith.constant 6 : index
    %c0_52 = arith.constant 0 : index
    %101 = vector.load %arg14[%c1_50, %c6_51, %c0_52] : memref<2x19x64xf32, #tpu.memory_space<vmem>>, vector<1x8x64xf32>
    %102 = vector.shape_cast %101 : vector<1x8x64xf32> to vector<8x64xf32>
    %103 = vector.extract_strided_slice %50 {offsets = [1, 0], sizes = [1, 64], strides = [1, 1]} : vector<7x64xf32> to vector<1x64xf32>
    %104 = vector.broadcast %103 : vector<1x64xf32> to vector<8x64xf32>
    %105 = arith.mulf %102, %104 : vector<8x64xf32>
    %106 = arith.addf %100, %105 : vector<8x64xf32>
    %c1_53 = arith.constant 1 : index
    %c7_54 = arith.constant 7 : index
    %c0_55 = arith.constant 0 : index
    %107 = vector.load %arg14[%c1_53, %c7_54, %c0_55] : memref<2x19x64xf32, #tpu.memory_space<vmem>>, vector<1x8x64xf32>
    %108 = vector.shape_cast %107 : vector<1x8x64xf32> to vector<8x64xf32>
    %109 = vector.extract_strided_slice %50 {offsets = [2, 0], sizes = [1, 64], strides = [1, 1]} : vector<7x64xf32> to vector<1x64xf32>
    %110 = vector.broadcast %109 : vector<1x64xf32> to vector<8x64xf32>
    %111 = arith.mulf %108, %110 : vector<8x64xf32>
    %112 = arith.addf %106, %111 : vector<8x64xf32>
    %c1_56 = arith.constant 1 : index
    %c8_57 = arith.constant 8 : index
    %c0_58 = arith.constant 0 : index
    %113 = vector.load %arg14[%c1_56, %c8_57, %c0_58] : memref<2x19x64xf32, #tpu.memory_space<vmem>>, vector<1x8x64xf32>
    %114 = vector.shape_cast %113 : vector<1x8x64xf32> to vector<8x64xf32>
    %115 = vector.extract_strided_slice %50 {offsets = [3, 0], sizes = [1, 64], strides = [1, 1]} : vector<7x64xf32> to vector<1x64xf32>
    %116 = vector.broadcast %115 : vector<1x64xf32> to vector<8x64xf32>
    %117 = arith.mulf %114, %116 : vector<8x64xf32>
    %118 = arith.addf %112, %117 : vector<8x64xf32>
    %c1_59 = arith.constant 1 : index
    %c9_60 = arith.constant 9 : index
    %c0_61 = arith.constant 0 : index
    %119 = vector.load %arg14[%c1_59, %c9_60, %c0_61] : memref<2x19x64xf32, #tpu.memory_space<vmem>>, vector<1x8x64xf32>
    %120 = vector.shape_cast %119 : vector<1x8x64xf32> to vector<8x64xf32>
    %121 = vector.extract_strided_slice %50 {offsets = [4, 0], sizes = [1, 64], strides = [1, 1]} : vector<7x64xf32> to vector<1x64xf32>
    %122 = vector.broadcast %121 : vector<1x64xf32> to vector<8x64xf32>
    %123 = arith.mulf %120, %122 : vector<8x64xf32>
    %124 = arith.addf %118, %123 : vector<8x64xf32>
    %c1_62 = arith.constant 1 : index
    %c10_63 = arith.constant 10 : index
    %c0_64 = arith.constant 0 : index
    %125 = vector.load %arg14[%c1_62, %c10_63, %c0_64] : memref<2x19x64xf32, #tpu.memory_space<vmem>>, vector<1x8x64xf32>
    %126 = vector.shape_cast %125 : vector<1x8x64xf32> to vector<8x64xf32>
    %127 = vector.extract_strided_slice %50 {offsets = [5, 0], sizes = [1, 64], strides = [1, 1]} : vector<7x64xf32> to vector<1x64xf32>
    %128 = vector.broadcast %127 : vector<1x64xf32> to vector<8x64xf32>
    %129 = arith.mulf %126, %128 : vector<8x64xf32>
    %130 = arith.addf %124, %129 : vector<8x64xf32>
    %c1_65 = arith.constant 1 : index
    %c11_66 = arith.constant 11 : index
    %c0_67 = arith.constant 0 : index
    %131 = vector.load %arg14[%c1_65, %c11_66, %c0_67] : memref<2x19x64xf32, #tpu.memory_space<vmem>>, vector<1x8x64xf32>
    %132 = vector.shape_cast %131 : vector<1x8x64xf32> to vector<8x64xf32>
    %133 = vector.extract_strided_slice %50 {offsets = [6, 0], sizes = [1, 64], strides = [1, 1]} : vector<7x64xf32> to vector<1x64xf32>
    %134 = vector.broadcast %133 : vector<1x64xf32> to vector<8x64xf32>
    %135 = arith.mulf %132, %134 : vector<8x64xf32>
    %136 = arith.addf %130, %135 : vector<8x64xf32>
    %137 = tpu.concatenate %93, %136 in 0 : vector<8x64xf32>, vector<8x64xf32> -> vector<16x64xf32>
    %c0_68 = arith.constant 0 : index
    %c0_69 = arith.constant 0 : index
    %138 = vector.load %arg8[%c0_68, %c0_69] : memref<1x64xf32, #tpu.memory_space<vmem>>, vector<1x64xf32>
    %139 = vector.broadcast %138 : vector<1x64xf32> to vector<16x64xf32>
    %140 = arith.addf %137, %139 : vector<16x64xf32>
    %c0_70 = arith.constant 0 : index
    %c0_71 = arith.constant 0 : index
    %141 = vector.load %arg9[%c0_70, %c0_71] : memref<1x64xf32, #tpu.memory_space<vmem>>, vector<1x64xf32>
    %142 = vector.broadcast %141 : vector<1x64xf32> to vector<16x64xf32>
    %143 = arith.mulf %140, %142 : vector<16x64xf32>
    %c0_72 = arith.constant 0 : index
    %c0_73 = arith.constant 0 : index
    %144 = vector.load %arg10[%c0_72, %c0_73] : memref<1x64xf32, #tpu.memory_space<vmem>>, vector<1x64xf32>
    %145 = vector.broadcast %144 : vector<1x64xf32> to vector<16x64xf32>
    %146 = arith.addf %143, %145 : vector<16x64xf32>
    %147 = arith.negf %146 : vector<16x64xf32>
    %148 = math.exp %147 : vector<16x64xf32>
    %cst_74 = arith.constant 1.000000e+00 : f32
    %149 = vector.broadcast %cst_74 : f32 to vector<16x64xf32>
    %150 = arith.addf %149, %148 : vector<16x64xf32>
    %151 = arith.divf %149, %150 : vector<16x64xf32>
    %152 = arith.mulf %146, %151 : vector<16x64xf32>
    %153 = arith.truncf %152 : vector<16x64xf32> to vector<16x64xbf16>
    %c0_75 = arith.constant 0 : index
    %c0_76 = arith.constant 0 : index
    %154 = vector.load %arg11[%c0_75, %c0_76] : memref<64x64xbf16, #tpu.memory_space<vmem>>, vector<64x64xbf16>
    %cst_77 = arith.constant dense<0.000000e+00> : vector<16x64xf32>
    %155 = tpu.matmul %153, %154, %cst_77 {dimension_numbers = #tpu.dot_dimension_numbers<[1], [0], [0], [1], [0, 0, 1, 1], [], []>} : vector<16x64xbf16>, vector<64x64xbf16>, vector<16x64xf32> -> vector<16x64xf32>
    %c0_78 = arith.constant 0 : index
    %c0_79 = arith.constant 0 : index
    %156 = vector.load %arg12[%c0_78, %c0_79] : memref<1x64xf32, #tpu.memory_space<vmem>>, vector<1x64xf32>
    %157 = vector.broadcast %156 : vector<1x64xf32> to vector<16x64xf32>
    %158 = arith.addf %155, %157 : vector<16x64xf32>
    %159 = arith.addf %0, %158 : vector<16x64xf32>
    %c0_80 = arith.constant 0 : index
    %c0_81 = arith.constant 0 : index
    %160 = vector.load %arg13[%c0_80, %c0_81] : memref<16x64xf32, #tpu.memory_space<vmem>>, vector<16x64xf32>
    tpu.vector_store %arg13[%c0_80, %c0_81], %159 {strides = array<i32>} : memref<16x64xf32, #tpu.memory_space<vmem>>, vector<16x64xf32>,
    return
  }
}

module attributes {stable_mosaic.version = 11 : i64} {
  func.func @_ffn_kernel(%arg0: i32, %arg1: memref<16x64xf32, #tpu.memory_space<vmem>>, %arg2: memref<1x64xf32, #tpu.memory_space<vmem>>, %arg3: memref<1x64xf32, #tpu.memory_space<vmem>>, %arg4: memref<64x256xbf16, #tpu.memory_space<vmem>>, %arg5: memref<1x256xf32, #tpu.memory_space<vmem>>, %arg6: memref<256x64xbf16, #tpu.memory_space<vmem>>, %arg7: memref<1x64xf32, #tpu.memory_space<vmem>>, %arg8: memref<1x64xf32, #tpu.memory_space<vmem>>, %arg9: memref<1x64xf32, #tpu.memory_space<vmem>>, %arg10: memref<16x64xf32, #tpu.memory_space<vmem>>) attributes {dimension_semantics = [#tpu.dimension_semantics<parallel>], iteration_bounds = array<i64: 1>, scalar_prefetch = 0 : i64, scratch_operands = 0 : i64, tpu.core_type = #tpu.core_type<tc>, window_params = [{transform_indices = @transform_0, window_bounds = array<i64: 16, 64>}, {pipeline_mode = #tpu.pipeline_mode<synchronous>, transform_indices = @transform_1, window_bounds = array<i64: 1, 64>}, {pipeline_mode = #tpu.pipeline_mode<synchronous>, transform_indices = @transform_2, window_bounds = array<i64: 1, 64>}, {pipeline_mode = #tpu.pipeline_mode<synchronous>, transform_indices = @transform_3, window_bounds = array<i64: 64, 256>}, {pipeline_mode = #tpu.pipeline_mode<synchronous>, transform_indices = @transform_4, window_bounds = array<i64: 1, 256>}, {pipeline_mode = #tpu.pipeline_mode<synchronous>, transform_indices = @transform_5, window_bounds = array<i64: 256, 64>}, {pipeline_mode = #tpu.pipeline_mode<synchronous>, transform_indices = @transform_6, window_bounds = array<i64: 1, 64>}, {pipeline_mode = #tpu.pipeline_mode<synchronous>, transform_indices = @transform_7, window_bounds = array<i64: 1, 64>}, {pipeline_mode = #tpu.pipeline_mode<synchronous>, transform_indices = @transform_8, window_bounds = array<i64: 1, 64>}, {transform_indices = @transform_9, window_bounds = array<i64: 16, 64>}]} {
    %c0 = arith.constant 0 : index
    %c0_0 = arith.constant 0 : index
    %0 = vector.load %arg1[%c0, %c0_0] : memref<16x64xf32, #tpu.memory_space<vmem>>, vector<16x64xf32>
    %c0_1 = arith.constant 0 : index
    %c0_2 = arith.constant 0 : index
    %1 = vector.load %arg2[%c0_1, %c0_2] : memref<1x64xf32, #tpu.memory_space<vmem>>, vector<1x64xf32>
    %c0_3 = arith.constant 0 : index
    %c0_4 = arith.constant 0 : index
    %2 = vector.load %arg3[%c0_3, %c0_4] : memref<1x64xf32, #tpu.memory_space<vmem>>, vector<1x64xf32>
    %cst = arith.constant dense<0.000000e+00> : vector<16xf32>
    %3 = vector.multi_reduction <add>, %0, %cst [1] : vector<16x64xf32> to vector<16xf32>
    %4 = vector.shape_cast %3 : vector<16xf32> to vector<16x1xf32>
    %cst_5 = arith.constant 6.400000e+01 : f32
    %5 = vector.broadcast %cst_5 : f32 to vector<16x1xf32>
    %6 = arith.divf %4, %5 : vector<16x1xf32>
    %7 = vector.broadcast %6 : vector<16x1xf32> to vector<16x64xf32>
    %8 = arith.subf %0, %7 : vector<16x64xf32>
    %9 = arith.mulf %8, %8 : vector<16x64xf32>
    %cst_6 = arith.constant dense<0.000000e+00> : vector<16xf32>
    %10 = vector.multi_reduction <add>, %9, %cst_6 [1] : vector<16x64xf32> to vector<16xf32>
    %11 = vector.shape_cast %10 : vector<16xf32> to vector<16x1xf32>
    %cst_7 = arith.constant 6.400000e+01 : f32
    %12 = vector.broadcast %cst_7 : f32 to vector<16x1xf32>
    %13 = arith.divf %11, %12 : vector<16x1xf32>
    %cst_8 = arith.constant 9.99999974E-6 : f32
    %14 = vector.broadcast %cst_8 : f32 to vector<16x1xf32>
    %15 = arith.addf %13, %14 : vector<16x1xf32>
    %16 = math.rsqrt %15 : vector<16x1xf32>
    %17 = vector.broadcast %16 : vector<16x1xf32> to vector<16x64xf32>
    %18 = arith.mulf %8, %17 : vector<16x64xf32>
    %19 = vector.broadcast %1 : vector<1x64xf32> to vector<16x64xf32>
    %20 = arith.mulf %18, %19 : vector<16x64xf32>
    %21 = vector.broadcast %2 : vector<1x64xf32> to vector<16x64xf32>
    %22 = arith.addf %20, %21 : vector<16x64xf32>
    %23 = arith.truncf %22 : vector<16x64xf32> to vector<16x64xbf16>
    %c0_9 = arith.constant 0 : index
    %c0_10 = arith.constant 0 : index
    %24 = vector.load %arg4[%c0_9, %c0_10] : memref<64x256xbf16, #tpu.memory_space<vmem>>, vector<64x256xbf16>
    %cst_11 = arith.constant dense<0.000000e+00> : vector<16x256xf32>
    %25 = tpu.matmul %23, %24, %cst_11 {dimension_numbers = #tpu.dot_dimension_numbers<[1], [0], [0], [1], [0, 0, 1, 1], [], []>} : vector<16x64xbf16>, vector<64x256xbf16>, vector<16x256xf32> -> vector<16x256xf32>
    %c0_12 = arith.constant 0 : index
    %c0_13 = arith.constant 0 : index
    %26 = vector.load %arg5[%c0_12, %c0_13] : memref<1x256xf32, #tpu.memory_space<vmem>>, vector<1x256xf32>
    %27 = vector.broadcast %26 : vector<1x256xf32> to vector<16x256xf32>
    %28 = arith.addf %25, %27 : vector<16x256xf32>
    %29 = arith.negf %28 : vector<16x256xf32>
    %30 = math.exp %29 : vector<16x256xf32>
    %cst_14 = arith.constant 1.000000e+00 : f32
    %31 = vector.broadcast %cst_14 : f32 to vector<16x256xf32>
    %32 = arith.addf %31, %30 : vector<16x256xf32>
    %33 = arith.divf %31, %32 : vector<16x256xf32>
    %34 = arith.mulf %28, %33 : vector<16x256xf32>
    %35 = arith.truncf %34 : vector<16x256xf32> to vector<16x256xbf16>
    %c0_15 = arith.constant 0 : index
    %c0_16 = arith.constant 0 : index
    %36 = vector.load %arg6[%c0_15, %c0_16] : memref<256x64xbf16, #tpu.memory_space<vmem>>, vector<256x64xbf16>
    %cst_17 = arith.constant dense<0.000000e+00> : vector<16x64xf32>
    %37 = tpu.matmul %35, %36, %cst_17 {dimension_numbers = #tpu.dot_dimension_numbers<[1], [0], [0], [1], [0, 0, 1, 1], [], []>} : vector<16x256xbf16>, vector<256x64xbf16>, vector<16x64xf32> -> vector<16x64xf32>
    %c0_18 = arith.constant 0 : index
    %c0_19 = arith.constant 0 : index
    %38 = vector.load %arg7[%c0_18, %c0_19] : memref<1x64xf32, #tpu.memory_space<vmem>>, vector<1x64xf32>
    %39 = vector.broadcast %38 : vector<1x64xf32> to vector<16x64xf32>
    %40 = arith.addf %37, %39 : vector<16x64xf32>
    %cst_20 = arith.constant 5.000000e-01 : f32
    %41 = vector.broadcast %cst_20 : f32 to vector<16x64xf32>
    %42 = arith.mulf %41, %40 : vector<16x64xf32>
    %43 = arith.addf %0, %42 : vector<16x64xf32>
    %c0_21 = arith.constant 0 : index
    %c0_22 = arith.constant 0 : index
    %44 = vector.load %arg8[%c0_21, %c0_22] : memref<1x64xf32, #tpu.memory_space<vmem>>, vector<1x64xf32>
    %c0_23 = arith.constant 0 : index
    %c0_24 = arith.constant 0 : index
    %45 = vector.load %arg9[%c0_23, %c0_24] : memref<1x64xf32, #tpu.memory_space<vmem>>, vector<1x64xf32>
    %cst_25 = arith.constant dense<0.000000e+00> : vector<16xf32>
    %46 = vector.multi_reduction <add>, %43, %cst_25 [1] : vector<16x64xf32> to vector<16xf32>
    %47 = vector.shape_cast %46 : vector<16xf32> to vector<16x1xf32>
    %cst_26 = arith.constant 6.400000e+01 : f32
    %48 = vector.broadcast %cst_26 : f32 to vector<16x1xf32>
    %49 = arith.divf %47, %48 : vector<16x1xf32>
    %50 = vector.broadcast %49 : vector<16x1xf32> to vector<16x64xf32>
    %51 = arith.subf %43, %50 : vector<16x64xf32>
    %52 = arith.mulf %51, %51 : vector<16x64xf32>
    %cst_27 = arith.constant dense<0.000000e+00> : vector<16xf32>
    %53 = vector.multi_reduction <add>, %52, %cst_27 [1] : vector<16x64xf32> to vector<16xf32>
    %54 = vector.shape_cast %53 : vector<16xf32> to vector<16x1xf32>
    %cst_28 = arith.constant 6.400000e+01 : f32
    %55 = vector.broadcast %cst_28 : f32 to vector<16x1xf32>
    %56 = arith.divf %54, %55 : vector<16x1xf32>
    %cst_29 = arith.constant 9.99999974E-6 : f32
    %57 = vector.broadcast %cst_29 : f32 to vector<16x1xf32>
    %58 = arith.addf %56, %57 : vector<16x1xf32>
    %59 = math.rsqrt %58 : vector<16x1xf32>
    %60 = vector.broadcast %59 : vector<16x1xf32> to vector<16x64xf32>
    %61 = arith.mulf %51, %60 : vector<16x64xf32>
    %62 = vector.broadcast %44 : vector<1x64xf32> to vector<16x64xf32>
    %63 = arith.mulf %61, %62 : vector<16x64xf32>
    %64 = vector.broadcast %45 : vector<1x64xf32> to vector<16x64xf32>
    %65 = arith.addf %63, %64 : vector<16x64xf32>
    %c0_30 = arith.constant 0 : index
    %c0_31 = arith.constant 0 : index
    %66 = vector.load %arg10[%c0_30, %c0_31] : memref<16x64xf32, #tpu.memory_space<vmem>>, vector<16x64xf32>
    tpu.vector_store %arg10[%c0_30, %c0_31], %65 {strides = array<i32>} : memref<16x64xf32, #tpu.memory_space<vmem>>, vector<16x64xf32>,
    return
  }
  func.func @transform_0(%arg0: i32) -> (i32, i32) {
    %c0_i32 = arith.constant 0 : i32
    %c0_i32_0 = arith.constant 0 : i32
    return %arg0, %c0_i32 : i32, i32
  }
  func.func @transform_1(%arg0: i32) -> (i32, i32) {
    %c0_i32 = arith.constant 0 : i32
    %c0_i32_0 = arith.constant 0 : i32
    %c0_i32_1 = arith.constant 0 : i32
    return %c0_i32, %c0_i32_0 : i32, i32
  }
  func.func @transform_2(%arg0: i32) -> (i32, i32) {
    %c0_i32 = arith.constant 0 : i32
    %c0_i32_0 = arith.constant 0 : i32
    %c0_i32_1 = arith.constant 0 : i32
    return %c0_i32, %c0_i32_0 : i32, i32
  }
  func.func @transform_3(%arg0: i32) -> (i32, i32) {
    %c0_i32 = arith.constant 0 : i32
    %c0_i32_0 = arith.constant 0 : i32
    %c0_i32_1 = arith.constant 0 : i32
    return %c0_i32, %c0_i32_0 : i32, i32
  }
  func.func @transform_4(%arg0: i32) -> (i32, i32) {
    %c0_i32 = arith.constant 0 : i32
    %c0_i32_0 = arith.constant 0 : i32
    %c0_i32_1 = arith.constant 0 : i32
    return %c0_i32, %c0_i32_0 : i32, i32
  }
  func.func @transform_5(%arg0: i32) -> (i32, i32) {
    %c0_i32 = arith.constant 0 : i32
    %c0_i32_0 = arith.constant 0 : i32
    %c0_i32_1 = arith.constant 0 : i32
    return %c0_i32, %c0_i32_0 : i32, i32
  }
  func.func @transform_6(%arg0: i32) -> (i32, i32) {
    %c0_i32 = arith.constant 0 : i32
    %c0_i32_0 = arith.constant 0 : i32
    %c0_i32_1 = arith.constant 0 : i32
    return %c0_i32, %c0_i32_0 : i32, i32
  }
  func.func @transform_7(%arg0: i32) -> (i32, i32) {
    %c0_i32 = arith.constant 0 : i32
    %c0_i32_0 = arith.constant 0 : i32
    %c0_i32_1 = arith.constant 0 : i32
    return %c0_i32, %c0_i32_0 : i32, i32
  }
  func.func @transform_8(%arg0: i32) -> (i32, i32) {
    %c0_i32 = arith.constant 0 : i32
    %c0_i32_0 = arith.constant 0 : i32
    %c0_i32_1 = arith.constant 0 : i32
    return %c0_i32, %c0_i32_0 : i32, i32
  }
  func.func @transform_9(%arg0: i32) -> (i32, i32) {
    %c0_i32 = arith.constant 0 : i32
    %c0_i32_0 = arith.constant 0 : i32
    return %arg0, %c0_i32 : i32, i32
  }
}

module attributes {stable_mosaic.version = 11 : i64} {
  func.func @_linear_kernel(%arg0: i32, %arg1: memref<16x64xf32, #tpu.memory_space<vmem>>, %arg2: memref<64x32xbf16, #tpu.memory_space<vmem>>, %arg3: memref<1x32xf32, #tpu.memory_space<vmem>>, %arg4: memref<16x32xf32, #tpu.memory_space<vmem>>) attributes {dimension_semantics = [#tpu.dimension_semantics<parallel>], iteration_bounds = array<i64: 1>, scalar_prefetch = 0 : i64, scratch_operands = 0 : i64, tpu.core_type = #tpu.core_type<tc>, window_params = [{transform_indices = @transform_0, window_bounds = array<i64: 16, 64>}, {pipeline_mode = #tpu.pipeline_mode<synchronous>, transform_indices = @transform_1, window_bounds = array<i64: 64, 32>}, {pipeline_mode = #tpu.pipeline_mode<synchronous>, transform_indices = @transform_2, window_bounds = array<i64: 1, 32>}, {transform_indices = @transform_3, window_bounds = array<i64: 16, 32>}]} {
    %c0 = arith.constant 0 : index
    %c0_0 = arith.constant 0 : index
    %0 = vector.load %arg1[%c0, %c0_0] : memref<16x64xf32, #tpu.memory_space<vmem>>, vector<16x64xf32>
    %1 = arith.truncf %0 : vector<16x64xf32> to vector<16x64xbf16>
    %c0_1 = arith.constant 0 : index
    %c0_2 = arith.constant 0 : index
    %2 = vector.load %arg2[%c0_1, %c0_2] : memref<64x32xbf16, #tpu.memory_space<vmem>>, vector<64x32xbf16>
    %cst = arith.constant dense<0.000000e+00> : vector<16x32xf32>
    %3 = tpu.matmul %1, %2, %cst {dimension_numbers = #tpu.dot_dimension_numbers<[1], [0], [0], [1], [0, 0, 1, 1], [], []>} : vector<16x64xbf16>, vector<64x32xbf16>, vector<16x32xf32> -> vector<16x32xf32>
    %c0_3 = arith.constant 0 : index
    %c0_4 = arith.constant 0 : index
    %4 = vector.load %arg3[%c0_3, %c0_4] : memref<1x32xf32, #tpu.memory_space<vmem>>, vector<1x32xf32>
    %5 = vector.broadcast %4 : vector<1x32xf32> to vector<16x32xf32>
    %6 = arith.addf %3, %5 : vector<16x32xf32>
    %c0_5 = arith.constant 0 : index
    %c0_6 = arith.constant 0 : index
    %7 = vector.load %arg4[%c0_5, %c0_6] : memref<16x32xf32, #tpu.memory_space<vmem>>, vector<16x32xf32>
    tpu.vector_store %arg4[%c0_5, %c0_6], %6 {strides = array<i32>} : memref<16x32xf32, #tpu.memory_space<vmem>>, vector<16x32xf32>,
    return
  }
  func.func @transform_0(%arg0: i32) -> (i32, i32) {
    %c0_i32 = arith.constant 0 : i32
    %c0_i32_0 = arith.constant 0 : i32
    return %arg0, %c0_i32 : i32, i32
  }
  func.func @transform_1(%arg0: i32) -> (i32, i32) {
    %c0_i32 = arith.constant 0 : i32
    %c0_i32_0 = arith.constant 0 : i32
    %c0_i32_1 = arith.constant 0 : i32
    return %c0_i32, %c0_i32_0 : i32, i32
  }
  func.func @transform_2(%arg0: i32) -> (i32, i32) {
    %c0_i32 = arith.constant 0 : i32
    %c0_i32_0 = arith.constant 0 : i32
    %c0_i32_1 = arith.constant 0 : i32
    return %c0_i32, %c0_i32_0 : i32, i32
  }
  func.func @transform_3(%arg0: i32) -> (i32, i32) {
    %c0_i32 = arith.constant 0 : i32
    %c0_i32_0 = arith.constant 0 : i32
    return %arg0, %c0_i32 : i32, i32
  }
}

</mosaic_0001>

<llo_original>
// kernel: conformer_feature_extractor.10
$region0: #{conformer_feature_extractor.10}
  #allocation0 [shape = 'u32[]', space=smem, size = 0x4, offset = 0x4, fixed_abs, tag = 'smem constant byte address 0x4 - core index']
  #allocation1 [shape = 'u32[144,128]{1,0:T(1,128)}', space=vmem, size = 0x12000, scoped, tag = 'internal scratch']
  %s0 = inlined_call_operand.vmem [shape: f32[16,4], index: 0, kind: input, shape index: {}]
  %s1 = inlined_call_operand.vmem [shape: bf16[4,32], index: 1, kind: input, shape index: {}]
  %s2 = inlined_call_operand.vmem [shape: f32[1,32], index: 2, kind: input, shape index: {}]
  %s3 = inlined_call_operand.vmem [shape: bf16[32,64], index: 3, kind: input, shape index: {}]
  %s4 = inlined_call_operand.vmem [shape: f32[1,64], index: 4, kind: input, shape index: {}]
  %s5 = inlined_call_operand.vmem [shape: f32[16,64], index: 5, kind: output, shape index: {}]
  %s6 = sld [smem:[#allocation0]]
  $region30: #{conformer_feature_extractor.10} parent=0
    _
  %s8 = ssub.s32 1, %s6
  %s9 = scalar_select 0, %s8, %s6
  // Predicated region
  $region2: #{conformer_feature_extractor.10} parent=0 // pred_check
    _
  $region3: #{conformer_feature_extractor.10} parent=0 // pred_check_branch
    %11 = sbr.rel (0) target = $region5
  $region4: #{conformer_feature_extractor.10} parent=0 // pred_region
    _
  $region5: #{conformer_feature_extractor.10} parent=0 // pred_fallthru
    _
  // Predicated region
  $region6: #{conformer_feature_extractor.10} parent=0 // pred_check
    _
  $region7: #{conformer_feature_extractor.10} parent=0 // pred_check_branch
    %13 = sbr.rel (0) target = $region9
  $region8: #{conformer_feature_extractor.10} parent=0 // pred_region
    _
  $region9: #{conformer_feature_extractor.10} parent=0 // pred_fallthru
    _
  // Predicated region
  $region10: #{conformer_feature_extractor.10} parent=0 // pred_check
    _
  $region11: #{conformer_feature_extractor.10} parent=0 // pred_check_branch
    %15 = sbr.rel (0) target = $region13
  $region12: #{conformer_feature_extractor.10} parent=0 // pred_region
    _
  $region13: #{conformer_feature_extractor.10} parent=0 // pred_fallthru
    _
  // Predicated region
  $region14: #{conformer_feature_extractor.10} parent=0 // pred_check
    _
  $region15: #{conformer_feature_extractor.10} parent=0 // pred_check_branch
    %17 = sbr.rel (0) target = $region17
  $region16: #{conformer_feature_extractor.10} parent=0 // pred_region
    _
  $region17: #{conformer_feature_extractor.10} parent=0 // pred_fallthru
    _
  // Predicated region
  $region18: #{conformer_feature_extractor.10} parent=0 // pred_check
    _
  $region19: #{conformer_feature_extractor.10} parent=0 // pred_check_branch
    %19 = sbr.rel (0) target = $region21
  $region20: #{conformer_feature_extractor.10} parent=0 // pred_region
    _
  $region21: #{conformer_feature_extractor.10} parent=0 // pred_fallthru
    _
  %v21 = vld [vmem:[%s0] sm:$0xff]
  %v22 = vld [vmem:[%s0 + $0x8] sm:$0xff]
  %v23 = vpack.c.bf16 %v22, %v21
  %v24 = vld [vmem:[%s1] sm:$0x3]
  %v25 = vld [vmem:[%s2] sm:$0x1]
  %v27 = vlaneseq
  %v28 = vshrl.u32 %v27, 7
  %v29 = vsub.s32 0, %v28
  %v30 = vrot.slane %v25, %v29
  %vm32 = vcmask 31744
  %v34 = vsel %vm32, %v23, 0
  %vm36 = vcmask 1041408
  %v38 = vsel %vm36, %v24, 0
  %40 = vmatprep.subr.bf16.mxu0 0
  %41 = vmatpush1.bf16.msra.mxu0 %v38
  %42 = vmatprep.subr.bf16.mxu0 0
  %43 = vmatpush1.bf16.msra.mxu0 0
  %44 = vmatprep.subr.bf16.mxu0 0
  %45 = vmatpush1.bf16.msra.mxu0 0
  %46 = vmatprep.subr.bf16.mxu0 0
  %47 = vmatpush1.bf16.msra.mxu0 0
  %48 = vmatprep.subr.bf16.mxu0 0
  %49 = vmatpush1.bf16.msra.mxu0 0
  %50 = vmatprep.subr.bf16.mxu0 0
  %51 = vmatpush1.bf16.msra.mxu0 0
  %52 = vmatprep.subr.bf16.mxu0 0
  %53 = vmatpush1.bf16.msra.mxu0 0
  %54 = vmatprep.subr.bf16.mxu0 0
  %55 = vmatpush1.bf16.msra.mxu0 0
  %56 = vmatprep.subr.bf16.mxu0 0
  %57 = vmatpush1.bf16.msra.mxu0 0
  %58 = vmatprep.subr.bf16.mxu0 0
  %59 = vmatpush1.bf16.msra.mxu0 0
  %60 = vmatprep.subr.bf16.mxu0 0
  %61 = vmatpush1.bf16.msra.mxu0 0
  %62 = vmatprep.subr.bf16.mxu0 0
  %63 = vmatpush1.bf16.msra.mxu0 0
  %64 = vmatprep.subr.bf16.mxu0 0
  %65 = vmatpush1.bf16.msra.mxu0 0
  %66 = vmatprep.subr.bf16.mxu0 0
  %67 = vmatpush1.bf16.msra.mxu0 0
  %68 = vmatprep.subr.bf16.mxu0 0
  %69 = vmatpush1.bf16.msra.mxu0 0
  %70 = vmatprep.subr.bf16.mxu0 0
  %71 = vmatpush1.bf16.msra.mxu0 0
  %72 = vmatprep.mubr.bf16.mxu0 0
  %73 = vmatmul.mubr.bf16.gmra.mrb[0].mxu0 %v34
  %v74 = vpop.f32.mrb[0].mxu0
  %v75 = vadd.f32 %v30, %v74
  %v76 = vpop.f32.mrb[0].mxu0
  %v77 = vpop.f32.mrb[0].mxu0
  %v78 = vadd.f32 %v30, %v77
  %v79 = vpop.f32.mrb[0].mxu0
  %80 = vdwg.mxu0
  %v81 = vpack.c.bf16 %v78, %v75
  %v82 = vld [vmem:[%s3] sm:$0xf]
  %v83 = vld [vmem:[%s3 + $0x4] sm:$0xf]
  %v84 = vld [vmem:[%s3 + $0x8] sm:$0xf]
  %v85 = vld [vmem:[%s3 + $0xc] sm:$0xf]
  %v86 = vld [vmem:[%s4] sm:$0x1]
  %v88 = vlaneseq
  %v89 = vshrl.u32 %v88, 7
  %v90 = vsub.s32 0, %v89
  %v91 = vrot.slane %v86, %v90
  %v97 = vunpack.c.l.b16 %v82
  %v98 = vunpack.c.l.b16 %v83
  %v99 = vunpack.c.l.b16 %v84
  %v100 = vunpack.c.l.b16 %v85
  %v101 = vpack.c.b16 %v98, %v97
  %v102 = vpack.c.b16 %v100, %v99
  %vm105 = vcmask 261120
  %v107 = vsel %vm105, %v81, 0
  %109 = vmatprep.subr.bf16.mxu0 0
  %110 = vmatpush1.bf16.msra.mxu0 %v101
  %111 = vmatprep.subr.bf16.mxu0 0
  %112 = vmatpush1.bf16.msra.mxu0 %v102
  %113 = vmatprep.subr.bf16.mxu0 0
  %114 = vmatpush1.bf16.msra.mxu0 0
  %115 = vmatprep.subr.bf16.mxu0 0
  %116 = vmatpush1.bf16.msra.mxu0 0
  %117 = vmatprep.subr.bf16.mxu0 0
  %118 = vmatpush1.bf16.msra.mxu0 0
  %119 = vmatprep.subr.bf16.mxu0 0
  %120 = vmatpush1.bf16.msra.mxu0 0
  %121 = vmatprep.subr.bf16.mxu0 0
  %122 = vmatpush1.bf16.msra.mxu0 0
  %123 = vmatprep.subr.bf16.mxu0 0
  %124 = vmatpush1.bf16.msra.mxu0 0
  %125 = vmatprep.subr.bf16.mxu0 0
  %126 = vmatpush1.bf16.msra.mxu0 0
  %127 = vmatprep.subr.bf16.mxu0 0
  %128 = vmatpush1.bf16.msra.mxu0 0
  %129 = vmatprep.subr.bf16.mxu0 0
  %130 = vmatpush1.bf16.msra.mxu0 0
  %131 = vmatprep.subr.bf16.mxu0 0
  %132 = vmatpush1.bf16.msra.mxu0 0
  %133 = vmatprep.subr.bf16.mxu0 0
  %134 = vmatpush1.bf16.msra.mxu0 0
  %135 = vmatprep.subr.bf16.mxu0 0
  %136 = vmatpush1.bf16.msra.mxu0 0
  %137 = vmatprep.subr.bf16.mxu0 0
  %138 = vmatpush1.bf16.msra.mxu0 0
  %139 = vmatprep.subr.bf16.mxu0 0
  %140 = vmatpush1.bf16.msra.mxu0 0
  %141 = vmatprep.mubr.bf16.mxu0 0
  %142 = vmatmul.mubr.bf16.gmra.mrb[0].mxu0 %v107
  %v143 = vpop.f32.mrb[0].mxu0
  %v144 = vadd.f32 %v91, %v143
  %v145 = vpop.f32.mrb[0].mxu0
  %v146 = vpop.f32.mrb[0].mxu0
  %v147 = vadd.f32 %v91, %v146
  %v148 = vpop.f32.mrb[0].mxu0
  %149 = vdwg.mxu0
  %vm150 = vcmask 523264
  %151 = vst.msk [vmem:[%s5] sm:$0xff] %vm150, %v144
  %152 = vst.msk [vmem:[%s5 + $0x8] sm:$0xff] %vm150, %v147
  // Predicated region
  $region22: #{conformer_feature_extractor.10} parent=0 // pred_check
    _
  $region23: #{conformer_feature_extractor.10} parent=0 // pred_check_branch
    %154 = sbr.rel (0) target = $region25
  $region24: #{conformer_feature_extractor.10} parent=0 // pred_region
    _
  $region25: #{conformer_feature_extractor.10} parent=0 // pred_fallthru
    _
  // Predicated region
  $region26: #{conformer_feature_extractor.10} parent=0 // pred_check
    _
  $region27: #{conformer_feature_extractor.10} parent=0 // pred_check_branch
    %156 = sbr.rel (0) target = $region29
  $region28: #{conformer_feature_extractor.10} parent=0 // pred_region
    _
  $region29: #{conformer_feature_extractor.10} parent=0 // pred_fallthru
    _

// kernel: conformer_feature_extractor.11
$region0: #{conformer_feature_extractor.11}
  #allocation0 [shape = 'u32[]', space=smem, size = 0x4, offset = 0x4, fixed_abs, tag = 'smem constant byte address 0x4 - core index']
  #allocation1 [shape = 'u32[144,128]{1,0:T(1,128)}', space=vmem, size = 0x12000, scoped, tag = 'internal scratch']
  %s0 = inlined_call_operand.vmem [shape: f32[16,64], index: 0, kind: input, shape index: {}]
  %s1 = inlined_call_operand.vmem [shape: f32[1,64], index: 1, kind: input, shape index: {}]
  %s2 = inlined_call_operand.vmem [shape: f32[1,64], index: 2, kind: input, shape index: {}]
  %s3 = inlined_call_operand.vmem [shape: bf16[64,256], index: 3, kind: input, shape index: {}]
  %s4 = inlined_call_operand.vmem [shape: f32[1,256], index: 4, kind: input, shape index: {}]
  %s5 = inlined_call_operand.vmem [shape: bf16[256,64], index: 5, kind: input, shape index: {}]
  %s6 = inlined_call_operand.vmem [shape: f32[1,64], index: 6, kind: input, shape index: {}]
  %s7 = inlined_call_operand.vmem [shape: f32[1,64], index: 7, kind: input, shape index: {}]
  %s8 = inlined_call_operand.vmem [shape: f32[1,64], index: 8, kind: input, shape index: {}]
  %s9 = inlined_call_operand.vmem [shape: f32[16,64], index: 9, kind: output, shape index: {}]
  %s10 = sld [smem:[#allocation0]]
  $region46: #{conformer_feature_extractor.11} parent=0
    _
  %s12 = ssub.s32 1, %s10
  %s13 = scalar_select 0, %s12, %s10
  // Predicated region
  $region2: #{conformer_feature_extractor.11} parent=0 // pred_check
    _
  $region3: #{conformer_feature_extractor.11} parent=0 // pred_check_branch
    %15 = sbr.rel (0) target = $region5
  $region4: #{conformer_feature_extractor.11} parent=0 // pred_region
    _
  $region5: #{conformer_feature_extractor.11} parent=0 // pred_fallthru
    _
  // Predicated region
  $region6: #{conformer_feature_extractor.11} parent=0 // pred_check
    _
  $region7: #{conformer_feature_extractor.11} parent=0 // pred_check_branch
    %17 = sbr.rel (0) target = $region9
  $region8: #{conformer_feature_extractor.11} parent=0 // pred_region
    _
  $region9: #{conformer_feature_extractor.11} parent=0 // pred_fallthru
    _
  // Predicated region
  $region10: #{conformer_feature_extractor.11} parent=0 // pred_check
    _
  $region11: #{conformer_feature_extractor.11} parent=0 // pred_check_branch
    %19 = sbr.rel (0) target = $region13
  $region12: #{conformer_feature_extractor.11} parent=0 // pred_region
    _
  $region13: #{conformer_feature_extractor.11} parent=0 // pred_fallthru
    _
  // Predicated region
  $region14: #{conformer_feature_extractor.11} parent=0 // pred_check
    _
  $region15: #{conformer_feature_extractor.11} parent=0 // pred_check_branch
    %21 = sbr.rel (0) target = $region17
  $region16: #{conformer_feature_extractor.11} parent=0 // pred_region
    _
  $region17: #{conformer_feature_extractor.11} parent=0 // pred_fallthru
    _
  // Predicated region
  $region18: #{conformer_feature_extractor.11} parent=0 // pred_check
    _
  $region19: #{conformer_feature_extractor.11} parent=0 // pred_check_branch
    %23 = sbr.rel (0) target = $region21
  $region20: #{conformer_feature_extractor.11} parent=0 // pred_region
    _
  $region21: #{conformer_feature_extractor.11} parent=0 // pred_fallthru
    _
  // Predicated region
  $region22: #{conformer_feature_extractor.11} parent=0 // pred_check
    _
  $region23: #{conformer_feature_extractor.11} parent=0 // pred_check_branch
    %25 = sbr.rel (0) target = $region25
  $region24: #{conformer_feature_extractor.11} parent=0 // pred_region
    _
  $region25: #{conformer_feature_extractor.11} parent=0 // pred_fallthru
    _
  // Predicated region
  $region26: #{conformer_feature_extractor.11} parent=0 // pred_check
    _
  $region27: #{conformer_feature_extractor.11} parent=0 // pred_check_branch
    %27 = sbr.rel (0) target = $region29
  $region28: #{conformer_feature_extractor.11} parent=0 // pred_region
    _
  $region29: #{conformer_feature_extractor.11} parent=0 // pred_fallthru
    _
  // Predicated region
  $region30: #{conformer_feature_extractor.11} parent=0 // pred_check
    _
  $region31: #{conformer_feature_extractor.11} parent=0 // pred_check_branch
    %29 = sbr.rel (0) target = $region33
  $region32: #{conformer_feature_extractor.11} parent=0 // pred_region
    _
  $region33: #{conformer_feature_extractor.11} parent=0 // pred_fallthru
    _
  // Predicated region
  $region34: #{conformer_feature_extractor.11} parent=0 // pred_check
    _
  $region35: #{conformer_feature_extractor.11} parent=0 // pred_check_branch
    %31 = sbr.rel (0) target = $region37
  $region36: #{conformer_feature_extractor.11} parent=0 // pred_region
    _
  $region37: #{conformer_feature_extractor.11} parent=0 // pred_fallthru
    _
  %v33 = vld [vmem:[%s0] sm:$0xff]
  %v34 = vld [vmem:[%s0 + $0x8] sm:$0xff]
  %v35 = vld [vmem:[%s1] sm:$0x1]
  %v36 = vld [vmem:[%s2] sm:$0x1]
  %vm37 = vcmask 523264
  %v38 = vsel %vm37, %v33, 0.0
  %39 = vadd.xlane.f32.xlu0 %v38
  %v40 = vpop.xlane.xlu0 %39
  %v41 = vsel %vm37, %v34, 0.0
  %42 = vadd.xlane.f32.xlu0 %v41
  %v43 = vpop.xlane.xlu0 %42
  %v44 = vrcp.pop 64.0
  %v45 = vmul.f32 %v40, %v44
  %v46 = vmul.f32 %v43, %v44
  %v47 = vsub.f32 %v33, %v45
  %v48 = vsub.f32 %v34, %v46
  %v49 = vmul.f32 %v47, %v47
  %v50 = vmul.f32 %v48, %v48
  %v51 = vsel %vm37, %v49, 0.0
  %52 = vadd.xlane.f32.xlu0 %v51
  %v53 = vpop.xlane.xlu0 %52
  %v54 = vsel %vm37, %v50, 0.0
  %55 = vadd.xlane.f32.xlu0 %v54
  %v56 = vpop.xlane.xlu0 %55
  %v57 = vmul.f32 %v53, %v44
  %v58 = vmul.f32 %v56, %v44
  %v59 = vadd.f32 %v57, 1e-05
  %v60 = vadd.f32 %v58, 1e-05
  %v61 = vrsqrt.pop %v59
  %v62 = vrsqrt.pop %v60
  %v63 = vmul.f32 %v47, %v61
  %v64 = vmul.f32 %v48, %v62
  %v66 = vlaneseq
  %v67 = vshrl.u32 %v66, 7
  %v68 = vsub.s32 0, %v67
  %v69 = vrot.slane %v35, %v68
  %v71 = vmul.f32 %v63, %v69
  %v72 = vmul.f32 %v64, %v69
  %v74 = vlaneseq
  %v75 = vshrl.u32 %v74, 7
  %v76 = vsub.s32 0, %v75
  %v77 = vrot.slane %v36, %v76
  %v79 = vadd.f32 %v71, %v77
  %v80 = vadd.f32 %v72, %v77
  %v81 = vpack.c.bf16 %v80, %v79
  %v82 = vld [vmem:[%s3] sm:$0xff]
  %v83 = vld [vmem:[%s3 + $0x8] sm:$0xff]
  %v84 = vld [vmem:[%s3 + $0x10] sm:$0xff]
  %v85 = vld [vmem:[%s3 + $0x18] sm:$0xff]
  %v86 = vld [vmem:[%s3 + $0x20] sm:$0xff]
  %v87 = vld [vmem:[%s3 + $0x28] sm:$0xff]
  %v88 = vld [vmem:[%s3 + $0x30] sm:$0xff]
  %v89 = vld [vmem:[%s3 + $0x38] sm:$0xff]
  %v90 = vld [vmem:[%s4] sm:$0x3]
  %v92 = vlaneseq
  %v93 = vshrl.u32 %v92, 7
  %v94 = vsub.s32 0, %v93
  %v95 = vrot.slane %v90, %v94
  %v96 = vlaneseq
  %v97 = vshrl.u32 %v96, 7
  %v98 = vsub.s32 1, %v97
  %v99 = vrot.slane %v90, %v98
  %v110 = vunpack.c.l.b16 %v82
  %v111 = vunpack.c.h.b16 %v82
  %v112 = vunpack.c.l.b16 %v83
  %v113 = vunpack.c.h.b16 %v83
  %v114 = vunpack.c.l.b16 %v84
  %v115 = vunpack.c.h.b16 %v84
  %v116 = vunpack.c.l.b16 %v85
  %v117 = vunpack.c.h.b16 %v85
  %v118 = vunpack.c.l.b16 %v86
  %v119 = vunpack.c.h.b16 %v86
  %v120 = vunpack.c.l.b16 %v87
  %v121 = vunpack.c.h.b16 %v87
  %v122 = vunpack.c.l.b16 %v88
  %v123 = vunpack.c.h.b16 %v88
  %v124 = vunpack.c.l.b16 %v89
  %v125 = vunpack.c.h.b16 %v89
  %v126 = vpack.c.b16 %v112, %v110
  %v127 = vpack.c.b16 %v113, %v111
  %v128 = vpack.c.b16 %v116, %v114
  %v129 = vpack.c.b16 %v117, %v115
  %v130 = vpack.c.b16 %v120, %v118
  %v131 = vpack.c.b16 %v121, %v119
  %v132 = vpack.c.b16 %v124, %v122
  %v133 = vpack.c.b16 %v125, %v123
  %v143 = vsel %vm37, %v81, 0
  %145 = vmatprep.subr.bf16.mxu0 %v127
  %146 = vmatpush1.bf16.msra.mxu0 %v126
  %147 = vmatprep.subr.bf16.mxu0 %v129
  %148 = vmatpush1.bf16.msra.mxu0 %v128
  %149 = vmatprep.subr.bf16.mxu0 %v131
  %150 = vmatpush1.bf16.msra.mxu0 %v130
  %151 = vmatprep.subr.bf16.mxu0 %v133
  %152 = vmatpush1.bf16.msra.mxu0 %v132
  %153 = vmatprep.subr.bf16.mxu0 0
  %154 = vmatpush1.bf16.msra.mxu0 0
  %155 = vmatprep.subr.bf16.mxu0 0
  %156 = vmatpush1.bf16.msra.mxu0 0
  %157 = vmatprep.subr.bf16.mxu0 0
  %158 = vmatpush1.bf16.msra.mxu0 0
  %159 = vmatprep.subr.bf16.mxu0 0
  %160 = vmatpush1.bf16.msra.mxu0 0
  %161 = vmatprep.subr.bf16.mxu0 0
  %162 = vmatpush1.bf16.msra.mxu0 0
  %163 = vmatprep.subr.bf16.mxu0 0
  %164 = vmatpush1.bf16.msra.mxu0 0
  %165 = vmatprep.subr.bf16.mxu0 0
  %166 = vmatpush1.bf16.msra.mxu0 0
  %167 = vmatprep.subr.bf16.mxu0 0
  %168 = vmatpush1.bf16.msra.mxu0 0
  %169 = vmatprep.subr.bf16.mxu0 0
  %170 = vmatpush1.bf16.msra.mxu0 0
  %171 = vmatprep.subr.bf16.mxu0 0
  %172 = vmatpush1.bf16.msra.mxu0 0
  %173 = vmatprep.subr.bf16.mxu0 0
  %174 = vmatpush1.bf16.msra.mxu0 0
  %175 = vmatprep.subr.bf16.mxu0 0
  %176 = vmatpush1.bf16.msra.mxu0 0
  %177 = vmatprep.mubr.bf16.mxu0 0
  %178 = vmatmul.mubr.bf16.gmra.mrb[0].mxu0 %v143
  %v179 = vpop.f32.mrb[0].mxu0
  %v180 = vadd.f32 %v95, %v179
  %v181 = vpop.f32.mrb[0].mxu0
  %v182 = vadd.f32 %v99, %v181
  %v183 = vpop.f32.mrb[0].mxu0
  %v184 = vadd.f32 %v95, %v183
  %v185 = vpop.f32.mrb[0].mxu0
  %v186 = vadd.f32 %v99, %v185
  %187 = vdwg.mxu0
  %v188 = vxor.u32 %v180, 2147483648
  %v189 = vxor.u32 %v182, 2147483648
  %v190 = vxor.u32 %v184, 2147483648
  %v191 = vxor.u32 %v186, 2147483648
  %v192 = vmul.f32 %v188, 1.442695
  %v193 = vpow.pop %v192
  %v194 = vmul.f32 %v189, 1.442695
  %v195 = vpow.pop %v194
  %v196 = vmul.f32 %v190, 1.442695
  %v197 = vpow.pop %v196
  %v198 = vmul.f32 %v191, 1.442695
  %v199 = vpow.pop %v198
  %v200 = vadd.f32 %v193, 1.0
  %v201 = vadd.f32 %v195, 1.0
  %v202 = vadd.f32 %v197, 1.0
  %v203 = vadd.f32 %v199, 1.0
  %v204 = vrcp.pop %v200
  %v205 = vmul.f32 1.0, %v204
  %v206 = vrcp.pop %v201
  %v207 = vmul.f32 1.0, %v206
  %v208 = vrcp.pop %v202
  %v209 = vmul.f32 1.0, %v208
  %v210 = vrcp.pop %v203
  %v211 = vmul.f32 1.0, %v210
  %v212 = vmul.f32 %v180, %v205
  %v213 = vmul.f32 %v182, %v207
  %v214 = vmul.f32 %v184, %v209
  %v215 = vmul.f32 %v186, %v211
  %v216 = vpack.c.bf16 %v214, %v212
  %v217 = vpack.c.bf16 %v215, %v213
  %v218 = vld [vmem:[%s5] sm:$0xf]
  %v219 = vld [vmem:[%s5 + $0x4] sm:$0xf]
  %v220 = vld [vmem:[%s5 + $0x8] sm:$0xf]
  %v221 = vld [vmem:[%s5 + $0xc] sm:$0xf]
  %v222 = vld [vmem:[%s5 + $0x10] sm:$0xf]
  %v223 = vld [vmem:[%s5 + $0x14] sm:$0xf]
  %v224 = vld [vmem:[%s5 + $0x18] sm:$0xf]
  %v225 = vld [vmem:[%s5 + $0x1c] sm:$0xf]
  %v226 = vld [vmem:[%s5 + $0x20] sm:$0xf]
  %v227 = vld [vmem:[%s5 + $0x24] sm:$0xf]
  %v228 = vld [vmem:[%s5 + $0x28] sm:$0xf]
  %v229 = vld [vmem:[%s5 + $0x2c] sm:$0xf]
  %v230 = vld [vmem:[%s5 + $0x30] sm:$0xf]
  %v231 = vld [vmem:[%s5 + $0x34] sm:$0xf]
  %v232 = vld [vmem:[%s5 + $0x38] sm:$0xf]
  %v233 = vld [vmem:[%s5 + $0x3c] sm:$0xf]
  %v234 = vld [vmem:[%s5 + $0x40] sm:$0xf]
  %v235 = vld [vmem:[%s5 + $0x44] sm:$0xf]
  %v236 = vld [vmem:[%s5 + $0x48] sm:$0xf]
  %v237 = vld [vmem:[%s5 + $0x4c] sm:$0xf]
  %v238 = vld [vmem:[%s5 + $0x50] sm:$0xf]
  %v239 = vld [vmem:[%s5 + $0x54] sm:$0xf]
  %v240 = vld [vmem:[%s5 + $0x58] sm:$0xf]
  %v241 = vld [vmem:[%s5 + $0x5c] sm:$0xf]
  %v242 = vld [vmem:[%s5 + $0x60] sm:$0xf]
  %v243 = vld [vmem:[%s5 + $0x64] sm:$0xf]
  %v244 = vld [vmem:[%s5 + $0x68] sm:$0xf]
  %v245 = vld [vmem:[%s5 + $0x6c] sm:$0xf]
  %v246 = vld [vmem:[%s5 + $0x70] sm:$0xf]
  %v247 = vld [vmem:[%s5 + $0x74] sm:$0xf]
  %v248 = vld [vmem:[%s5 + $0x78] sm:$0xf]
  %v249 = vld [vmem:[%s5 + $0x7c] sm:$0xf]
  %v250 = vld [vmem:[%s6] sm:$0x1]
  %v252 = vlaneseq
  %v253 = vshrl.u32 %v252, 7
  %v254 = vsub.s32 0, %v253
  %v255 = vrot.slane %v250, %v254
  %v289 = vunpack.c.l.b16 %v218
  %v290 = vunpack.c.l.b16 %v219
  %v291 = vunpack.c.l.b16 %v220
  %v292 = vunpack.c.l.b16 %v221
  %v293 = vunpack.c.l.b16 %v222
  %v294 = vunpack.c.l.b16 %v223
  %v295 = vunpack.c.l.b16 %v224
  %v296 = vunpack.c.l.b16 %v225
  %v297 = vunpack.c.l.b16 %v226
  %v298 = vunpack.c.l.b16 %v227
  %v299 = vunpack.c.l.b16 %v228
  %v300 = vunpack.c.l.b16 %v229
  %v301 = vunpack.c.l.b16 %v230
  %v302 = vunpack.c.l.b16 %v231
  %v303 = vunpack.c.l.b16 %v232
  %v304 = vunpack.c.l.b16 %v233
  %v305 = vunpack.c.l.b16 %v234
  %v306 = vunpack.c.l.b16 %v235
  %v307 = vunpack.c.l.b16 %v236
  %v308 = vunpack.c.l.b16 %v237
  %v309 = vunpack.c.l.b16 %v238
  %v310 = vunpack.c.l.b16 %v239
  %v311 = vunpack.c.l.b16 %v240
  %v312 = vunpack.c.l.b16 %v241
  %v313 = vunpack.c.l.b16 %v242
  %v314 = vunpack.c.l.b16 %v243
  %v315 = vunpack.c.l.b16 %v244
  %v316 = vunpack.c.l.b16 %v245
  %v317 = vunpack.c.l.b16 %v246
  %v318 = vunpack.c.l.b16 %v247
  %v319 = vunpack.c.l.b16 %v248
  %v320 = vunpack.c.l.b16 %v249
  %v321 = vpack.c.b16 %v290, %v289
  %v322 = vpack.c.b16 %v292, %v291
  %v323 = vpack.c.b16 %v294, %v293
  %v324 = vpack.c.b16 %v296, %v295
  %v325 = vpack.c.b16 %v298, %v297
  %v326 = vpack.c.b16 %v300, %v299
  %v327 = vpack.c.b16 %v302, %v301
  %v328 = vpack.c.b16 %v304, %v303
  %v329 = vpack.c.b16 %v306, %v305
  %v330 = vpack.c.b16 %v308, %v307
  %v331 = vpack.c.b16 %v310, %v309
  %v332 = vpack.c.b16 %v312, %v311
  %v333 = vpack.c.b16 %v314, %v313
  %v334 = vpack.c.b16 %v316, %v315
  %v335 = vpack.c.b16 %v318, %v317
  %v336 = vpack.c.b16 %v320, %v319
  %353 = vmatprep.subr.bf16.mxu0 0
  %354 = vmatpush1.bf16.msra.mxu0 %v321
  %355 = vmatprep.subr.bf16.mxu0 0
  %356 = vmatpush1.bf16.msra.mxu0 %v322
  %357 = vmatprep.subr.bf16.mxu0 0
  %358 = vmatpush1.bf16.msra.mxu0 %v323
  %359 = vmatprep.subr.bf16.mxu0 0
  %360 = vmatpush1.bf16.msra.mxu0 %v324
  %361 = vmatprep.subr.bf16.mxu0 0
  %362 = vmatpush1.bf16.msra.mxu0 %v325
  %363 = vmatprep.subr.bf16.mxu0 0
  %364 = vmatpush1.bf16.msra.mxu0 %v326
  %365 = vmatprep.subr.bf16.mxu0 0
  %366 = vmatpush1.bf16.msra.mxu0 %v327
  %367 = vmatprep.subr.bf16.mxu0 0
  %368 = vmatpush1.bf16.msra.mxu0 %v328
  %369 = vmatprep.subr.bf16.mxu0 0
  %370 = vmatpush1.bf16.msra.mxu0 %v329
  %371 = vmatprep.subr.bf16.mxu0 0
  %372 = vmatpush1.bf16.msra.mxu0 %v330
  %373 = vmatprep.subr.bf16.mxu0 0
  %374 = vmatpush1.bf16.msra.mxu0 %v331
  %375 = vmatprep.subr.bf16.mxu0 0
  %376 = vmatpush1.bf16.msra.mxu0 %v332
  %377 = vmatprep.subr.bf16.mxu0 0
  %378 = vmatpush1.bf16.msra.mxu0 %v333
  %379 = vmatprep.subr.bf16.mxu0 0
  %380 = vmatpush1.bf16.msra.mxu0 %v334
  %381 = vmatprep.subr.bf16.mxu0 0
  %382 = vmatpush1.bf16.msra.mxu0 %v335
  %383 = vmatprep.subr.bf16.mxu0 0
  %384 = vmatpush1.bf16.msra.mxu0 %v336
  %385 = vmatprep.mubr.bf16.mxu0 %v217
  %386 = vmatmul.mubr.bf16.gmra.mrb[0].mxu0 %v216
  %v387 = vpop.f32.mrb[0].mxu0
  %v388 = vadd.f32 %v255, %v387
  %v389 = vpop.f32.mrb[0].mxu0
  %v390 = vpop.f32.mrb[0].mxu0
  %v391 = vadd.f32 %v255, %v390
  %v392 = vpop.f32.mrb[0].mxu0
  %393 = vdwg.mxu0
  %v394 = vmul.f32 %v388, 0.5
  %v395 = vmul.f32 %v391, 0.5
  %v396 = vadd.f32 %v33, %v394
  %v397 = vadd.f32 %v34, %v395
  %398 = vst.msk [vmem:[%s9] sm:$0xff] %vm37, %v396
  %399 = vst.msk [vmem:[%s9 + $0x8] sm:$0xff] %vm37, %v397
  // Predicated region
  $region38: #{conformer_feature_extractor.11} parent=0 // pred_check
    _
  $region39: #{conformer_feature_extractor.11} parent=0 // pred_check_branch
    %401 = sbr.rel (0) target = $region41
  $region40: #{conformer_feature_extractor.11} parent=0 // pred_region
    _
  $region41: #{conformer_feature_extractor.11} parent=0 // pred_fallthru
    _
  // Predicated region
  $region42: #{conformer_feature_extractor.11} parent=0 // pred_check
    _
  $region43: #{conformer_feature_extractor.11} parent=0 // pred_check_branch
    %403 = sbr.rel (0) target = $region45
  $region44: #{conformer_feature_extractor.11} parent=0 // pred_region
    _
  $region45: #{conformer_feature_extractor.11} parent=0 // pred_fallthru
    _

// kernel: conformer_feature_extractor.13
$region0: #{conformer_feature_extractor.13}
  #allocation0 [shape = 'u32[]', space=smem, size = 0x4, offset = 0x4, fixed_abs, tag = 'smem constant byte address 0x4 - core index']
  #allocation1 [shape = 'u32[144,128]{1,0:T(1,128)}', space=vmem, size = 0x12000, scoped, tag = 'internal scratch']
  #allocation2 [shape = 'f32[2,19,64]{2,1,0:T(8,128)}', space=vmem, size = 0x6000, scoped, tag = 'scratch operand']
  %s0 = inlined_call_operand.vmem [shape: f32[16,64], index: 0, kind: input, shape index: {}]
  %s1 = inlined_call_operand.vmem [shape: f32[1,64], index: 1, kind: input, shape index: {}]
  %s2 = inlined_call_operand.vmem [shape: f32[1,64], index: 2, kind: input, shape index: {}]
  %s3 = inlined_call_operand.vmem [shape: bf16[64,64], index: 3, kind: input, shape index: {}]
  %s4 = inlined_call_operand.vmem [shape: f32[1,64], index: 4, kind: input, shape index: {}]
  %s5 = inlined_call_operand.vmem [shape: bf16[64,64], index: 5, kind: input, shape index: {}]
  %s6 = inlined_call_operand.vmem [shape: f32[1,64], index: 6, kind: input, shape index: {}]
  %s7 = inlined_call_operand.vmem [shape: f32[7,64], index: 7, kind: input, shape index: {}]
  %s8 = inlined_call_operand.vmem [shape: f32[1,64], index: 8, kind: input, shape index: {}]
  %s9 = inlined_call_operand.vmem [shape: f32[1,64], index: 9, kind: input, shape index: {}]
  %s10 = inlined_call_operand.vmem [shape: f32[1,64], index: 10, kind: input, shape index: {}]
  %s11 = inlined_call_operand.vmem [shape: bf16[64,64], index: 11, kind: input, shape index: {}]
  %s12 = inlined_call_operand.vmem [shape: f32[1,64], index: 12, kind: input, shape index: {}]
  %s13 = inlined_call_operand.vmem [shape: f32[16,64], index: 13, kind: output, shape index: {}]
  %s14 = sld [smem:[#allocation0]]
  $region62: #{conformer_feature_extractor.13} parent=0
    _
  %s16 = ssub.s32 1, %s14
  %s17 = scalar_select 0, %s16, %s14
  // Predicated region
  $region2: #{conformer_feature_extractor.13} parent=0 // pred_check
    _
  $region3: #{conformer_feature_extractor.13} parent=0 // pred_check_branch
    %19 = sbr.rel (0) target = $region5
  $region4: #{conformer_feature_extractor.13} parent=0 // pred_region
    _
  $region5: #{conformer_feature_extractor.13} parent=0 // pred_fallthru
    _
  // Predicated region
  $region6: #{conformer_feature_extractor.13} parent=0 // pred_check
    _
  $region7: #{conformer_feature_extractor.13} parent=0 // pred_check_branch
    %21 = sbr.rel (0) target = $region9
  $region8: #{conformer_feature_extractor.13} parent=0 // pred_region
    _
  $region9: #{conformer_feature_extractor.13} parent=0 // pred_fallthru
    _
  // Predicated region
  $region10: #{conformer_feature_extractor.13} parent=0 // pred_check
    _
  $region11: #{conformer_feature_extractor.13} parent=0 // pred_check_branch
    %23 = sbr.rel (0) target = $region13
  $region12: #{conformer_feature_extractor.13} parent=0 // pred_region
    _
  $region13: #{conformer_feature_extractor.13} parent=0 // pred_fallthru
    _
  // Predicated region
  $region14: #{conformer_feature_extractor.13} parent=0 // pred_check
    _
  $region15: #{conformer_feature_extractor.13} parent=0 // pred_check_branch
    %25 = sbr.rel (0) target = $region17
  $region16: #{conformer_feature_extractor.13} parent=0 // pred_region
    _
  $region17: #{conformer_feature_extractor.13} parent=0 // pred_fallthru
    _
  // Predicated region
  $region18: #{conformer_feature_extractor.13} parent=0 // pred_check
    _
  $region19: #{conformer_feature_extractor.13} parent=0 // pred_check_branch
    %27 = sbr.rel (0) target = $region21
  $region20: #{conformer_feature_extractor.13} parent=0 // pred_region
    _
  $region21: #{conformer_feature_extractor.13} parent=0 // pred_fallthru
    _
  // Predicated region
  $region22: #{conformer_feature_extractor.13} parent=0 // pred_check
    _
  $region23: #{conformer_feature_extractor.13} parent=0 // pred_check_branch
    %29 = sbr.rel (0) target = $region25
  $region24: #{conformer_feature_extractor.13} parent=0 // pred_region
    _
  $region25: #{conformer_feature_extractor.13} parent=0 // pred_fallthru
    _
  // Predicated region
  $region26: #{conformer_feature_extractor.13} parent=0 // pred_check
    _
  $region27: #{conformer_feature_extractor.13} parent=0 // pred_check_branch
    %31 = sbr.rel (0) target = $region29
  $region28: #{conformer_feature_extractor.13} parent=0 // pred_region
    _
  $region29: #{conformer_feature_extractor.13} parent=0 // pred_fallthru
    _
  // Predicated region
  $region30: #{conformer_feature_extractor.13} parent=0 // pred_check
    _
  $region31: #{conformer_feature_extractor.13} parent=0 // pred_check_branch
    %33 = sbr.rel (0) target = $region33
  $region32: #{conformer_feature_extractor.13} parent=0 // pred_region
    _
  $region33: #{conformer_feature_extractor.13} parent=0 // pred_fallthru
    _
  // Predicated region
  $region34: #{conformer_feature_extractor.13} parent=0 // pred_check
    _
  $region35: #{conformer_feature_extractor.13} parent=0 // pred_check_branch
    %35 = sbr.rel (0) target = $region37
  $region36: #{conformer_feature_extractor.13} parent=0 // pred_region
    _
  $region37: #{conformer_feature_extractor.13} parent=0 // pred_fallthru
    _
  // Predicated region
  $region38: #{conformer_feature_extractor.13} parent=0 // pred_check
    _
  $region39: #{conformer_feature_extractor.13} parent=0 // pred_check_branch
    %37 = sbr.rel (0) target = $region41
  $region40: #{conformer_feature_extractor.13} parent=0 // pred_region
    _
  $region41: #{conformer_feature_extractor.13} parent=0 // pred_fallthru
    _
  // Predicated region
  $region42: #{conformer_feature_extractor.13} parent=0 // pred_check
    _
  $region43: #{conformer_feature_extractor.13} parent=0 // pred_check_branch
    %39 = sbr.rel (0) target = $region45
  $region44: #{conformer_feature_extractor.13} parent=0 // pred_region
    _
  $region45: #{conformer_feature_extractor.13} parent=0 // pred_fallthru
    _
  // Predicated region
  $region46: #{conformer_feature_extractor.13} parent=0 // pred_check
    _
  $region47: #{conformer_feature_extractor.13} parent=0 // pred_check_branch
    %41 = sbr.rel (0) target = $region49
  $region48: #{conformer_feature_extractor.13} parent=0 // pred_region
    _
  $region49: #{conformer_feature_extractor.13} parent=0 // pred_fallthru
    _
  // Predicated region
  $region50: #{conformer_feature_extractor.13} parent=0 // pred_check
    _
  $region51: #{conformer_feature_extractor.13} parent=0 // pred_check_branch
    %43 = sbr.rel (0) target = $region53
  $region52: #{conformer_feature_extractor.13} parent=0 // pred_region
    _
  $region53: #{conformer_feature_extractor.13} parent=0 // pred_fallthru
    _
  %v45 = vld [vmem:[%s0] sm:$0xff]
  %v46 = vld [vmem:[%s0 + $0x8] sm:$0xff]
  %v47 = vld [vmem:[%s1] sm:$0x1]
  %v48 = vld [vmem:[%s2] sm:$0x1]
  %vm49 = vcmask 523264
  %v50 = vsel %vm49, %v45, 0.0
  %51 = vadd.xlane.f32.xlu0 %v50
  %v52 = vpop.xlane.xlu0 %51
  %v53 = vsel %vm49, %v46, 0.0
  %54 = vadd.xlane.f32.xlu0 %v53
  %v55 = vpop.xlane.xlu0 %54
  %v56 = vrcp.pop 64.0
  %v57 = vmul.f32 %v52, %v56
  %v58 = vmul.f32 %v55, %v56
  %v59 = vsub.f32 %v45, %v57
  %v60 = vsub.f32 %v46, %v58
  %v61 = vmul.f32 %v59, %v59
  %v62 = vmul.f32 %v60, %v60
  %v63 = vsel %vm49, %v61, 0.0
  %64 = vadd.xlane.f32.xlu0 %v63
  %v65 = vpop.xlane.xlu0 %64
  %v66 = vsel %vm49, %v62, 0.0
  %67 = vadd.xlane.f32.xlu0 %v66
  %v68 = vpop.xlane.xlu0 %67
  %v69 = vmul.f32 %v65, %v56
  %v70 = vmul.f32 %v68, %v56
  %v71 = vadd.f32 %v69, 1e-05
  %v72 = vadd.f32 %v70, 1e-05
  %v73 = vrsqrt.pop %v71
  %v74 = vrsqrt.pop %v72
  %v75 = vmul.f32 %v59, %v73
  %v76 = vmul.f32 %v60, %v74
  %v78 = vlaneseq
  %v79 = vshrl.u32 %v78, 7
  %v80 = vsub.s32 0, %v79
  %v81 = vrot.slane %v47, %v80
  %v83 = vmul.f32 %v75, %v81
  %v84 = vmul.f32 %v76, %v81
  %v86 = vlaneseq
  %v87 = vshrl.u32 %v86, 7
  %v88 = vsub.s32 0, %v87
  %v89 = vrot.slane %v48, %v88
  %v91 = vadd.f32 %v83, %v89
  %v92 = vadd.f32 %v84, %v89
  %v93 = vpack.c.bf16 %v92, %v91
  %v94 = vld [vmem:[%s3] sm:$0xf]
  %v95 = vld [vmem:[%s3 + $0x4] sm:$0xf]
  %v96 = vld [vmem:[%s3 + $0x8] sm:$0xf]
  %v97 = vld [vmem:[%s3 + $0xc] sm:$0xf]
  %v98 = vld [vmem:[%s3 + $0x10] sm:$0xf]
  %v99 = vld [vmem:[%s3 + $0x14] sm:$0xf]
  %v100 = vld [vmem:[%s3 + $0x18] sm:$0xf]
  %v101 = vld [vmem:[%s3 + $0x1c] sm:$0xf]
  %v102 = vld [vmem:[%s4] sm:$0x1]
  %v104 = vlaneseq
  %v105 = vshrl.u32 %v104, 7
  %v106 = vsub.s32 0, %v105
  %v107 = vrot.slane %v102, %v106
  %v117 = vunpack.c.l.b16 %v94
  %v118 = vunpack.c.l.b16 %v95
  %v119 = vunpack.c.l.b16 %v96
  %v120 = vunpack.c.l.b16 %v97
  %v121 = vunpack.c.l.b16 %v98
  %v122 = vunpack.c.l.b16 %v99
  %v123 = vunpack.c.l.b16 %v100
  %v124 = vunpack.c.l.b16 %v101
  %v125 = vpack.c.b16 %v118, %v117
  %v126 = vpack.c.b16 %v120, %v119
  %v127 = vpack.c.b16 %v122, %v121
  %v128 = vpack.c.b16 %v124, %v123
  %v134 = vsel %vm49, %v93, 0
  %136 = vmatprep.subr.bf16.mxu0 0
  %137 = vmatpush1.bf16.msra.mxu0 %v125
  %138 = vmatprep.subr.bf16.mxu0 0
  %139 = vmatpush1.bf16.msra.mxu0 %v126
  %140 = vmatprep.subr.bf16.mxu0 0
  %141 = vmatpush1.bf16.msra.mxu0 %v127
  %142 = vmatprep.subr.bf16.mxu0 0
  %143 = vmatpush1.bf16.msra.mxu0 %v128
  %144 = vmatprep.subr.bf16.mxu0 0
  %145 = vmatpush1.bf16.msra.mxu0 0
  %146 = vmatprep.subr.bf16.mxu0 0
  %147 = vmatpush1.bf16.msra.mxu0 0
  %148 = vmatprep.subr.bf16.mxu0 0
  %149 = vmatpush1.bf16.msra.mxu0 0
  %150 = vmatprep.subr.bf16.mxu0 0
  %151 = vmatpush1.bf16.msra.mxu0 0
  %152 = vmatprep.subr.bf16.mxu0 0
  %153 = vmatpush1.bf16.msra.mxu0 0
  %154 = vmatprep.subr.bf16.mxu0 0
  %155 = vmatpush1.bf16.msra.mxu0 0
  %156 = vmatprep.subr.bf16.mxu0 0
  %157 = vmatpush1.bf16.msra.mxu0 0
  %158 = vmatprep.subr.bf16.mxu0 0
  %159 = vmatpush1.bf16.msra.mxu0 0
  %160 = vmatprep.subr.bf16.mxu0 0
  %161 = vmatpush1.bf16.msra.mxu0 0
  %162 = vmatprep.subr.bf16.mxu0 0
  %163 = vmatpush1.bf16.msra.mxu0 0
  %164 = vmatprep.subr.bf16.mxu0 0
  %165 = vmatpush1.bf16.msra.mxu0 0
  %166 = vmatprep.subr.bf16.mxu0 0
  %167 = vmatpush1.bf16.msra.mxu0 0
  %168 = vmatprep.mubr.bf16.mxu0 0
  %169 = vmatmul.mubr.bf16.gmra.mrb[0].mxu0 %v134
  %v170 = vpop.f32.mrb[0].mxu0
  %v171 = vadd.f32 %v107, %v170
  %v172 = vpop.f32.mrb[0].mxu0
  %v173 = vpop.f32.mrb[0].mxu0
  %v174 = vadd.f32 %v107, %v173
  %v175 = vpop.f32.mrb[0].mxu0
  %176 = vdwg.mxu0
  %v177 = vld [vmem:[%s5] sm:$0xf]
  %v178 = vld [vmem:[%s5 + $0x4] sm:$0xf]
  %v179 = vld [vmem:[%s5 + $0x8] sm:$0xf]
  %v180 = vld [vmem:[%s5 + $0xc] sm:$0xf]
  %v181 = vld [vmem:[%s5 + $0x10] sm:$0xf]
  %v182 = vld [vmem:[%s5 + $0x14] sm:$0xf]
  %v183 = vld [vmem:[%s5 + $0x18] sm:$0xf]
  %v184 = vld [vmem:[%s5 + $0x1c] sm:$0xf]
  %v185 = vld [vmem:[%s6] sm:$0x1]
  %v187 = vlaneseq
  %v188 = vshrl.u32 %v187, 7
  %v189 = vsub.s32 0, %v188
  %v190 = vrot.slane %v185, %v189
  %v200 = vunpack.c.l.b16 %v177
  %v201 = vunpack.c.l.b16 %v178
  %v202 = vunpack.c.l.b16 %v179
  %v203 = vunpack.c.l.b16 %v180
  %v204 = vunpack.c.l.b16 %v181
  %v205 = vunpack.c.l.b16 %v182
  %v206 = vunpack.c.l.b16 %v183
  %v207 = vunpack.c.l.b16 %v184
  %v208 = vpack.c.b16 %v201, %v200
  %v209 = vpack.c.b16 %v203, %v202
  %v210 = vpack.c.b16 %v205, %v204
  %v211 = vpack.c.b16 %v207, %v206
  %216 = vmatprep.subr.bf16.mxu0 0
  %217 = vmatpush1.bf16.msra.mxu0 %v208
  %218 = vmatprep.subr.bf16.mxu0 0
  %219 = vmatpush1.bf16.msra.mxu0 %v209
  %220 = vmatprep.subr.bf16.mxu0 0
  %221 = vmatpush1.bf16.msra.mxu0 %v210
  %222 = vmatprep.subr.bf16.mxu0 0
  %223 = vmatpush1.bf16.msra.mxu0 %v211
  %224 = vmatprep.subr.bf16.mxu0 0
  %225 = vmatpush1.bf16.msra.mxu0 0
  %226 = vmatprep.subr.bf16.mxu0 0
  %227 = vmatpush1.bf16.msra.mxu0 0
  %228 = vmatprep.subr.bf16.mxu0 0
  %229 = vmatpush1.bf16.msra.mxu0 0
  %230 = vmatprep.subr.bf16.mxu0 0
  %231 = vmatpush1.bf16.msra.mxu0 0
  %232 = vmatprep.subr.bf16.mxu0 0
  %233 = vmatpush1.bf16.msra.mxu0 0
  %234 = vmatprep.subr.bf16.mxu0 0
  %235 = vmatpush1.bf16.msra.mxu0 0
  %236 = vmatprep.subr.bf16.mxu0 0
  %237 = vmatpush1.bf16.msra.mxu0 0
  %238 = vmatprep.subr.bf16.mxu0 0
  %239 = vmatpush1.bf16.msra.mxu0 0
  %240 = vmatprep.subr.bf16.mxu0 0
  %241 = vmatpush1.bf16.msra.mxu0 0
  %242 = vmatprep.subr.bf16.mxu0 0
  %243 = vmatpush1.bf16.msra.mxu0 0
  %244 = vmatprep.subr.bf16.mxu0 0
  %245 = vmatpush1.bf16.msra.mxu0 0
  %246 = vmatprep.subr.bf16.mxu0 0
  %247 = vmatpush1.bf16.msra.mxu0 0
  %248 = vmatprep.mubr.bf16.mxu0 0
  %249 = vmatmul.mubr.bf16.gmra.mrb[0].mxu0 %v134
  %v250 = vpop.f32.mrb[0].mxu0
  %v251 = vadd.f32 %v190, %v250
  %v252 = vpop.f32.mrb[0].mxu0
  %v253 = vpop.f32.mrb[0].mxu0
  %v254 = vadd.f32 %v190, %v253
  %v255 = vpop.f32.mrb[0].mxu0
  %256 = vdwg.mxu0
  %v257 = vxor.u32 %v251, 2147483648
  %v258 = vxor.u32 %v254, 2147483648
  %v259 = vmul.f32 %v257, 1.442695
  %v260 = vpow.pop %v259
  %v261 = vmul.f32 %v258, 1.442695
  %v262 = vpow.pop %v261
  %v263 = vadd.f32 %v260, 1.0
  %v264 = vadd.f32 %v262, 1.0
  %v265 = vrcp.pop %v263
  %v266 = vmul.f32 1.0, %v265
  %v267 = vrcp.pop %v264
  %v268 = vmul.f32 1.0, %v267
  %v269 = vmul.f32 %v171, %v266
  %v270 = vmul.f32 %v174, %v268
  %271 = vst.msk [vmem:[#allocation2] sm:$0xff] %vm49, 0.0
  %272 = vst.msk [vmem:[#allocation2 + $0x8] sm:$0xff] %vm49, 0.0
  %vm273 = vcmask 518144
  %274 = vst.msk [vmem:[#allocation2 + $0x10] sm:$0x7] %vm273, 0.0
  %275 = vst.msk [vmem:[#allocation2 + $0x18] sm:$0xff] %vm49, 0.0
  %276 = vst.msk [vmem:[#allocation2 + $0x20] sm:$0xff] %vm49, 0.0
  %277 = vst.msk [vmem:[#allocation2 + $0x28] sm:$0x7] %vm273, 0.0
  %278 = vst.msk [vmem:[#allocation2 + $0x8] sm:$0xff] %vm49, %v269
  %s279 = scalar_lea.vmem [#allocation2], 24
  %280 = vst.msk [vmem:[%s279 + $0x8] sm:$0xff] %vm49, %v270
  %v281 = vld [vmem:[%s7] sm:$0x7f]
  %v282 = vld [vmem:[#allocation2 + $0x5] sm:$0xff]
  %v283 = vlaneseq
  %v284 = vshrl.u32 %v283, 7
  %v285 = vsub.s32 0, %v284
  %v286 = vrot.slane %v281, %v285
  %v287 = vmul.f32 %v282, %v286
  %v288 = vadd.f32 %v287, 0.0
  %v289 = vld [vmem:[#allocation2 + $0x6] sm:$0xff]
  %v290 = vlaneseq
  %v291 = vshrl.u32 %v290, 7
  %v292 = vsub.s32 1, %v291
  %v293 = vrot.slane %v281, %v292
  %v294 = vmul.f32 %v289, %v293
  %v295 = vadd.f32 %v288, %v294
  %v296 = vld [vmem:[#allocation2 + $0x7] sm:$0xff]
  %v297 = vlaneseq
  %v298 = vshrl.u32 %v297, 7
  %v299 = vsub.s32 2, %v298
  %v300 = vrot.slane %v281, %v299
  %v301 = vmul.f32 %v296, %v300
  %v302 = vadd.f32 %v295, %v301
  %v303 = vld [vmem:[#allocation2 + $0x8] sm:$0xff]
  %v304 = vlaneseq
  %v305 = vshrl.u32 %v304, 7
  %v306 = vsub.s32 3, %v305
  %v307 = vrot.slane %v281, %v306
  %v308 = vmul.f32 %v303, %v307
  %v309 = vadd.f32 %v302, %v308
  %v310 = vld [vmem:[#allocation2 + $0x9] sm:$0xff]
  %v311 = vlaneseq
  %v312 = vshrl.u32 %v311, 7
  %v313 = vsub.s32 4, %v312
  %v314 = vrot.slane %v281, %v313
  %v315 = vmul.f32 %v310, %v314
  %v316 = vadd.f32 %v309, %v315
  %v317 = vld [vmem:[#allocation2 + $0xa] sm:$0xff]
  %v318 = vlaneseq
  %v319 = vshrl.u32 %v318, 7
  %v320 = vsub.s32 5, %v319
  %v321 = vrot.slane %v281, %v320
  %v322 = vmul.f32 %v317, %v321
  %v323 = vadd.f32 %v316, %v322
  %v324 = vld [vmem:[#allocation2 + $0xb] sm:$0xff]
  %v325 = vlaneseq
  %v326 = vshrl.u32 %v325, 7
  %v327 = vsub.s32 6, %v326
  %v328 = vrot.slane %v281, %v327
  %v329 = vmul.f32 %v324, %v328
  %v330 = vadd.f32 %v323, %v329
  %v331 = vld [vmem:[%s279 + $0x5] sm:$0xff]
  %v332 = vmul.f32 %v331, %v286
  %v333 = vadd.f32 %v332, 0.0
  %v334 = vld [vmem:[%s279 + $0x6] sm:$0xff]
  %v335 = vmul.f32 %v334, %v293
  %v336 = vadd.f32 %v333, %v335
  %v337 = vld [vmem:[%s279 + $0x7] sm:$0xff]
  %v338 = vmul.f32 %v337, %v300
  %v339 = vadd.f32 %v336, %v338
  %v340 = vld [vmem:[%s279 + $0x8] sm:$0xff]
  %v341 = vmul.f32 %v340, %v307
  %v342 = vadd.f32 %v339, %v341
  %v343 = vld [vmem:[%s279 + $0x9] sm:$0xff]
  %v344 = vmul.f32 %v343, %v314
  %v345 = vadd.f32 %v342, %v344
  %v346 = vld [vmem:[%s279 + $0xa] sm:$0xff]
  %v347 = vmul.f32 %v346, %v321
  %v348 = vadd.f32 %v345, %v347
  %v349 = vld [vmem:[%s279 + $0xb] sm:$0xff]
  %v350 = vmul.f32 %v349, %v328
  %v351 = vadd.f32 %v348, %v350
  %v352 = vld [vmem:[%s8] sm:$0x1]
  %v354 = vlaneseq
  %v355 = vshrl.u32 %v354, 7
  %v356 = vsub.s32 0, %v355
  %v357 = vrot.slane %v352, %v356
  %v359 = vadd.f32 %v330, %v357
  %v360 = vadd.f32 %v351, %v357
  %v361 = vld [vmem:[%s9] sm:$0x1]
  %v363 = vlaneseq
  %v364 = vshrl.u32 %v363, 7
  %v365 = vsub.s32 0, %v364
  %v366 = vrot.slane %v361, %v365
  %v368 = vmul.f32 %v359, %v366
  %v369 = vmul.f32 %v360, %v366
  %v370 = vld [vmem:[%s10] sm:$0x1]
  %v372 = vlaneseq
  %v373 = vshrl.u32 %v372, 7
  %v374 = vsub.s32 0, %v373
  %v375 = vrot.slane %v370, %v374
  %v377 = vadd.f32 %v368, %v375
  %v378 = vadd.f32 %v369, %v375
  %v379 = vxor.u32 %v377, 2147483648
  %v380 = vxor.u32 %v378, 2147483648
  %v381 = vmul.f32 %v379, 1.442695
  %v382 = vpow.pop %v381
  %v383 = vmul.f32 %v380, 1.442695
  %v384 = vpow.pop %v383
  %v385 = vadd.f32 %v382, 1.0
  %v386 = vadd.f32 %v384, 1.0
  %v387 = vrcp.pop %v385
  %v388 = vmul.f32 1.0, %v387
  %v389 = vrcp.pop %v386
  %v390 = vmul.f32 1.0, %v389
  %v391 = vmul.f32 %v377, %v388
  %v392 = vmul.f32 %v378, %v390
  %v393 = vpack.c.bf16 %v392, %v391
  %v394 = vld [vmem:[%s11] sm:$0xf]
  %v395 = vld [vmem:[%s11 + $0x4] sm:$0xf]
  %v396 = vld [vmem:[%s11 + $0x8] sm:$0xf]
  %v397 = vld [vmem:[%s11 + $0xc] sm:$0xf]
  %v398 = vld [vmem:[%s11 + $0x10] sm:$0xf]
  %v399 = vld [vmem:[%s11 + $0x14] sm:$0xf]
  %v400 = vld [vmem:[%s11 + $0x18] sm:$0xf]
  %v401 = vld [vmem:[%s11 + $0x1c] sm:$0xf]
  %v402 = vld [vmem:[%s12] sm:$0x1]
  %v404 = vlaneseq
  %v405 = vshrl.u32 %v404, 7
  %v406 = vsub.s32 0, %v405
  %v407 = vrot.slane %v402, %v406
  %v417 = vunpack.c.l.b16 %v394
  %v418 = vunpack.c.l.b16 %v395
  %v419 = vunpack.c.l.b16 %v396
  %v420 = vunpack.c.l.b16 %v397
  %v421 = vunpack.c.l.b16 %v398
  %v422 = vunpack.c.l.b16 %v399
  %v423 = vunpack.c.l.b16 %v400
  %v424 = vunpack.c.l.b16 %v401
  %v425 = vpack.c.b16 %v418, %v417
  %v426 = vpack.c.b16 %v420, %v419
  %v427 = vpack.c.b16 %v422, %v421
  %v428 = vpack.c.b16 %v424, %v423
  %v434 = vsel %vm49, %v393, 0
  %436 = vmatprep.subr.bf16.mxu0 0
  %437 = vmatpush1.bf16.msra.mxu0 %v425
  %438 = vmatprep.subr.bf16.mxu0 0
  %439 = vmatpush1.bf16.msra.mxu0 %v426
  %440 = vmatprep.subr.bf16.mxu0 0
  %441 = vmatpush1.bf16.msra.mxu0 %v427
  %442 = vmatprep.subr.bf16.mxu0 0
  %443 = vmatpush1.bf16.msra.mxu0 %v428
  %444 = vmatprep.subr.bf16.mxu0 0
  %445 = vmatpush1.bf16.msra.mxu0 0
  %446 = vmatprep.subr.bf16.mxu0 0
  %447 = vmatpush1.bf16.msra.mxu0 0
  %448 = vmatprep.subr.bf16.mxu0 0
  %449 = vmatpush1.bf16.msra.mxu0 0
  %450 = vmatprep.subr.bf16.mxu0 0
  %451 = vmatpush1.bf16.msra.mxu0 0
  %452 = vmatprep.subr.bf16.mxu0 0
  %453 = vmatpush1.bf16.msra.mxu0 0
  %454 = vmatprep.subr.bf16.mxu0 0
  %455 = vmatpush1.bf16.msra.mxu0 0
  %456 = vmatprep.subr.bf16.mxu0 0
  %457 = vmatpush1.bf16.msra.mxu0 0
  %458 = vmatprep.subr.bf16.mxu0 0
  %459 = vmatpush1.bf16.msra.mxu0 0
  %460 = vmatprep.subr.bf16.mxu0 0
  %461 = vmatpush1.bf16.msra.mxu0 0
  %462 = vmatprep.subr.bf16.mxu0 0
  %463 = vmatpush1.bf16.msra.mxu0 0
  %464 = vmatprep.subr.bf16.mxu0 0
  %465 = vmatpush1.bf16.msra.mxu0 0
  %466 = vmatprep.subr.bf16.mxu0 0
  %467 = vmatpush1.bf16.msra.mxu0 0
  %468 = vmatprep.mubr.bf16.mxu0 0
  %469 = vmatmul.mubr.bf16.gmra.mrb[0].mxu0 %v434
  %v470 = vpop.f32.mrb[0].mxu0
  %v471 = vadd.f32 %v407, %v470
  %v472 = vpop.f32.mrb[0].mxu0
  %v473 = vpop.f32.mrb[0].mxu0
  %v474 = vadd.f32 %v407, %v473
  %v475 = vpop.f32.mrb[0].mxu0
  %476 = vdwg.mxu0
  %v477 = vadd.f32 %v45, %v471
  %v478 = vadd.f32 %v46, %v474
  %479 = vst.msk [vmem:[%s13] sm:$0xff] %vm49, %v477
  %480 = vst.msk [vmem:[%s13 + $0x8] sm:$0xff] %vm49, %v478
  // Predicated region
  $region54: #{conformer_feature_extractor.13} parent=0 // pred_check
    _
  $region55: #{conformer_feature_extractor.13} parent=0 // pred_check_branch
    %482 = sbr.rel (0) target = $region57
  $region56: #{conformer_feature_extractor.13} parent=0 // pred_region
    _
  $region57: #{conformer_feature_extractor.13} parent=0 // pred_fallthru
    _
  // Predicated region
  $region58: #{conformer_feature_extractor.13} parent=0 // pred_check
    _
  $region59: #{conformer_feature_extractor.13} parent=0 // pred_check_branch
    %484 = sbr.rel (0) target = $region61
  $region60: #{conformer_feature_extractor.13} parent=0 // pred_region
    _
  $region61: #{conformer_feature_extractor.13} parent=0 // pred_fallthru
    _

// kernel: conformer_feature_extractor.12
$region0: #{conformer_feature_extractor.12}
  #allocation0 [shape = 'u32[]', space=smem, size = 0x4, offset = 0x4, fixed_abs, tag = 'smem constant byte address 0x4 - core index']
  #allocation1 [shape = 'u32[144,128]{1,0:T(1,128)}', space=vmem, size = 0x12000, scoped, tag = 'internal scratch']
  %s0 = inlined_call_operand.vmem [shape: f32[16,64], index: 0, kind: input, shape index: {}]
  %s1 = inlined_call_operand.vmem [shape: f32[1,64], index: 1, kind: input, shape index: {}]
  %s2 = inlined_call_operand.vmem [shape: f32[1,64], index: 2, kind: input, shape index: {}]
  %s3 = inlined_call_operand.vmem [shape: bf16[64,192], index: 3, kind: input, shape index: {}]
  %s4 = inlined_call_operand.vmem [shape: f32[1,192], index: 4, kind: input, shape index: {}]
  %s5 = inlined_call_operand.vmem [shape: bf16[64,64], index: 5, kind: input, shape index: {}]
  %s6 = inlined_call_operand.vmem [shape: f32[1,64], index: 6, kind: input, shape index: {}]
  %s7 = inlined_call_operand.vmem [shape: f32[16,64], index: 7, kind: output, shape index: {}]
  %s8 = sld [smem:[#allocation0]]
  $region38: #{conformer_feature_extractor.12} parent=0
    _
  %s10 = ssub.s32 1, %s8
  %s11 = scalar_select 0, %s10, %s8
  // Predicated region
  $region2: #{conformer_feature_extractor.12} parent=0 // pred_check
    _
  $region3: #{conformer_feature_extractor.12} parent=0 // pred_check_branch
    %13 = sbr.rel (0) target = $region5
  $region4: #{conformer_feature_extractor.12} parent=0 // pred_region
    _
  $region5: #{conformer_feature_extractor.12} parent=0 // pred_fallthru
    _
  // Predicated region
  $region6: #{conformer_feature_extractor.12} parent=0 // pred_check
    _
  $region7: #{conformer_feature_extractor.12} parent=0 // pred_check_branch
    %15 = sbr.rel (0) target = $region9
  $region8: #{conformer_feature_extractor.12} parent=0 // pred_region
    _
  $region9: #{conformer_feature_extractor.12} parent=0 // pred_fallthru
    _
  // Predicated region
  $region10: #{conformer_feature_extractor.12} parent=0 // pred_check
    _
  $region11: #{conformer_feature_extractor.12} parent=0 // pred_check_branch
    %17 = sbr.rel (0) target = $region13
  $region12: #{conformer_feature_extractor.12} parent=0 // pred_region
    _
  $region13: #{conformer_feature_extractor.12} parent=0 // pred_fallthru
    _
  // Predicated region
  $region14: #{conformer_feature_extractor.12} parent=0 // pred_check
    _
  $region15: #{conformer_feature_extractor.12} parent=0 // pred_check_branch
    %19 = sbr.rel (0) target = $region17
  $region16: #{conformer_feature_extractor.12} parent=0 // pred_region
    _
  $region17: #{conformer_feature_extractor.12} parent=0 // pred_fallthru
    _
  // Predicated region
  $region18: #{conformer_feature_extractor.12} parent=0 // pred_check
    _
  $region19: #{conformer_feature_extractor.12} parent=0 // pred_check_branch
    %21 = sbr.rel (0) target = $region21
  $region20: #{conformer_feature_extractor.12} parent=0 // pred_region
    _
  $region21: #{conformer_feature_extractor.12} parent=0 // pred_fallthru
    _
  // Predicated region
  $region22: #{conformer_feature_extractor.12} parent=0 // pred_check
    _
  $region23: #{conformer_feature_extractor.12} parent=0 // pred_check_branch
    %23 = sbr.rel (0) target = $region25
  $region24: #{conformer_feature_extractor.12} parent=0 // pred_region
    _
  $region25: #{conformer_feature_extractor.12} parent=0 // pred_fallthru
    _
  // Predicated region
  $region26: #{conformer_feature_extractor.12} parent=0 // pred_check
    _
  $region27: #{conformer_feature_extractor.12} parent=0 // pred_check_branch
    %25 = sbr.rel (0) target = $region29
  $region28: #{conformer_feature_extractor.12} parent=0 // pred_region
    _
  $region29: #{conformer_feature_extractor.12} parent=0 // pred_fallthru
    _
  %v27 = vld [vmem:[%s0] sm:$0xff]
  %v28 = vld [vmem:[%s0 + $0x8] sm:$0xff]
  %v29 = vld [vmem:[%s1] sm:$0x1]
  %v30 = vld [vmem:[%s2] sm:$0x1]
  %vm31 = vcmask 523264
  %v32 = vsel %vm31, %v27, 0.0
  %33 = vadd.xlane.f32.xlu0 %v32
  %v34 = vpop.xlane.xlu0 %33
  %v35 = vsel %vm31, %v28, 0.0
  %36 = vadd.xlane.f32.xlu0 %v35
  %v37 = vpop.xlane.xlu0 %36
  %v38 = vrcp.pop 64.0
  %v39 = vmul.f32 %v34, %v38
  %v40 = vmul.f32 %v37, %v38
  %v41 = vsub.f32 %v27, %v39
  %v42 = vsub.f32 %v28, %v40
  %v43 = vmul.f32 %v41, %v41
  %v44 = vmul.f32 %v42, %v42
  %v45 = vsel %vm31, %v43, 0.0
  %46 = vadd.xlane.f32.xlu0 %v45
  %v47 = vpop.xlane.xlu0 %46
  %v48 = vsel %vm31, %v44, 0.0
  %49 = vadd.xlane.f32.xlu0 %v48
  %v50 = vpop.xlane.xlu0 %49
  %v51 = vmul.f32 %v47, %v38
  %v52 = vmul.f32 %v50, %v38
  %v53 = vadd.f32 %v51, 1e-05
  %v54 = vadd.f32 %v52, 1e-05
  %v55 = vrsqrt.pop %v53
  %v56 = vrsqrt.pop %v54
  %v57 = vmul.f32 %v41, %v55
  %v58 = vmul.f32 %v42, %v56
  %v60 = vlaneseq
  %v61 = vshrl.u32 %v60, 7
  %v62 = vsub.s32 0, %v61
  %v63 = vrot.slane %v29, %v62
  %v65 = vmul.f32 %v57, %v63
  %v66 = vmul.f32 %v58, %v63
  %v68 = vlaneseq
  %v69 = vshrl.u32 %v68, 7
  %v70 = vsub.s32 0, %v69
  %v71 = vrot.slane %v30, %v70
  %v73 = vadd.f32 %v65, %v71
  %v74 = vadd.f32 %v66, %v71
  %v75 = vpack.c.bf16 %v74, %v73
  %v76 = vld [vmem:[%s3] sm:$0xff]
  %v77 = vld [vmem:[%s3 + $0x8] sm:$0xff]
  %v78 = vld [vmem:[%s3 + $0x10] sm:$0xff]
  %v79 = vld [vmem:[%s3 + $0x18] sm:$0xff]
  %v80 = vld [vmem:[%s3 + $0x20] sm:$0xff]
  %v81 = vld [vmem:[%s3 + $0x28] sm:$0xff]
  %v82 = vld [vmem:[%s3 + $0x30] sm:$0xff]
  %v83 = vld [vmem:[%s3 + $0x38] sm:$0xff]
  %v84 = vld [vmem:[%s4] sm:$0x3]
  %v86 = vlaneseq
  %v87 = vshrl.u32 %v86, 7
  %v88 = vsub.s32 0, %v87
  %v89 = vrot.slane %v84, %v88
  %v90 = vlaneseq
  %v91 = vshrl.u32 %v90, 7
  %v92 = vsub.s32 1, %v91
  %v93 = vrot.slane %v84, %v92
  %v104 = vunpack.c.l.b16 %v76
  %v105 = vunpack.c.h.b16 %v76
  %v106 = vunpack.c.l.b16 %v77
  %v107 = vunpack.c.h.b16 %v77
  %v108 = vunpack.c.l.b16 %v78
  %v109 = vunpack.c.h.b16 %v78
  %v110 = vunpack.c.l.b16 %v79
  %v111 = vunpack.c.h.b16 %v79
  %v112 = vunpack.c.l.b16 %v80
  %v113 = vunpack.c.h.b16 %v80
  %v114 = vunpack.c.l.b16 %v81
  %v115 = vunpack.c.h.b16 %v81
  %v116 = vunpack.c.l.b16 %v82
  %v117 = vunpack.c.h.b16 %v82
  %v118 = vunpack.c.l.b16 %v83
  %v119 = vunpack.c.h.b16 %v83
  %v120 = vpack.c.b16 %v106, %v104
  %v121 = vpack.c.b16 %v107, %v105
  %v122 = vpack.c.b16 %v110, %v108
  %v123 = vpack.c.b16 %v111, %v109
  %v124 = vpack.c.b16 %v114, %v112
  %v125 = vpack.c.b16 %v115, %v113
  %v126 = vpack.c.b16 %v118, %v116
  %v127 = vpack.c.b16 %v119, %v117
  %v137 = vsel %vm31, %v75, 0
  %139 = vmatprep.subr.bf16.mxu0 %v121
  %140 = vmatpush1.bf16.msra.mxu0 %v120
  %141 = vmatprep.subr.bf16.mxu0 %v123
  %142 = vmatpush1.bf16.msra.mxu0 %v122
  %143 = vmatprep.subr.bf16.mxu0 %v125
  %144 = vmatpush1.bf16.msra.mxu0 %v124
  %145 = vmatprep.subr.bf16.mxu0 %v127
  %146 = vmatpush1.bf16.msra.mxu0 %v126
  %147 = vmatprep.subr.bf16.mxu0 0
  %148 = vmatpush1.bf16.msra.mxu0 0
  %149 = vmatprep.subr.bf16.mxu0 0
  %150 = vmatpush1.bf16.msra.mxu0 0
  %151 = vmatprep.subr.bf16.mxu0 0
  %152 = vmatpush1.bf16.msra.mxu0 0
  %153 = vmatprep.subr.bf16.mxu0 0
  %154 = vmatpush1.bf16.msra.mxu0 0
  %155 = vmatprep.subr.bf16.mxu0 0
  %156 = vmatpush1.bf16.msra.mxu0 0
  %157 = vmatprep.subr.bf16.mxu0 0
  %158 = vmatpush1.bf16.msra.mxu0 0
  %159 = vmatprep.subr.bf16.mxu0 0
  %160 = vmatpush1.bf16.msra.mxu0 0
  %161 = vmatprep.subr.bf16.mxu0 0
  %162 = vmatpush1.bf16.msra.mxu0 0
  %163 = vmatprep.subr.bf16.mxu0 0
  %164 = vmatpush1.bf16.msra.mxu0 0
  %165 = vmatprep.subr.bf16.mxu0 0
  %166 = vmatpush1.bf16.msra.mxu0 0
  %167 = vmatprep.subr.bf16.mxu0 0
  %168 = vmatpush1.bf16.msra.mxu0 0
  %169 = vmatprep.subr.bf16.mxu0 0
  %170 = vmatpush1.bf16.msra.mxu0 0
  %171 = vmatprep.mubr.bf16.mxu0 0
  %172 = vmatmul.mubr.bf16.gmra.mrb[0].mxu0 %v137
  %v173 = vpop.f32.mrb[0].mxu0
  %v174 = vadd.f32 %v89, %v173
  %v175 = vpop.f32.mrb[0].mxu0
  %v176 = vadd.f32 %v93, %v175
  %v177 = vpop.f32.mrb[0].mxu0
  %v178 = vadd.f32 %v89, %v177
  %v179 = vpop.f32.mrb[0].mxu0
  %v180 = vadd.f32 %v93, %v179
  %181 = vdwg.mxu0
  %v182 = vpack.c.bf16 %v174, %v174
  %v183 = vpack.c.bf16 %v176, %v176
  %185 = vrot.lane.b32.xlu0 %v182, 64
  %v186 = vpop.permute.xlu0 %185
  %vm187 = vcmask 130048
  %v189 = vsel %vm187, %v182, 0
  %v192 = vsel %vm187, %v186, 0
  %194 = vmatprep.subr.bf16.mxu0 0
  %195 = vmatpush1.bf16.xpose.msra.mxu0 %v192
  %196 = vmatprep.subr.bf16.mxu0 0
  %197 = vmatpush1.bf16.xpose.msra.mxu0 0
  %198 = vmatprep.subr.bf16.mxu0 0
  %199 = vmatpush1.bf16.xpose.msra.mxu0 0
  %200 = vmatprep.subr.bf16.mxu0 0
  %201 = vmatpush1.bf16.xpose.msra.mxu0 0
  %202 = vmatprep.subr.bf16.mxu0 0
  %203 = vmatpush1.bf16.xpose.msra.mxu0 0
  %204 = vmatprep.subr.bf16.mxu0 0
  %205 = vmatpush1.bf16.xpose.msra.mxu0 0
  %206 = vmatprep.subr.bf16.mxu0 0
  %207 = vmatpush1.bf16.xpose.msra.mxu0 0
  %208 = vmatprep.subr.bf16.mxu0 0
  %209 = vmatpush1.bf16.xpose.msra.mxu0 0
  %210 = vmatprep.subr.bf16.mxu0 0
  %211 = vmatpush1.bf16.xpose.msra.mxu0 0
  %212 = vmatprep.subr.bf16.mxu0 0
  %213 = vmatpush1.bf16.xpose.msra.mxu0 0
  %214 = vmatprep.subr.bf16.mxu0 0
  %215 = vmatpush1.bf16.xpose.msra.mxu0 0
  %216 = vmatprep.subr.bf16.mxu0 0
  %217 = vmatpush1.bf16.xpose.msra.mxu0 0
  %218 = vmatprep.subr.bf16.mxu0 0
  %219 = vmatpush1.bf16.xpose.msra.mxu0 0
  %220 = vmatprep.subr.bf16.mxu0 0
  %221 = vmatpush1.bf16.xpose.msra.mxu0 0
  %222 = vmatprep.subr.bf16.mxu0 0
  %223 = vmatpush1.bf16.xpose.msra.mxu0 0
  %224 = vmatprep.subr.bf16.mxu0 0
  %225 = vmatpush1.bf16.xpose.msra.mxu0 0
  %226 = vmatprep.mubr.bf16.mxu0 0
  %227 = vmatmul.mubr.bf16.gmra.mrb[0].mxu0 %v189
  %v228 = vpop.f32.mrb[0].mxu0
  %v229 = vadd.f32 0.0, %v228
  %v230 = vpop.f32.mrb[0].mxu0
  %v231 = vpop.f32.mrb[0].mxu0
  %v232 = vpop.f32.mrb[0].mxu0
  %233 = vdwg.mxu0
  %v234 = vmul.f32 %v229, 0.25
  %vm235 = vcmask 64512
  %v236 = vsel %vm235, %v234, -inf
  %237 = vmax.xlane.f32.xlu0 %v236
  %v238 = vpop.xlane.xlu0 %237
  %v239 = vsub.f32 %v234, %v238
  %v240 = vmul.f32 %v239, 1.442695
  %v241 = vpow.pop %v240
  %v242 = vsel %vm235, %v241, 0.0
  %243 = vadd.xlane.f32.xlu0 %v242
  %v244 = vpop.xlane.xlu0 %243
  %v245 = vrcp.pop %v244
  %v246 = vmul.f32 %v241, %v245
  %v247 = vpack.c.bf16 %v246, %v246
  %v249 = vsel %vm235, %v247, 0
  %vm251 = vcmask 1043456
  %v253 = vsel %vm251, %v183, 0
  %255 = vmatprep.subr.bf16.mxu0 0
  %256 = vmatpush1.bf16.msra.mxu0 %v253
  %257 = vmatprep.subr.bf16.mxu0 0
  %258 = vmatpush1.bf16.msra.mxu0 0
  %259 = vmatprep.subr.bf16.mxu0 0
  %260 = vmatpush1.bf16.msra.mxu0 0
  %261 = vmatprep.subr.bf16.mxu0 0
  %262 = vmatpush1.bf16.msra.mxu0 0
  %263 = vmatprep.subr.bf16.mxu0 0
  %264 = vmatpush1.bf16.msra.mxu0 0
  %265 = vmatprep.subr.bf16.mxu0 0
  %266 = vmatpush1.bf16.msra.mxu0 0
  %267 = vmatprep.subr.bf16.mxu0 0
  %268 = vmatpush1.bf16.msra.mxu0 0
  %269 = vmatprep.subr.bf16.mxu0 0
  %270 = vmatpush1.bf16.msra.mxu0 0
  %271 = vmatprep.subr.bf16.mxu0 0
  %272 = vmatpush1.bf16.msra.mxu0 0
  %273 = vmatprep.subr.bf16.mxu0 0
  %274 = vmatpush1.bf16.msra.mxu0 0
  %275 = vmatprep.subr.bf16.mxu0 0
  %276 = vmatpush1.bf16.msra.mxu0 0
  %277 = vmatprep.subr.bf16.mxu0 0
  %278 = vmatpush1.bf16.msra.mxu0 0
  %279 = vmatprep.subr.bf16.mxu0 0
  %280 = vmatpush1.bf16.msra.mxu0 0
  %281 = vmatprep.subr.bf16.mxu0 0
  %282 = vmatpush1.bf16.msra.mxu0 0
  %283 = vmatprep.subr.bf16.mxu0 0
  %284 = vmatpush1.bf16.msra.mxu0 0
  %285 = vmatprep.subr.bf16.mxu0 0
  %286 = vmatpush1.bf16.msra.mxu0 0
  %287 = vmatprep.mubr.bf16.mxu0 0
  %288 = vmatmul.mubr.bf16.gmra.mrb[0].mxu0 %v249
  %v289 = vpop.f32.mrb[0].mxu0
  %v290 = vadd.f32 0.0, %v289
  %v291 = vpop.f32.mrb[0].mxu0
  %v292 = vpop.f32.mrb[0].mxu0
  %v293 = vpop.f32.mrb[0].mxu0
  %294 = vdwg.mxu0
  %v295 = vpack.c.bf16 %v290, %v290
  %v296 = vld [vmem:[%s5] sm:$0xf]
  %v297 = vld [vmem:[%s5 + $0x4] sm:$0xf]
  %298 = vrot.lane.b32.xlu0 %v182, 112
  %v299 = vpop.permute.xlu0 %298
  %300 = vrot.lane.b32.xlu0 %v182, 48
  %v301 = vpop.permute.xlu0 %300
  %v303 = vsel %vm187, %v299, 0
  %v306 = vsel %vm187, %v301, 0
  %308 = vmatprep.subr.bf16.mxu0 0
  %309 = vmatpush1.bf16.xpose.msra.mxu0 %v306
  %310 = vmatprep.subr.bf16.mxu0 0
  %311 = vmatpush1.bf16.xpose.msra.mxu0 0
  %312 = vmatprep.subr.bf16.mxu0 0
  %313 = vmatpush1.bf16.xpose.msra.mxu0 0
  %314 = vmatprep.subr.bf16.mxu0 0
  %315 = vmatpush1.bf16.xpose.msra.mxu0 0
  %316 = vmatprep.subr.bf16.mxu0 0
  %317 = vmatpush1.bf16.xpose.msra.mxu0 0
  %318 = vmatprep.subr.bf16.mxu0 0
  %319 = vmatpush1.bf16.xpose.msra.mxu0 0
  %320 = vmatprep.subr.bf16.mxu0 0
  %321 = vmatpush1.bf16.xpose.msra.mxu0 0
  %322 = vmatprep.subr.bf16.mxu0 0
  %323 = vmatpush1.bf16.xpose.msra.mxu0 0
  %324 = vmatprep.subr.bf16.mxu0 0
  %325 = vmatpush1.bf16.xpose.msra.mxu0 0
  %326 = vmatprep.subr.bf16.mxu0 0
  %327 = vmatpush1.bf16.xpose.msra.mxu0 0
  %328 = vmatprep.subr.bf16.mxu0 0
  %329 = vmatpush1.bf16.xpose.msra.mxu0 0
  %330 = vmatprep.subr.bf16.mxu0 0
  %331 = vmatpush1.bf16.xpose.msra.mxu0 0
  %332 = vmatprep.subr.bf16.mxu0 0
  %333 = vmatpush1.bf16.xpose.msra.mxu0 0
  %334 = vmatprep.subr.bf16.mxu0 0
  %335 = vmatpush1.bf16.xpose.msra.mxu0 0
  %336 = vmatprep.subr.bf16.mxu0 0
  %337 = vmatpush1.bf16.xpose.msra.mxu0 0
  %338 = vmatprep.subr.bf16.mxu0 0
  %339 = vmatpush1.bf16.xpose.msra.mxu0 0
  %340 = vmatprep.mubr.bf16.mxu0 0
  %341 = vmatmul.mubr.bf16.gmra.mrb[0].mxu0 %v303
  %v342 = vpop.f32.mrb[0].mxu0
  %v343 = vadd.f32 0.0, %v342
  %v344 = vpop.f32.mrb[0].mxu0
  %v345 = vpop.f32.mrb[0].mxu0
  %v346 = vpop.f32.mrb[0].mxu0
  %347 = vdwg.mxu0
  %v348 = vmul.f32 %v343, 0.25
  %v349 = vsel %vm235, %v348, -inf
  %350 = vmax.xlane.f32.xlu0 %v349
  %v351 = vpop.xlane.xlu0 %350
  %v352 = vsub.f32 %v348, %v351
  %v353 = vmul.f32 %v352, 1.442695
  %v354 = vpow.pop %v353
  %v355 = vsel %vm235, %v354, 0.0
  %356 = vadd.xlane.f32.xlu0 %v355
  %v357 = vpop.xlane.xlu0 %356
  %v358 = vrcp.pop %v357
  %v359 = vmul.f32 %v354, %v358
  %v360 = vpack.c.bf16 %v359, %v359
  %362 = vrot.lane.b32.xlu0 %v183, 112
  %v363 = vpop.permute.xlu0 %362
  %v365 = vsel %vm235, %v360, 0
  %v368 = vsel %vm251, %v363, 0
  %370 = vmatprep.subr.bf16.mxu0 0
  %371 = vmatpush1.bf16.msra.mxu0 %v368
  %372 = vmatprep.subr.bf16.mxu0 0
  %373 = vmatpush1.bf16.msra.mxu0 0
  %374 = vmatprep.subr.bf16.mxu0 0
  %375 = vmatpush1.bf16.msra.mxu0 0
  %376 = vmatprep.subr.bf16.mxu0 0
  %377 = vmatpush1.bf16.msra.mxu0 0
  %378 = vmatprep.subr.bf16.mxu0 0
  %379 = vmatpush1.bf16.msra.mxu0 0
  %380 = vmatprep.subr.bf16.mxu0 0
  %381 = vmatpush1.bf16.msra.mxu0 0
  %382 = vmatprep.subr.bf16.mxu0 0
  %383 = vmatpush1.bf16.msra.mxu0 0
  %384 = vmatprep.subr.bf16.mxu0 0
  %385 = vmatpush1.bf16.msra.mxu0 0
  %386 = vmatprep.subr.bf16.mxu0 0
  %387 = vmatpush1.bf16.msra.mxu0 0
  %388 = vmatprep.subr.bf16.mxu0 0
  %389 = vmatpush1.bf16.msra.mxu0 0
  %390 = vmatprep.subr.bf16.mxu0 0
  %391 = vmatpush1.bf16.msra.mxu0 0
  %392 = vmatprep.subr.bf16.mxu0 0
  %393 = vmatpush1.bf16.msra.mxu0 0
  %394 = vmatprep.subr.bf16.mxu0 0
  %395 = vmatpush1.bf16.msra.mxu0 0
  %396 = vmatprep.subr.bf16.mxu0 0
  %397 = vmatpush1.bf16.msra.mxu0 0
  %398 = vmatprep.subr.bf16.mxu0 0
  %399 = vmatpush1.bf16.msra.mxu0 0
  %400 = vmatprep.subr.bf16.mxu0 0
  %401 = vmatpush1.bf16.msra.mxu0 0
  %402 = vmatprep.mubr.bf16.mxu0 0
  %403 = vmatmul.mubr.bf16.gmra.mrb[0].mxu0 %v365
  %v404 = vpop.f32.mrb[0].mxu0
  %v405 = vadd.f32 0.0, %v404
  %v406 = vpop.f32.mrb[0].mxu0
  %v407 = vpop.f32.mrb[0].mxu0
  %v408 = vpop.f32.mrb[0].mxu0
  %409 = vdwg.mxu0
  %v410 = vpack.c.bf16 %v405, %v405
  %v411 = vld [vmem:[%s5 + $0x8] sm:$0xf]
  %v412 = vld [vmem:[%s5 + $0xc] sm:$0xf]
  %v415 = vunpack.c.l.b16 %v411
  %v416 = vunpack.c.l.b16 %v412
  %v417 = vpack.c.b16 %v416, %v415
  %v420 = vsel %vm187, %v410, 0
  %422 = vmatprep.subr.bf16.mxu0 0
  %423 = vmatpush1.bf16.msra.mxu0 %v417
  %424 = vmatprep.subr.bf16.mxu0 0
  %425 = vmatpush1.bf16.msra.mxu0 0
  %426 = vmatprep.subr.bf16.mxu0 0
  %427 = vmatpush1.bf16.msra.mxu0 0
  %428 = vmatprep.subr.bf16.mxu0 0
  %429 = vmatpush1.bf16.msra.mxu0 0
  %430 = vmatprep.subr.bf16.mxu0 0
  %431 = vmatpush1.bf16.msra.mxu0 0
  %432 = vmatprep.subr.bf16.mxu0 0
  %433 = vmatpush1.bf16.msra.mxu0 0
  %434 = vmatprep.subr.bf16.mxu0 0
  %435 = vmatpush1.bf16.msra.mxu0 0
  %436 = vmatprep.subr.bf16.mxu0 0
  %437 = vmatpush1.bf16.msra.mxu0 0
  %438 = vmatprep.subr.bf16.mxu0 0
  %439 = vmatpush1.bf16.msra.mxu0 0
  %440 = vmatprep.subr.bf16.mxu0 0
  %441 = vmatpush1.bf16.msra.mxu0 0
  %442 = vmatprep.subr.bf16.mxu0 0
  %443 = vmatpush1.bf16.msra.mxu0 0
  %444 = vmatprep.subr.bf16.mxu0 0
  %445 = vmatpush1.bf16.msra.mxu0 0
  %446 = vmatprep.subr.bf16.mxu0 0
  %447 = vmatpush1.bf16.msra.mxu0 0
  %448 = vmatprep.subr.bf16.mxu0 0
  %449 = vmatpush1.bf16.msra.mxu0 0
  %450 = vmatprep.subr.bf16.mxu0 0
  %451 = vmatpush1.bf16.msra.mxu0 0
  %452 = vmatprep.subr.bf16.mxu0 0
  %453 = vmatpush1.bf16.msra.mxu0 0
  %454 = vmatprep.mubr.bf16.mxu0 0
  %455 = vmatmul.mubr.bf16.gmra.mrb[0].mxu0 %v420
  %v456 = vpop.f32.mrb[0].mxu0
  %v457 = vadd.f32 0.0, %v456
  %v458 = vpop.f32.mrb[0].mxu0
  %v459 = vpop.f32.mrb[0].mxu0
  %v460 = vpop.f32.mrb[0].mxu0
  %461 = vdwg.mxu0
  %v464 = vunpack.c.l.b16 %v296
  %v465 = vunpack.c.l.b16 %v297
  %v466 = vpack.c.b16 %v465, %v464
  %v469 = vsel %vm187, %v295, 0
  %471 = vmatprep.subr.bf16.mxu0 0
  %472 = vmatpush1.bf16.msra.mxu0 %v466
  %473 = vmatprep.subr.bf16.mxu0 0
  %474 = vmatpush1.bf16.msra.mxu0 0
  %475 = vmatprep.subr.bf16.mxu0 0
  %476 = vmatpush1.bf16.msra.mxu0 0
  %477 = vmatprep.subr.bf16.mxu0 0
  %478 = vmatpush1.bf16.msra.mxu0 0
  %479 = vmatprep.subr.bf16.mxu0 0
  %480 = vmatpush1.bf16.msra.mxu0 0
  %481 = vmatprep.subr.bf16.mxu0 0
  %482 = vmatpush1.bf16.msra.mxu0 0
  %483 = vmatprep.subr.bf16.mxu0 0
  %484 = vmatpush1.bf16.msra.mxu0 0
  %485 = vmatprep.subr.bf16.mxu0 0
  %486 = vmatpush1.bf16.msra.mxu0 0
  %487 = vmatprep.subr.bf16.mxu0 0
  %488 = vmatpush1.bf16.msra.mxu0 0
  %489 = vmatprep.subr.bf16.mxu0 0
  %490 = vmatpush1.bf16.msra.mxu0 0
  %491 = vmatprep.subr.bf16.mxu0 0
  %492 = vmatpush1.bf16.msra.mxu0 0
  %493 = vmatprep.subr.bf16.mxu0 0
  %494 = vmatpush1.bf16.msra.mxu0 0
  %495 = vmatprep.subr.bf16.mxu0 0
  %496 = vmatpush1.bf16.msra.mxu0 0
  %497 = vmatprep.subr.bf16.mxu0 0
  %498 = vmatpush1.bf16.msra.mxu0 0
  %499 = vmatprep.subr.bf16.mxu0 0
  %500 = vmatpush1.bf16.msra.mxu0 0
  %501 = vmatprep.subr.bf16.mxu0 0
  %502 = vmatpush1.bf16.msra.mxu0 0
  %503 = vmatprep.mubr.bf16.mxu0 0
  %504 = vmatmul.mubr.bf16.gmra.mrb[0].mxu0 %v469
  %v505 = vpop.f32.mrb[0].mxu0
  %v506 = vadd.f32 %v457, %v505
  %v507 = vpop.f32.mrb[0].mxu0
  %v508 = vpop.f32.mrb[0].mxu0
  %v509 = vpop.f32.mrb[0].mxu0
  %510 = vdwg.mxu0
  %511 = vrot.lane.b32.xlu0 %v182, 96
  %v512 = vpop.permute.xlu0 %511
  %513 = vrot.lane.b32.xlu0 %v182, 32
  %v514 = vpop.permute.xlu0 %513
  %v516 = vsel %vm187, %v512, 0
  %v519 = vsel %vm187, %v514, 0
  %521 = vmatprep.subr.bf16.mxu0 0
  %522 = vmatpush1.bf16.xpose.msra.mxu0 %v519
  %523 = vmatprep.subr.bf16.mxu0 0
  %524 = vmatpush1.bf16.xpose.msra.mxu0 0
  %525 = vmatprep.subr.bf16.mxu0 0
  %526 = vmatpush1.bf16.xpose.msra.mxu0 0
  %527 = vmatprep.subr.bf16.mxu0 0
  %528 = vmatpush1.bf16.xpose.msra.mxu0 0
  %529 = vmatprep.subr.bf16.mxu0 0
  %530 = vmatpush1.bf16.xpose.msra.mxu0 0
  %531 = vmatprep.subr.bf16.mxu0 0
  %532 = vmatpush1.bf16.xpose.msra.mxu0 0
  %533 = vmatprep.subr.bf16.mxu0 0
  %534 = vmatpush1.bf16.xpose.msra.mxu0 0
  %535 = vmatprep.subr.bf16.mxu0 0
  %536 = vmatpush1.bf16.xpose.msra.mxu0 0
  %537 = vmatprep.subr.bf16.mxu0 0
  %538 = vmatpush1.bf16.xpose.msra.mxu0 0
  %539 = vmatprep.subr.bf16.mxu0 0
  %540 = vmatpush1.bf16.xpose.msra.mxu0 0
  %541 = vmatprep.subr.bf16.mxu0 0
  %542 = vmatpush1.bf16.xpose.msra.mxu0 0
  %543 = vmatprep.subr.bf16.mxu0 0
  %544 = vmatpush1.bf16.xpose.msra.mxu0 0
  %545 = vmatprep.subr.bf16.mxu0 0
  %546 = vmatpush1.bf16.xpose.msra.mxu0 0
  %547 = vmatprep.subr.bf16.mxu0 0
  %548 = vmatpush1.bf16.xpose.msra.mxu0 0
  %549 = vmatprep.subr.bf16.mxu0 0
  %550 = vmatpush1.bf16.xpose.msra.mxu0 0
  %551 = vmatprep.subr.bf16.mxu0 0
  %552 = vmatpush1.bf16.xpose.msra.mxu0 0
  %553 = vmatprep.mubr.bf16.mxu0 0
  %554 = vmatmul.mubr.bf16.gmra.mrb[0].mxu0 %v516
  %v555 = vpop.f32.mrb[0].mxu0
  %v556 = vadd.f32 0.0, %v555
  %v557 = vpop.f32.mrb[0].mxu0
  %v558 = vpop.f32.mrb[0].mxu0
  %v559 = vpop.f32.mrb[0].mxu0
  %560 = vdwg.mxu0
  %v561 = vmul.f32 %v556, 0.25
  %v562 = vsel %vm235, %v561, -inf
  %563 = vmax.xlane.f32.xlu0 %v562
  %v564 = vpop.xlane.xlu0 %563
  %v565 = vsub.f32 %v561, %v564
  %v566 = vmul.f32 %v565, 1.442695
  %v567 = vpow.pop %v566
  %v568 = vsel %vm235, %v567, 0.0
  %569 = vadd.xlane.f32.xlu0 %v568
  %v570 = vpop.xlane.xlu0 %569
  %v571 = vrcp.pop %v570
  %v572 = vmul.f32 %v567, %v571
  %v573 = vpack.c.bf16 %v572, %v572
  %574 = vrot.lane.b32.xlu0 %v183, 96
  %v575 = vpop.permute.xlu0 %574
  %v577 = vsel %vm235, %v573, 0
  %v580 = vsel %vm251, %v575, 0
  %582 = vmatprep.subr.bf16.mxu0 0
  %583 = vmatpush1.bf16.msra.mxu0 %v580
  %584 = vmatprep.subr.bf16.mxu0 0
  %585 = vmatpush1.bf16.msra.mxu0 0
  %586 = vmatprep.subr.bf16.mxu0 0
  %587 = vmatpush1.bf16.msra.mxu0 0
  %588 = vmatprep.subr.bf16.mxu0 0
  %589 = vmatpush1.bf16.msra.mxu0 0
  %590 = vmatprep.subr.bf16.mxu0 0
  %591 = vmatpush1.bf16.msra.mxu0 0
  %592 = vmatprep.subr.bf16.mxu0 0
  %593 = vmatpush1.bf16.msra.mxu0 0
  %594 = vmatprep.subr.bf16.mxu0 0
  %595 = vmatpush1.bf16.msra.mxu0 0
  %596 = vmatprep.subr.bf16.mxu0 0
  %597 = vmatpush1.bf16.msra.mxu0 0
  %598 = vmatprep.subr.bf16.mxu0 0
  %599 = vmatpush1.bf16.msra.mxu0 0
  %600 = vmatprep.subr.bf16.mxu0 0
  %601 = vmatpush1.bf16.msra.mxu0 0
  %602 = vmatprep.subr.bf16.mxu0 0
  %603 = vmatpush1.bf16.msra.mxu0 0
  %604 = vmatprep.subr.bf16.mxu0 0
  %605 = vmatpush1.bf16.msra.mxu0 0
  %606 = vmatprep.subr.bf16.mxu0 0
  %607 = vmatpush1.bf16.msra.mxu0 0
  %608 = vmatprep.subr.bf16.mxu0 0
  %609 = vmatpush1.bf16.msra.mxu0 0
  %610 = vmatprep.subr.bf16.mxu0 0
  %611 = vmatpush1.bf16.msra.mxu0 0
  %612 = vmatprep.subr.bf16.mxu0 0
  %613 = vmatpush1.bf16.msra.mxu0 0
  %614 = vmatprep.mubr.bf16.mxu0 0
  %615 = vmatmul.mubr.bf16.gmra.mrb[0].mxu0 %v577
  %v616 = vpop.f32.mrb[0].mxu0
  %v617 = vadd.f32 0.0, %v616
  %v618 = vpop.f32.mrb[0].mxu0
  %v619 = vpop.f32.mrb[0].mxu0
  %v620 = vpop.f32.mrb[0].mxu0
  %621 = vdwg.mxu0
  %v622 = vpack.c.bf16 %v617, %v617
  %v623 = vld [vmem:[%s5 + $0x10] sm:$0xf]
  %v624 = vld [vmem:[%s5 + $0x14] sm:$0xf]
  %v627 = vunpack.c.l.b16 %v623
  %v628 = vunpack.c.l.b16 %v624
  %v629 = vpack.c.b16 %v628, %v627
  %v632 = vsel %vm187, %v622, 0
  %634 = vmatprep.subr.bf16.mxu0 0
  %635 = vmatpush1.bf16.msra.mxu0 %v629
  %636 = vmatprep.subr.bf16.mxu0 0
  %637 = vmatpush1.bf16.msra.mxu0 0
  %638 = vmatprep.subr.bf16.mxu0 0
  %639 = vmatpush1.bf16.msra.mxu0 0
  %640 = vmatprep.subr.bf16.mxu0 0
  %641 = vmatpush1.bf16.msra.mxu0 0
  %642 = vmatprep.subr.bf16.mxu0 0
  %643 = vmatpush1.bf16.msra.mxu0 0
  %644 = vmatprep.subr.bf16.mxu0 0
  %645 = vmatpush1.bf16.msra.mxu0 0
  %646 = vmatprep.subr.bf16.mxu0 0
  %647 = vmatpush1.bf16.msra.mxu0 0
  %648 = vmatprep.subr.bf16.mxu0 0
  %649 = vmatpush1.bf16.msra.mxu0 0
  %650 = vmatprep.subr.bf16.mxu0 0
  %651 = vmatpush1.bf16.msra.mxu0 0
  %652 = vmatprep.subr.bf16.mxu0 0
  %653 = vmatpush1.bf16.msra.mxu0 0
  %654 = vmatprep.subr.bf16.mxu0 0
  %655 = vmatpush1.bf16.msra.mxu0 0
  %656 = vmatprep.subr.bf16.mxu0 0
  %657 = vmatpush1.bf16.msra.mxu0 0
  %658 = vmatprep.subr.bf16.mxu0 0
  %659 = vmatpush1.bf16.msra.mxu0 0
  %660 = vmatprep.subr.bf16.mxu0 0
  %661 = vmatpush1.bf16.msra.mxu0 0
  %662 = vmatprep.subr.bf16.mxu0 0
  %663 = vmatpush1.bf16.msra.mxu0 0
  %664 = vmatprep.subr.bf16.mxu0 0
  %665 = vmatpush1.bf16.msra.mxu0 0
  %666 = vmatprep.mubr.bf16.mxu0 0
  %667 = vmatmul.mubr.bf16.gmra.mrb[0].mxu0 %v632
  %v668 = vpop.f32.mrb[0].mxu0
  %v669 = vadd.f32 0.0, %v668
  %v670 = vpop.f32.mrb[0].mxu0
  %v671 = vpop.f32.mrb[0].mxu0
  %v672 = vpop.f32.mrb[0].mxu0
  %673 = vdwg.mxu0
  %v674 = vadd.f32 %v506, %v669
  %675 = vrot.lane.b32.xlu0 %v182, 80
  %v676 = vpop.permute.xlu0 %675
  %677 = vrot.lane.b32.xlu0 %v182, 16
  %v678 = vpop.permute.xlu0 %677
  %v680 = vsel %vm187, %v676, 0
  %v683 = vsel %vm187, %v678, 0
  %685 = vmatprep.subr.bf16.mxu0 0
  %686 = vmatpush1.bf16.xpose.msra.mxu0 %v683
  %687 = vmatprep.subr.bf16.mxu0 0
  %688 = vmatpush1.bf16.xpose.msra.mxu0 0
  %689 = vmatprep.subr.bf16.mxu0 0
  %690 = vmatpush1.bf16.xpose.msra.mxu0 0
  %691 = vmatprep.subr.bf16.mxu0 0
  %692 = vmatpush1.bf16.xpose.msra.mxu0 0
  %693 = vmatprep.subr.bf16.mxu0 0
  %694 = vmatpush1.bf16.xpose.msra.mxu0 0
  %695 = vmatprep.subr.bf16.mxu0 0
  %696 = vmatpush1.bf16.xpose.msra.mxu0 0
  %697 = vmatprep.subr.bf16.mxu0 0
  %698 = vmatpush1.bf16.xpose.msra.mxu0 0
  %699 = vmatprep.subr.bf16.mxu0 0
  %700 = vmatpush1.bf16.xpose.msra.mxu0 0
  %701 = vmatprep.subr.bf16.mxu0 0
  %702 = vmatpush1.bf16.xpose.msra.mxu0 0
  %703 = vmatprep.subr.bf16.mxu0 0
  %704 = vmatpush1.bf16.xpose.msra.mxu0 0
  %705 = vmatprep.subr.bf16.mxu0 0
  %706 = vmatpush1.bf16.xpose.msra.mxu0 0
  %707 = vmatprep.subr.bf16.mxu0 0
  %708 = vmatpush1.bf16.xpose.msra.mxu0 0
  %709 = vmatprep.subr.bf16.mxu0 0
  %710 = vmatpush1.bf16.xpose.msra.mxu0 0
  %711 = vmatprep.subr.bf16.mxu0 0
  %712 = vmatpush1.bf16.xpose.msra.mxu0 0
  %713 = vmatprep.subr.bf16.mxu0 0
  %714 = vmatpush1.bf16.xpose.msra.mxu0 0
  %715 = vmatprep.subr.bf16.mxu0 0
  %716 = vmatpush1.bf16.xpose.msra.mxu0 0
  %717 = vmatprep.mubr.bf16.mxu0 0
  %718 = vmatmul.mubr.bf16.gmra.mrb[0].mxu0 %v680
  %v719 = vpop.f32.mrb[0].mxu0
  %v720 = vadd.f32 0.0, %v719
  %v721 = vpop.f32.mrb[0].mxu0
  %v722 = vpop.f32.mrb[0].mxu0
  %v723 = vpop.f32.mrb[0].mxu0
  %724 = vdwg.mxu0
  %v725 = vmul.f32 %v720, 0.25
  %v726 = vsel %vm235, %v725, -inf
  %727 = vmax.xlane.f32.xlu0 %v726
  %v728 = vpop.xlane.xlu0 %727
  %v729 = vsub.f32 %v725, %v728
  %v730 = vmul.f32 %v729, 1.442695
  %v731 = vpow.pop %v730
  %v732 = vsel %vm235, %v731, 0.0
  %733 = vadd.xlane.f32.xlu0 %v732
  %v734 = vpop.xlane.xlu0 %733
  %v735 = vrcp.pop %v734
  %v736 = vmul.f32 %v731, %v735
  %v737 = vpack.c.bf16 %v736, %v736
  %738 = vrot.lane.b32.xlu0 %v183, 80
  %v739 = vpop.permute.xlu0 %738
  %v741 = vsel %vm235, %v737, 0
  %v744 = vsel %vm251, %v739, 0
  %746 = vmatprep.subr.bf16.mxu0 0
  %747 = vmatpush1.bf16.msra.mxu0 %v744
  %748 = vmatprep.subr.bf16.mxu0 0
  %749 = vmatpush1.bf16.msra.mxu0 0
  %750 = vmatprep.subr.bf16.mxu0 0
  %751 = vmatpush1.bf16.msra.mxu0 0
  %752 = vmatprep.subr.bf16.mxu0 0
  %753 = vmatpush1.bf16.msra.mxu0 0
  %754 = vmatprep.subr.bf16.mxu0 0
  %755 = vmatpush1.bf16.msra.mxu0 0
  %756 = vmatprep.subr.bf16.mxu0 0
  %757 = vmatpush1.bf16.msra.mxu0 0
  %758 = vmatprep.subr.bf16.mxu0 0
  %759 = vmatpush1.bf16.msra.mxu0 0
  %760 = vmatprep.subr.bf16.mxu0 0
  %761 = vmatpush1.bf16.msra.mxu0 0
  %762 = vmatprep.subr.bf16.mxu0 0
  %763 = vmatpush1.bf16.msra.mxu0 0
  %764 = vmatprep.subr.bf16.mxu0 0
  %765 = vmatpush1.bf16.msra.mxu0 0
  %766 = vmatprep.subr.bf16.mxu0 0
  %767 = vmatpush1.bf16.msra.mxu0 0
  %768 = vmatprep.subr.bf16.mxu0 0
  %769 = vmatpush1.bf16.msra.mxu0 0
  %770 = vmatprep.subr.bf16.mxu0 0
  %771 = vmatpush1.bf16.msra.mxu0 0
  %772 = vmatprep.subr.bf16.mxu0 0
  %773 = vmatpush1.bf16.msra.mxu0 0
  %774 = vmatprep.subr.bf16.mxu0 0
  %775 = vmatpush1.bf16.msra.mxu0 0
  %776 = vmatprep.subr.bf16.mxu0 0
  %777 = vmatpush1.bf16.msra.mxu0 0
  %778 = vmatprep.mubr.bf16.mxu0 0
  %779 = vmatmul.mubr.bf16.gmra.mrb[0].mxu0 %v741
  %v780 = vpop.f32.mrb[0].mxu0
  %v781 = vadd.f32 0.0, %v780
  %v782 = vpop.f32.mrb[0].mxu0
  %v783 = vpop.f32.mrb[0].mxu0
  %v784 = vpop.f32.mrb[0].mxu0
  %785 = vdwg.mxu0
  %v786 = vpack.c.bf16 %v781, %v781
  %v787 = vld [vmem:[%s5 + $0x18] sm:$0xf]
  %v788 = vld [vmem:[%s5 + $0x1c] sm:$0xf]
  %v791 = vunpack.c.l.b16 %v787
  %v792 = vunpack.c.l.b16 %v788
  %v793 = vpack.c.b16 %v792, %v791
  %v796 = vsel %vm187, %v786, 0
  %798 = vmatprep.subr.bf16.mxu0 0
  %799 = vmatpush1.bf16.msra.mxu0 %v793
  %800 = vmatprep.subr.bf16.mxu0 0
  %801 = vmatpush1.bf16.msra.mxu0 0
  %802 = vmatprep.subr.bf16.mxu0 0
  %803 = vmatpush1.bf16.msra.mxu0 0
  %804 = vmatprep.subr.bf16.mxu0 0
  %805 = vmatpush1.bf16.msra.mxu0 0
  %806 = vmatprep.subr.bf16.mxu0 0
  %807 = vmatpush1.bf16.msra.mxu0 0
  %808 = vmatprep.subr.bf16.mxu0 0
  %809 = vmatpush1.bf16.msra.mxu0 0
  %810 = vmatprep.subr.bf16.mxu0 0
  %811 = vmatpush1.bf16.msra.mxu0 0
  %812 = vmatprep.subr.bf16.mxu0 0
  %813 = vmatpush1.bf16.msra.mxu0 0
  %814 = vmatprep.subr.bf16.mxu0 0
  %815 = vmatpush1.bf16.msra.mxu0 0
  %816 = vmatprep.subr.bf16.mxu0 0
  %817 = vmatpush1.bf16.msra.mxu0 0
  %818 = vmatprep.subr.bf16.mxu0 0
  %819 = vmatpush1.bf16.msra.mxu0 0
  %820 = vmatprep.subr.bf16.mxu0 0
  %821 = vmatpush1.bf16.msra.mxu0 0
  %822 = vmatprep.subr.bf16.mxu0 0
  %823 = vmatpush1.bf16.msra.mxu0 0
  %824 = vmatprep.subr.bf16.mxu0 0
  %825 = vmatpush1.bf16.msra.mxu0 0
  %826 = vmatprep.subr.bf16.mxu0 0
  %827 = vmatpush1.bf16.msra.mxu0 0
  %828 = vmatprep.subr.bf16.mxu0 0
  %829 = vmatpush1.bf16.msra.mxu0 0
  %830 = vmatprep.mubr.bf16.mxu0 0
  %831 = vmatmul.mubr.bf16.gmra.mrb[0].mxu0 %v796
  %v832 = vpop.f32.mrb[0].mxu0
  %v833 = vadd.f32 0.0, %v832
  %v834 = vpop.f32.mrb[0].mxu0
  %v835 = vpop.f32.mrb[0].mxu0
  %v836 = vpop.f32.mrb[0].mxu0
  %837 = vdwg.mxu0
  %v838 = vadd.f32 %v674, %v833
  %v839 = vadd.f32 %v27, %v838
  %v840 = vld [vmem:[%s6] sm:$0x1]
  %v842 = vlaneseq
  %v843 = vshrl.u32 %v842, 7
  %v844 = vsub.s32 0, %v843
  %v845 = vrot.slane %v840, %v844
  %v847 = vadd.f32 %v839, %v845
  %848 = vst.msk [vmem:[%s7] sm:$0xff] %vm31, %v847
  %v849 = vpack.c.bf16 %v178, %v178
  %v850 = vpack.c.bf16 %v180, %v180
  %852 = vrot.lane.b32.xlu0 %v849, 64
  %v853 = vpop.permute.xlu0 %852
  %v855 = vsel %vm187, %v849, 0
  %v858 = vsel %vm187, %v853, 0
  %860 = vmatprep.subr.bf16.mxu0 0
  %861 = vmatpush1.bf16.xpose.msra.mxu0 %v858
  %862 = vmatprep.subr.bf16.mxu0 0
  %863 = vmatpush1.bf16.xpose.msra.mxu0 0
  %864 = vmatprep.subr.bf16.mxu0 0
  %865 = vmatpush1.bf16.xpose.msra.mxu0 0
  %866 = vmatprep.subr.bf16.mxu0 0
  %867 = vmatpush1.bf16.xpose.msra.mxu0 0
  %868 = vmatprep.subr.bf16.mxu0 0
  %869 = vmatpush1.bf16.xpose.msra.mxu0 0
  %870 = vmatprep.subr.bf16.mxu0 0
  %871 = vmatpush1.bf16.xpose.msra.mxu0 0
  %872 = vmatprep.subr.bf16.mxu0 0
  %873 = vmatpush1.bf16.xpose.msra.mxu0 0
  %874 = vmatprep.subr.bf16.mxu0 0
  %875 = vmatpush1.bf16.xpose.msra.mxu0 0
  %876 = vmatprep.subr.bf16.mxu0 0
  %877 = vmatpush1.bf16.xpose.msra.mxu0 0
  %878 = vmatprep.subr.bf16.mxu0 0
  %879 = vmatpush1.bf16.xpose.msra.mxu0 0
  %880 = vmatprep.subr.bf16.mxu0 0
  %881 = vmatpush1.bf16.xpose.msra.mxu0 0
  %882 = vmatprep.subr.bf16.mxu0 0
  %883 = vmatpush1.bf16.xpose.msra.mxu0 0
  %884 = vmatprep.subr.bf16.mxu0 0
  %885 = vmatpush1.bf16.xpose.msra.mxu0 0
  %886 = vmatprep.subr.bf16.mxu0 0
  %887 = vmatpush1.bf16.xpose.msra.mxu0 0
  %888 = vmatprep.subr.bf16.mxu0 0
  %889 = vmatpush1.bf16.xpose.msra.mxu0 0
  %890 = vmatprep.subr.bf16.mxu0 0
  %891 = vmatpush1.bf16.xpose.msra.mxu0 0
  %892 = vmatprep.mubr.bf16.mxu0 0
  %893 = vmatmul.mubr.bf16.gmra.mrb[0].mxu0 %v855
  %v894 = vpop.f32.mrb[0].mxu0
  %v895 = vadd.f32 0.0, %v894
  %v896 = vpop.f32.mrb[0].mxu0
  %v897 = vpop.f32.mrb[0].mxu0
  %v898 = vpop.f32.mrb[0].mxu0
  %899 = vdwg.mxu0
  %v900 = vmul.f32 %v895, 0.25
  %v901 = vsel %vm235, %v900, -inf
  %902 = vmax.xlane.f32.xlu0 %v901
  %v903 = vpop.xlane.xlu0 %902
  %v904 = vsub.f32 %v900, %v903
  %v905 = vmul.f32 %v904, 1.442695
  %v906 = vpow.pop %v905
  %v907 = vsel %vm235, %v906, 0.0
  %908 = vadd.xlane.f32.xlu0 %v907
  %v909 = vpop.xlane.xlu0 %908
  %v910 = vrcp.pop %v909
  %v911 = vmul.f32 %v906, %v910
  %v912 = vpack.c.bf16 %v911, %v911
  %v914 = vsel %vm235, %v912, 0
  %v917 = vsel %vm251, %v850, 0
  %919 = vmatprep.subr.bf16.mxu0 0
  %920 = vmatpush1.bf16.msra.mxu0 %v917
  %921 = vmatprep.subr.bf16.mxu0 0
  %922 = vmatpush1.bf16.msra.mxu0 0
  %923 = vmatprep.subr.bf16.mxu0 0
  %924 = vmatpush1.bf16.msra.mxu0 0
  %925 = vmatprep.subr.bf16.mxu0 0
  %926 = vmatpush1.bf16.msra.mxu0 0
  %927 = vmatprep.subr.bf16.mxu0 0
  %928 = vmatpush1.bf16.msra.mxu0 0
  %929 = vmatprep.subr.bf16.mxu0 0
  %930 = vmatpush1.bf16.msra.mxu0 0
  %931 = vmatprep.subr.bf16.mxu0 0
  %932 = vmatpush1.bf16.msra.mxu0 0
  %933 = vmatprep.subr.bf16.mxu0 0
  %934 = vmatpush1.bf16.msra.mxu0 0
  %935 = vmatprep.subr.bf16.mxu0 0
  %936 = vmatpush1.bf16.msra.mxu0 0
  %937 = vmatprep.subr.bf16.mxu0 0
  %938 = vmatpush1.bf16.msra.mxu0 0
  %939 = vmatprep.subr.bf16.mxu0 0
  %940 = vmatpush1.bf16.msra.mxu0 0
  %941 = vmatprep.subr.bf16.mxu0 0
  %942 = vmatpush1.bf16.msra.mxu0 0
  %943 = vmatprep.subr.bf16.mxu0 0
  %944 = vmatpush1.bf16.msra.mxu0 0
  %945 = vmatprep.subr.bf16.mxu0 0
  %946 = vmatpush1.bf16.msra.mxu0 0
  %947 = vmatprep.subr.bf16.mxu0 0
  %948 = vmatpush1.bf16.msra.mxu0 0
  %949 = vmatprep.subr.bf16.mxu0 0
  %950 = vmatpush1.bf16.msra.mxu0 0
  %951 = vmatprep.mubr.bf16.mxu0 0
  %952 = vmatmul.mubr.bf16.gmra.mrb[0].mxu0 %v914
  %v953 = vpop.f32.mrb[0].mxu0
  %v954 = vadd.f32 0.0, %v953
  %v955 = vpop.f32.mrb[0].mxu0
  %v956 = vpop.f32.mrb[0].mxu0
  %v957 = vpop.f32.mrb[0].mxu0
  %958 = vdwg.mxu0
  %v959 = vpack.c.bf16 %v954, %v954
  %v960 = vld [vmem:[%s5] sm:$0xf]
  %v961 = vld [vmem:[%s5 + $0x4] sm:$0xf]
  %962 = vrot.lane.b32.xlu0 %v849, 112
  %v963 = vpop.permute.xlu0 %962
  %964 = vrot.lane.b32.xlu0 %v849, 48
  %v965 = vpop.permute.xlu0 %964
  %v967 = vsel %vm187, %v963, 0
  %v970 = vsel %vm187, %v965, 0
  %972 = vmatprep.subr.bf16.mxu0 0
  %973 = vmatpush1.bf16.xpose.msra.mxu0 %v970
  %974 = vmatprep.subr.bf16.mxu0 0
  %975 = vmatpush1.bf16.xpose.msra.mxu0 0
  %976 = vmatprep.subr.bf16.mxu0 0
  %977 = vmatpush1.bf16.xpose.msra.mxu0 0
  %978 = vmatprep.subr.bf16.mxu0 0
  %979 = vmatpush1.bf16.xpose.msra.mxu0 0
  %980 = vmatprep.subr.bf16.mxu0 0
  %981 = vmatpush1.bf16.xpose.msra.mxu0 0
  %982 = vmatprep.subr.bf16.mxu0 0
  %983 = vmatpush1.bf16.xpose.msra.mxu0 0
  %984 = vmatprep.subr.bf16.mxu0 0
  %985 = vmatpush1.bf16.xpose.msra.mxu0 0
  %986 = vmatprep.subr.bf16.mxu0 0
  %987 = vmatpush1.bf16.xpose.msra.mxu0 0
  %988 = vmatprep.subr.bf16.mxu0 0
  %989 = vmatpush1.bf16.xpose.msra.mxu0 0
  %990 = vmatprep.subr.bf16.mxu0 0
  %991 = vmatpush1.bf16.xpose.msra.mxu0 0
  %992 = vmatprep.subr.bf16.mxu0 0
  %993 = vmatpush1.bf16.xpose.msra.mxu0 0
  %994 = vmatprep.subr.bf16.mxu0 0
  %995 = vmatpush1.bf16.xpose.msra.mxu0 0
  %996 = vmatprep.subr.bf16.mxu0 0
  %997 = vmatpush1.bf16.xpose.msra.mxu0 0
  %998 = vmatprep.subr.bf16.mxu0 0
  %999 = vmatpush1.bf16.xpose.msra.mxu0 0
  %1000 = vmatprep.subr.bf16.mxu0 0
  %1001 = vmatpush1.bf16.xpose.msra.mxu0 0
  %1002 = vmatprep.subr.bf16.mxu0 0
  %1003 = vmatpush1.bf16.xpose.msra.mxu0 0
  %1004 = vmatprep.mubr.bf16.mxu0 0
  %1005 = vmatmul.mubr.bf16.gmra.mrb[0].mxu0 %v967
  %v1006 = vpop.f32.mrb[0].mxu0
  %v1007 = vadd.f32 0.0, %v1006
  %v1008 = vpop.f32.mrb[0].mxu0
  %v1009 = vpop.f32.mrb[0].mxu0
  %v1010 = vpop.f32.mrb[0].mxu0
  %1011 = vdwg.mxu0
  %v1012 = vmul.f32 %v1007, 0.25
  %v1013 = vsel %vm235, %v1012, -inf
  %1014 = vmax.xlane.f32.xlu0 %v1013
  %v1015 = vpop.xlane.xlu0 %1014
  %v1016 = vsub.f32 %v1012, %v1015
  %v1017 = vmul.f32 %v1016, 1.442695
  %v1018 = vpow.pop %v1017
  %v1019 = vsel %vm235, %v1018, 0.0
  %1020 = vadd.xlane.f32.xlu0 %v1019
  %v1021 = vpop.xlane.xlu0 %1020
  %v1022 = vrcp.pop %v1021
  %v1023 = vmul.f32 %v1018, %v1022
  %v1024 = vpack.c.bf16 %v1023, %v1023
  %1026 = vrot.lane.b32.xlu0 %v850, 112
  %v1027 = vpop.permute.xlu0 %1026
  %v1029 = vsel %vm235, %v1024, 0
  %v1032 = vsel %vm251, %v1027, 0
  %1034 = vmatprep.subr.bf16.mxu0 0
  %1035 = vmatpush1.bf16.msra.mxu0 %v1032
  %1036 = vmatprep.subr.bf16.mxu0 0
  %1037 = vmatpush1.bf16.msra.mxu0 0
  %1038 = vmatprep.subr.bf16.mxu0 0
  %1039 = vmatpush1.bf16.msra.mxu0 0
  %1040 = vmatprep.subr.bf16.mxu0 0
  %1041 = vmatpush1.bf16.msra.mxu0 0
  %1042 = vmatprep.subr.bf16.mxu0 0
  %1043 = vmatpush1.bf16.msra.mxu0 0
  %1044 = vmatprep.subr.bf16.mxu0 0
  %1045 = vmatpush1.bf16.msra.mxu0 0
  %1046 = vmatprep.subr.bf16.mxu0 0
  %1047 = vmatpush1.bf16.msra.mxu0 0
  %1048 = vmatprep.subr.bf16.mxu0 0
  %1049 = vmatpush1.bf16.msra.mxu0 0
  %1050 = vmatprep.subr.bf16.mxu0 0
  %1051 = vmatpush1.bf16.msra.mxu0 0
  %1052 = vmatprep.subr.bf16.mxu0 0
  %1053 = vmatpush1.bf16.msra.mxu0 0
  %1054 = vmatprep.subr.bf16.mxu0 0
  %1055 = vmatpush1.bf16.msra.mxu0 0
  %1056 = vmatprep.subr.bf16.mxu0 0
  %1057 = vmatpush1.bf16.msra.mxu0 0
  %1058 = vmatprep.subr.bf16.mxu0 0
  %1059 = vmatpush1.bf16.msra.mxu0 0
  %1060 = vmatprep.subr.bf16.mxu0 0
  %1061 = vmatpush1.bf16.msra.mxu0 0
  %1062 = vmatprep.subr.bf16.mxu0 0
  %1063 = vmatpush1.bf16.msra.mxu0 0
  %1064 = vmatprep.subr.bf16.mxu0 0
  %1065 = vmatpush1.bf16.msra.mxu0 0
  %1066 = vmatprep.mubr.bf16.mxu0 0
  %1067 = vmatmul.mubr.bf16.gmra.mrb[0].mxu0 %v1029
  %v1068 = vpop.f32.mrb[0].mxu0
  %v1069 = vadd.f32 0.0, %v1068
  %v1070 = vpop.f32.mrb[0].mxu0
  %v1071 = vpop.f32.mrb[0].mxu0
  %v1072 = vpop.f32.mrb[0].mxu0
  %1073 = vdwg.mxu0
  %v1074 = vpack.c.bf16 %v1069, %v1069
  %v1075 = vld [vmem:[%s5 + $0x8] sm:$0xf]
  %v1076 = vld [vmem:[%s5 + $0xc] sm:$0xf]
  %v1079 = vunpack.c.l.b16 %v1075
  %v1080 = vunpack.c.l.b16 %v1076
  %v1081 = vpack.c.b16 %v1080, %v1079
  %v1084 = vsel %vm187, %v1074, 0
  %1086 = vmatprep.subr.bf16.mxu0 0
  %1087 = vmatpush1.bf16.msra.mxu0 %v1081
  %1088 = vmatprep.subr.bf16.mxu0 0
  %1089 = vmatpush1.bf16.msra.mxu0 0
  %1090 = vmatprep.subr.bf16.mxu0 0
  %1091 = vmatpush1.bf16.msra.mxu0 0
  %1092 = vmatprep.subr.bf16.mxu0 0
  %1093 = vmatpush1.bf16.msra.mxu0 0
  %1094 = vmatprep.subr.bf16.mxu0 0
  %1095 = vmatpush1.bf16.msra.mxu0 0
  %1096 = vmatprep.subr.bf16.mxu0 0
  %1097 = vmatpush1.bf16.msra.mxu0 0
  %1098 = vmatprep.subr.bf16.mxu0 0
  %1099 = vmatpush1.bf16.msra.mxu0 0
  %1100 = vmatprep.subr.bf16.mxu0 0
  %1101 = vmatpush1.bf16.msra.mxu0 0
  %1102 = vmatprep.subr.bf16.mxu0 0
  %1103 = vmatpush1.bf16.msra.mxu0 0
  %1104 = vmatprep.subr.bf16.mxu0 0
  %1105 = vmatpush1.bf16.msra.mxu0 0
  %1106 = vmatprep.subr.bf16.mxu0 0
  %1107 = vmatpush1.bf16.msra.mxu0 0
  %1108 = vmatprep.subr.bf16.mxu0 0
  %1109 = vmatpush1.bf16.msra.mxu0 0
  %1110 = vmatprep.subr.bf16.mxu0 0
  %1111 = vmatpush1.bf16.msra.mxu0 0
  %1112 = vmatprep.subr.bf16.mxu0 0
  %1113 = vmatpush1.bf16.msra.mxu0 0
  %1114 = vmatprep.subr.bf16.mxu0 0
  %1115 = vmatpush1.bf16.msra.mxu0 0
  %1116 = vmatprep.subr.bf16.mxu0 0
  %1117 = vmatpush1.bf16.msra.mxu0 0
  %1118 = vmatprep.mubr.bf16.mxu0 0
  %1119 = vmatmul.mubr.bf16.gmra.mrb[0].mxu0 %v1084
  %v1120 = vpop.f32.mrb[0].mxu0
  %v1121 = vadd.f32 0.0, %v1120
  %v1122 = vpop.f32.mrb[0].mxu0
  %v1123 = vpop.f32.mrb[0].mxu0
  %v1124 = vpop.f32.mrb[0].mxu0
  %1125 = vdwg.mxu0
  %v1128 = vunpack.c.l.b16 %v960
  %v1129 = vunpack.c.l.b16 %v961
  %v1130 = vpack.c.b16 %v1129, %v1128
  %v1133 = vsel %vm187, %v959, 0
  %1135 = vmatprep.subr.bf16.mxu0 0
  %1136 = vmatpush1.bf16.msra.mxu0 %v1130
  %1137 = vmatprep.subr.bf16.mxu0 0
  %1138 = vmatpush1.bf16.msra.mxu0 0
  %1139 = vmatprep.subr.bf16.mxu0 0
  %1140 = vmatpush1.bf16.msra.mxu0 0
  %1141 = vmatprep.subr.bf16.mxu0 0
  %1142 = vmatpush1.bf16.msra.mxu0 0
  %1143 = vmatprep.subr.bf16.mxu0 0
  %1144 = vmatpush1.bf16.msra.mxu0 0
  %1145 = vmatprep.subr.bf16.mxu0 0
  %1146 = vmatpush1.bf16.msra.mxu0 0
  %1147 = vmatprep.subr.bf16.mxu0 0
  %1148 = vmatpush1.bf16.msra.mxu0 0
  %1149 = vmatprep.subr.bf16.mxu0 0
  %1150 = vmatpush1.bf16.msra.mxu0 0
  %1151 = vmatprep.subr.bf16.mxu0 0
  %1152 = vmatpush1.bf16.msra.mxu0 0
  %1153 = vmatprep.subr.bf16.mxu0 0
  %1154 = vmatpush1.bf16.msra.mxu0 0
  %1155 = vmatprep.subr.bf16.mxu0 0
  %1156 = vmatpush1.bf16.msra.mxu0 0
  %1157 = vmatprep.subr.bf16.mxu0 0
  %1158 = vmatpush1.bf16.msra.mxu0 0
  %1159 = vmatprep.subr.bf16.mxu0 0
  %1160 = vmatpush1.bf16.msra.mxu0 0
  %1161 = vmatprep.subr.bf16.mxu0 0
  %1162 = vmatpush1.bf16.msra.mxu0 0
  %1163 = vmatprep.subr.bf16.mxu0 0
  %1164 = vmatpush1.bf16.msra.mxu0 0
  %1165 = vmatprep.subr.bf16.mxu0 0
  %1166 = vmatpush1.bf16.msra.mxu0 0
  %1167 = vmatprep.mubr.bf16.mxu0 0
  %1168 = vmatmul.mubr.bf16.gmra.mrb[0].mxu0 %v1133
  %v1169 = vpop.f32.mrb[0].mxu0
  %v1170 = vadd.f32 %v1121, %v1169
  %v1171 = vpop.f32.mrb[0].mxu0
  %v1172 = vpop.f32.mrb[0].mxu0
  %v1173 = vpop.f32.mrb[0].mxu0
  %1174 = vdwg.mxu0
  %1175 = vrot.lane.b32.xlu0 %v849, 96
  %v1176 = vpop.permute.xlu0 %1175
  %1177 = vrot.lane.b32.xlu0 %v849, 32
  %v1178 = vpop.permute.xlu0 %1177
  %v1180 = vsel %vm187, %v1176, 0
  %v1183 = vsel %vm187, %v1178, 0
  %1185 = vmatprep.subr.bf16.mxu0 0
  %1186 = vmatpush1.bf16.xpose.msra.mxu0 %v1183
  %1187 = vmatprep.subr.bf16.mxu0 0
  %1188 = vmatpush1.bf16.xpose.msra.mxu0 0
  %1189 = vmatprep.subr.bf16.mxu0 0
  %1190 = vmatpush1.bf16.xpose.msra.mxu0 0
  %1191 = vmatprep.subr.bf16.mxu0 0
  %1192 = vmatpush1.bf16.xpose.msra.mxu0 0
  %1193 = vmatprep.subr.bf16.mxu0 0
  %1194 = vmatpush1.bf16.xpose.msra.mxu0 0
  %1195 = vmatprep.subr.bf16.mxu0 0
  %1196 = vmatpush1.bf16.xpose.msra.mxu0 0
  %1197 = vmatprep.subr.bf16.mxu0 0
  %1198 = vmatpush1.bf16.xpose.msra.mxu0 0
  %1199 = vmatprep.subr.bf16.mxu0 0
  %1200 = vmatpush1.bf16.xpose.msra.mxu0 0
  %1201 = vmatprep.subr.bf16.mxu0 0
  %1202 = vmatpush1.bf16.xpose.msra.mxu0 0
  %1203 = vmatprep.subr.bf16.mxu0 0
  %1204 = vmatpush1.bf16.xpose.msra.mxu0 0
  %1205 = vmatprep.subr.bf16.mxu0 0
  %1206 = vmatpush1.bf16.xpose.msra.mxu0 0
  %1207 = vmatprep.subr.bf16.mxu0 0
  %1208 = vmatpush1.bf16.xpose.msra.mxu0 0
  %1209 = vmatprep.subr.bf16.mxu0 0
  %1210 = vmatpush1.bf16.xpose.msra.mxu0 0
  %1211 = vmatprep.subr.bf16.mxu0 0
  %1212 = vmatpush1.bf16.xpose.msra.mxu0 0
  %1213 = vmatprep.subr.bf16.mxu0 0
  %1214 = vmatpush1.bf16.xpose.msra.mxu0 0
  %1215 = vmatprep.subr.bf16.mxu0 0
  %1216 = vmatpush1.bf16.xpose.msra.mxu0 0
  %1217 = vmatprep.mubr.bf16.mxu0 0
  %1218 = vmatmul.mubr.bf16.gmra.mrb[0].mxu0 %v1180
  %v1219 = vpop.f32.mrb[0].mxu0
  %v1220 = vadd.f32 0.0, %v1219
  %v1221 = vpop.f32.mrb[0].mxu0
  %v1222 = vpop.f32.mrb[0].mxu0
  %v1223 = vpop.f32.mrb[0].mxu0
  %1224 = vdwg.mxu0
  %v1225 = vmul.f32 %v1220, 0.25
  %v1226 = vsel %vm235, %v1225, -inf
  %1227 = vmax.xlane.f32.xlu0 %v1226
  %v1228 = vpop.xlane.xlu0 %1227
  %v1229 = vsub.f32 %v1225, %v1228
  %v1230 = vmul.f32 %v1229, 1.442695
  %v1231 = vpow.pop %v1230
  %v1232 = vsel %vm235, %v1231, 0.0
  %1233 = vadd.xlane.f32.xlu0 %v1232
  %v1234 = vpop.xlane.xlu0 %1233
  %v1235 = vrcp.pop %v1234
  %v1236 = vmul.f32 %v1231, %v1235
  %v1237 = vpack.c.bf16 %v1236, %v1236
  %1238 = vrot.lane.b32.xlu0 %v850, 96
  %v1239 = vpop.permute.xlu0 %1238
  %v1241 = vsel %vm235, %v1237, 0
  %v1244 = vsel %vm251, %v1239, 0
  %1246 = vmatprep.subr.bf16.mxu0 0
  %1247 = vmatpush1.bf16.msra.mxu0 %v1244
  %1248 = vmatprep.subr.bf16.mxu0 0
  %1249 = vmatpush1.bf16.msra.mxu0 0
  %1250 = vmatprep.subr.bf16.mxu0 0
  %1251 = vmatpush1.bf16.msra.mxu0 0
  %1252 = vmatprep.subr.bf16.mxu0 0
  %1253 = vmatpush1.bf16.msra.mxu0 0
  %1254 = vmatprep.subr.bf16.mxu0 0
  %1255 = vmatpush1.bf16.msra.mxu0 0
  %1256 = vmatprep.subr.bf16.mxu0 0
  %1257 = vmatpush1.bf16.msra.mxu0 0
  %1258 = vmatprep.subr.bf16.mxu0 0
  %1259 = vmatpush1.bf16.msra.mxu0 0
  %1260 = vmatprep.subr.bf16.mxu0 0
  %1261 = vmatpush1.bf16.msra.mxu0 0
  %1262 = vmatprep.subr.bf16.mxu0 0
  %1263 = vmatpush1.bf16.msra.mxu0 0
  %1264 = vmatprep.subr.bf16.mxu0 0
  %1265 = vmatpush1.bf16.msra.mxu0 0
  %1266 = vmatprep.subr.bf16.mxu0 0
  %1267 = vmatpush1.bf16.msra.mxu0 0
  %1268 = vmatprep.subr.bf16.mxu0 0
  %1269 = vmatpush1.bf16.msra.mxu0 0
  %1270 = vmatprep.subr.bf16.mxu0 0
  %1271 = vmatpush1.bf16.msra.mxu0 0
  %1272 = vmatprep.subr.bf16.mxu0 0
  %1273 = vmatpush1.bf16.msra.mxu0 0
  %1274 = vmatprep.subr.bf16.mxu0 0
  %1275 = vmatpush1.bf16.msra.mxu0 0
  %1276 = vmatprep.subr.bf16.mxu0 0
  %1277 = vmatpush1.bf16.msra.mxu0 0
  %1278 = vmatprep.mubr.bf16.mxu0 0
  %1279 = vmatmul.mubr.bf16.gmra.mrb[0].mxu0 %v1241
  %v1280 = vpop.f32.mrb[0].mxu0
  %v1281 = vadd.f32 0.0, %v1280
  %v1282 = vpop.f32.mrb[0].mxu0
  %v1283 = vpop.f32.mrb[0].mxu0
  %v1284 = vpop.f32.mrb[0].mxu0
  %1285 = vdwg.mxu0
  %v1286 = vpack.c.bf16 %v1281, %v1281
  %v1287 = vld [vmem:[%s5 + $0x10] sm:$0xf]
  %v1288 = vld [vmem:[%s5 + $0x14] sm:$0xf]
  %v1291 = vunpack.c.l.b16 %v1287
  %v1292 = vunpack.c.l.b16 %v1288
  %v1293 = vpack.c.b16 %v1292, %v1291
  %v1296 = vsel %vm187, %v1286, 0
  %1298 = vmatprep.subr.bf16.mxu0 0
  %1299 = vmatpush1.bf16.msra.mxu0 %v1293
  %1300 = vmatprep.subr.bf16.mxu0 0
  %1301 = vmatpush1.bf16.msra.mxu0 0
  %1302 = vmatprep.subr.bf16.mxu0 0
  %1303 = vmatpush1.bf16.msra.mxu0 0
  %1304 = vmatprep.subr.bf16.mxu0 0
  %1305 = vmatpush1.bf16.msra.mxu0 0
  %1306 = vmatprep.subr.bf16.mxu0 0
  %1307 = vmatpush1.bf16.msra.mxu0 0
  %1308 = vmatprep.subr.bf16.mxu0 0
  %1309 = vmatpush1.bf16.msra.mxu0 0
  %1310 = vmatprep.subr.bf16.mxu0 0
  %1311 = vmatpush1.bf16.msra.mxu0 0
  %1312 = vmatprep.subr.bf16.mxu0 0
  %1313 = vmatpush1.bf16.msra.mxu0 0
  %1314 = vmatprep.subr.bf16.mxu0 0
  %1315 = vmatpush1.bf16.msra.mxu0 0
  %1316 = vmatprep.subr.bf16.mxu0 0
  %1317 = vmatpush1.bf16.msra.mxu0 0
  %1318 = vmatprep.subr.bf16.mxu0 0
  %1319 = vmatpush1.bf16.msra.mxu0 0
  %1320 = vmatprep.subr.bf16.mxu0 0
  %1321 = vmatpush1.bf16.msra.mxu0 0
  %1322 = vmatprep.subr.bf16.mxu0 0
  %1323 = vmatpush1.bf16.msra.mxu0 0
  %1324 = vmatprep.subr.bf16.mxu0 0
  %1325 = vmatpush1.bf16.msra.mxu0 0
  %1326 = vmatprep.subr.bf16.mxu0 0
  %1327 = vmatpush1.bf16.msra.mxu0 0
  %1328 = vmatprep.subr.bf16.mxu0 0
  %1329 = vmatpush1.bf16.msra.mxu0 0
  %1330 = vmatprep.mubr.bf16.mxu0 0
  %1331 = vmatmul.mubr.bf16.gmra.mrb[0].mxu0 %v1296
  %v1332 = vpop.f32.mrb[0].mxu0
  %v1333 = vadd.f32 0.0, %v1332
  %v1334 = vpop.f32.mrb[0].mxu0
  %v1335 = vpop.f32.mrb[0].mxu0
  %v1336 = vpop.f32.mrb[0].mxu0
  %1337 = vdwg.mxu0
  %v1338 = vadd.f32 %v1170, %v1333
  %1339 = vrot.lane.b32.xlu0 %v849, 80
  %v1340 = vpop.permute.xlu0 %1339
  %1341 = vrot.lane.b32.xlu0 %v849, 16
  %v1342 = vpop.permute.xlu0 %1341
  %v1344 = vsel %vm187, %v1340, 0
  %v1347 = vsel %vm187, %v1342, 0
  %1349 = vmatprep.subr.bf16.mxu0 0
  %1350 = vmatpush1.bf16.xpose.msra.mxu0 %v1347
  %1351 = vmatprep.subr.bf16.mxu0 0
  %1352 = vmatpush1.bf16.xpose.msra.mxu0 0
  %1353 = vmatprep.subr.bf16.mxu0 0
  %1354 = vmatpush1.bf16.xpose.msra.mxu0 0
  %1355 = vmatprep.subr.bf16.mxu0 0
  %1356 = vmatpush1.bf16.xpose.msra.mxu0 0
  %1357 = vmatprep.subr.bf16.mxu0 0
  %1358 = vmatpush1.bf16.xpose.msra.mxu0 0
  %1359 = vmatprep.subr.bf16.mxu0 0
  %1360 = vmatpush1.bf16.xpose.msra.mxu0 0
  %1361 = vmatprep.subr.bf16.mxu0 0
  %1362 = vmatpush1.bf16.xpose.msra.mxu0 0
  %1363 = vmatprep.subr.bf16.mxu0 0
  %1364 = vmatpush1.bf16.xpose.msra.mxu0 0
  %1365 = vmatprep.subr.bf16.mxu0 0
  %1366 = vmatpush1.bf16.xpose.msra.mxu0 0
  %1367 = vmatprep.subr.bf16.mxu0 0
  %1368 = vmatpush1.bf16.xpose.msra.mxu0 0
  %1369 = vmatprep.subr.bf16.mxu0 0
  %1370 = vmatpush1.bf16.xpose.msra.mxu0 0
  %1371 = vmatprep.subr.bf16.mxu0 0
  %1372 = vmatpush1.bf16.xpose.msra.mxu0 0
  %1373 = vmatprep.subr.bf16.mxu0 0
  %1374 = vmatpush1.bf16.xpose.msra.mxu0 0
  %1375 = vmatprep.subr.bf16.mxu0 0
  %1376 = vmatpush1.bf16.xpose.msra.mxu0 0
  %1377 = vmatprep.subr.bf16.mxu0 0
  %1378 = vmatpush1.bf16.xpose.msra.mxu0 0
  %1379 = vmatprep.subr.bf16.mxu0 0
  %1380 = vmatpush1.bf16.xpose.msra.mxu0 0
  %1381 = vmatprep.mubr.bf16.mxu0 0
  %1382 = vmatmul.mubr.bf16.gmra.mrb[0].mxu0 %v1344
  %v1383 = vpop.f32.mrb[0].mxu0
  %v1384 = vadd.f32 0.0, %v1383
  %v1385 = vpop.f32.mrb[0].mxu0
  %v1386 = vpop.f32.mrb[0].mxu0
  %v1387 = vpop.f32.mrb[0].mxu0
  %1388 = vdwg.mxu0
  %v1389 = vmul.f32 %v1384, 0.25
  %v1390 = vsel %vm235, %v1389, -inf
  %1391 = vmax.xlane.f32.xlu0 %v1390
  %v1392 = vpop.xlane.xlu0 %1391
  %v1393 = vsub.f32 %v1389, %v1392
  %v1394 = vmul.f32 %v1393, 1.442695
  %v1395 = vpow.pop %v1394
  %v1396 = vsel %vm235, %v1395, 0.0
  %1397 = vadd.xlane.f32.xlu0 %v1396
  %v1398 = vpop.xlane.xlu0 %1397
  %v1399 = vrcp.pop %v1398
  %v1400 = vmul.f32 %v1395, %v1399
  %v1401 = vpack.c.bf16 %v1400, %v1400
  %1402 = vrot.lane.b32.xlu0 %v850, 80
  %v1403 = vpop.permute.xlu0 %1402
  %v1405 = vsel %vm235, %v1401, 0
  %v1408 = vsel %vm251, %v1403, 0
  %1410 = vmatprep.subr.bf16.mxu0 0
  %1411 = vmatpush1.bf16.msra.mxu0 %v1408
  %1412 = vmatprep.subr.bf16.mxu0 0
  %1413 = vmatpush1.bf16.msra.mxu0 0
  %1414 = vmatprep.subr.bf16.mxu0 0
  %1415 = vmatpush1.bf16.msra.mxu0 0
  %1416 = vmatprep.subr.bf16.mxu0 0
  %1417 = vmatpush1.bf16.msra.mxu0 0
  %1418 = vmatprep.subr.bf16.mxu0 0
  %1419 = vmatpush1.bf16.msra.mxu0 0
  %1420 = vmatprep.subr.bf16.mxu0 0
  %1421 = vmatpush1.bf16.msra.mxu0 0
  %1422 = vmatprep.subr.bf16.mxu0 0
  %1423 = vmatpush1.bf16.msra.mxu0 0
  %1424 = vmatprep.subr.bf16.mxu0 0
  %1425 = vmatpush1.bf16.msra.mxu0 0
  %1426 = vmatprep.subr.bf16.mxu0 0
  %1427 = vmatpush1.bf16.msra.mxu0 0
  %1428 = vmatprep.subr.bf16.mxu0 0
  %1429 = vmatpush1.bf16.msra.mxu0 0
  %1430 = vmatprep.subr.bf16.mxu0 0
  %1431 = vmatpush1.bf16.msra.mxu0 0
  %1432 = vmatprep.subr.bf16.mxu0 0
  %1433 = vmatpush1.bf16.msra.mxu0 0
  %1434 = vmatprep.subr.bf16.mxu0 0
  %1435 = vmatpush1.bf16.msra.mxu0 0
  %1436 = vmatprep.subr.bf16.mxu0 0
  %1437 = vmatpush1.bf16.msra.mxu0 0
  %1438 = vmatprep.subr.bf16.mxu0 0
  %1439 = vmatpush1.bf16.msra.mxu0 0
  %1440 = vmatprep.subr.bf16.mxu0 0
  %1441 = vmatpush1.bf16.msra.mxu0 0
  %1442 = vmatprep.mubr.bf16.mxu0 0
  %1443 = vmatmul.mubr.bf16.gmra.mrb[0].mxu0 %v1405
  %v1444 = vpop.f32.mrb[0].mxu0
  %v1445 = vadd.f32 0.0, %v1444
  %v1446 = vpop.f32.mrb[0].mxu0
  %v1447 = vpop.f32.mrb[0].mxu0
  %v1448 = vpop.f32.mrb[0].mxu0
  %1449 = vdwg.mxu0
  %v1450 = vpack.c.bf16 %v1445, %v1445
  %v1451 = vld [vmem:[%s5 + $0x18] sm:$0xf]
  %v1452 = vld [vmem:[%s5 + $0x1c] sm:$0xf]
  %v1455 = vunpack.c.l.b16 %v1451
  %v1456 = vunpack.c.l.b16 %v1452
  %v1457 = vpack.c.b16 %v1456, %v1455
  %v1460 = vsel %vm187, %v1450, 0
  %1462 = vmatprep.subr.bf16.mxu0 0
  %1463 = vmatpush1.bf16.msra.mxu0 %v1457
  %1464 = vmatprep.subr.bf16.mxu0 0
  %1465 = vmatpush1.bf16.msra.mxu0 0
  %1466 = vmatprep.subr.bf16.mxu0 0
  %1467 = vmatpush1.bf16.msra.mxu0 0
  %1468 = vmatprep.subr.bf16.mxu0 0
  %1469 = vmatpush1.bf16.msra.mxu0 0
  %1470 = vmatprep.subr.bf16.mxu0 0
  %1471 = vmatpush1.bf16.msra.mxu0 0
  %1472 = vmatprep.subr.bf16.mxu0 0
  %1473 = vmatpush1.bf16.msra.mxu0 0
  %1474 = vmatprep.subr.bf16.mxu0 0
  %1475 = vmatpush1.bf16.msra.mxu0 0
  %1476 = vmatprep.subr.bf16.mxu0 0
  %1477 = vmatpush1.bf16.msra.mxu0 0
  %1478 = vmatprep.subr.bf16.mxu0 0
  %1479 = vmatpush1.bf16.msra.mxu0 0
  %1480 = vmatprep.subr.bf16.mxu0 0
  %1481 = vmatpush1.bf16.msra.mxu0 0
  %1482 = vmatprep.subr.bf16.mxu0 0
  %1483 = vmatpush1.bf16.msra.mxu0 0
  %1484 = vmatprep.subr.bf16.mxu0 0
  %1485 = vmatpush1.bf16.msra.mxu0 0
  %1486 = vmatprep.subr.bf16.mxu0 0
  %1487 = vmatpush1.bf16.msra.mxu0 0
  %1488 = vmatprep.subr.bf16.mxu0 0
  %1489 = vmatpush1.bf16.msra.mxu0 0
  %1490 = vmatprep.subr.bf16.mxu0 0
  %1491 = vmatpush1.bf16.msra.mxu0 0
  %1492 = vmatprep.subr.bf16.mxu0 0
  %1493 = vmatpush1.bf16.msra.mxu0 0
  %1494 = vmatprep.mubr.bf16.mxu0 0
  %1495 = vmatmul.mubr.bf16.gmra.mrb[0].mxu0 %v1460
  %v1496 = vpop.f32.mrb[0].mxu0
  %v1497 = vadd.f32 0.0, %v1496
  %v1498 = vpop.f32.mrb[0].mxu0
  %v1499 = vpop.f32.mrb[0].mxu0
  %v1500 = vpop.f32.mrb[0].mxu0
  %1501 = vdwg.mxu0
  %v1502 = vadd.f32 %v1338, %v1497
  %v1503 = vadd.f32 %v28, %v1502
  %v1504 = vld [vmem:[%s6] sm:$0x1]
  %v1506 = vlaneseq
  %v1507 = vshrl.u32 %v1506, 7
  %v1508 = vsub.s32 0, %v1507
  %v1509 = vrot.slane %v1504, %v1508
  %v1511 = vadd.f32 %v1503, %v1509
  %1512 = vst.msk [vmem:[%s7 + $0x8] sm:$0xff] %vm31, %v1511
  // Predicated region
  $region30: #{conformer_feature_extractor.12} parent=0 // pred_check
    _
  $region31: #{conformer_feature_extractor.12} parent=0 // pred_check_branch
    %1514 = sbr.rel (0) target = $region33
  $region32: #{conformer_feature_extractor.12} parent=0 // pred_region
    _
  $region33: #{conformer_feature_extractor.12} parent=0 // pred_fallthru
    _
  // Predicated region
  $region34: #{conformer_feature_extractor.12} parent=0 // pred_check
    _
  $region35: #{conformer_feature_extractor.12} parent=0 // pred_check_branch
    %1516 = sbr.rel (0) target = $region37
  $region36: #{conformer_feature_extractor.12} parent=0 // pred_region
    _
  $region37: #{conformer_feature_extractor.12} parent=0 // pred_fallthru
    _

// kernel: conformer_feature_extractor.14
$region0: #{conformer_feature_extractor.14}
  #allocation0 [shape = 'u32[]', space=smem, size = 0x4, offset = 0x4, fixed_abs, tag = 'smem constant byte address 0x4 - core index']
  #allocation1 [shape = 'u32[144,128]{1,0:T(1,128)}', space=vmem, size = 0x12000, scoped, tag = 'internal scratch']
  %s0 = inlined_call_operand.vmem [shape: f32[16,64], index: 0, kind: input, shape index: {}]
  %s1 = inlined_call_operand.vmem [shape: f32[1,64], index: 1, kind: input, shape index: {}]
  %s2 = inlined_call_operand.vmem [shape: f32[1,64], index: 2, kind: input, shape index: {}]
  %s3 = inlined_call_operand.vmem [shape: bf16[64,256], index: 3, kind: input, shape index: {}]
  %s4 = inlined_call_operand.vmem [shape: f32[1,256], index: 4, kind: input, shape index: {}]
  %s5 = inlined_call_operand.vmem [shape: bf16[256,64], index: 5, kind: input, shape index: {}]
  %s6 = inlined_call_operand.vmem [shape: f32[1,64], index: 6, kind: input, shape index: {}]
  %s7 = inlined_call_operand.vmem [shape: f32[1,64], index: 7, kind: input, shape index: {}]
  %s8 = inlined_call_operand.vmem [shape: f32[1,64], index: 8, kind: input, shape index: {}]
  %s9 = inlined_call_operand.vmem [shape: f32[16,64], index: 9, kind: output, shape index: {}]
  %s10 = sld [smem:[#allocation0]]
  $region46: #{conformer_feature_extractor.14} parent=0
    _
  %s12 = ssub.s32 1, %s10
  %s13 = scalar_select 0, %s12, %s10
  // Predicated region
  $region2: #{conformer_feature_extractor.14} parent=0 // pred_check
    _
  $region3: #{conformer_feature_extractor.14} parent=0 // pred_check_branch
    %15 = sbr.rel (0) target = $region5
  $region4: #{conformer_feature_extractor.14} parent=0 // pred_region
    _
  $region5: #{conformer_feature_extractor.14} parent=0 // pred_fallthru
    _
  // Predicated region
  $region6: #{conformer_feature_extractor.14} parent=0 // pred_check
    _
  $region7: #{conformer_feature_extractor.14} parent=0 // pred_check_branch
    %17 = sbr.rel (0) target = $region9
  $region8: #{conformer_feature_extractor.14} parent=0 // pred_region
    _
  $region9: #{conformer_feature_extractor.14} parent=0 // pred_fallthru
    _
  // Predicated region
  $region10: #{conformer_feature_extractor.14} parent=0 // pred_check
    _
  $region11: #{conformer_feature_extractor.14} parent=0 // pred_check_branch
    %19 = sbr.rel (0) target = $region13
  $region12: #{conformer_feature_extractor.14} parent=0 // pred_region
    _
  $region13: #{conformer_feature_extractor.14} parent=0 // pred_fallthru
    _
  // Predicated region
  $region14: #{conformer_feature_extractor.14} parent=0 // pred_check
    _
  $region15: #{conformer_feature_extractor.14} parent=0 // pred_check_branch
    %21 = sbr.rel (0) target = $region17
  $region16: #{conformer_feature_extractor.14} parent=0 // pred_region
    _
  $region17: #{conformer_feature_extractor.14} parent=0 // pred_fallthru
    _
  // Predicated region
  $region18: #{conformer_feature_extractor.14} parent=0 // pred_check
    _
  $region19: #{conformer_feature_extractor.14} parent=0 // pred_check_branch
    %23 = sbr.rel (0) target = $region21
  $region20: #{conformer_feature_extractor.14} parent=0 // pred_region
    _
  $region21: #{conformer_feature_extractor.14} parent=0 // pred_fallthru
    _
  // Predicated region
  $region22: #{conformer_feature_extractor.14} parent=0 // pred_check
    _
  $region23: #{conformer_feature_extractor.14} parent=0 // pred_check_branch
    %25 = sbr.rel (0) target = $region25
  $region24: #{conformer_feature_extractor.14} parent=0 // pred_region
    _
  $region25: #{conformer_feature_extractor.14} parent=0 // pred_fallthru
    _
  // Predicated region
  $region26: #{conformer_feature_extractor.14} parent=0 // pred_check
    _
  $region27: #{conformer_feature_extractor.14} parent=0 // pred_check_branch
    %27 = sbr.rel (0) target = $region29
  $region28: #{conformer_feature_extractor.14} parent=0 // pred_region
    _
  $region29: #{conformer_feature_extractor.14} parent=0 // pred_fallthru
    _
  // Predicated region
  $region30: #{conformer_feature_extractor.14} parent=0 // pred_check
    _
  $region31: #{conformer_feature_extractor.14} parent=0 // pred_check_branch
    %29 = sbr.rel (0) target = $region33
  $region32: #{conformer_feature_extractor.14} parent=0 // pred_region
    _
  $region33: #{conformer_feature_extractor.14} parent=0 // pred_fallthru
    _
  // Predicated region
  $region34: #{conformer_feature_extractor.14} parent=0 // pred_check
    _
  $region35: #{conformer_feature_extractor.14} parent=0 // pred_check_branch
    %31 = sbr.rel (0) target = $region37
  $region36: #{conformer_feature_extractor.14} parent=0 // pred_region
    _
  $region37: #{conformer_feature_extractor.14} parent=0 // pred_fallthru
    _
  %v33 = vld [vmem:[%s0] sm:$0xff]
  %v34 = vld [vmem:[%s0 + $0x8] sm:$0xff]
  %v35 = vld [vmem:[%s1] sm:$0x1]
  %v36 = vld [vmem:[%s2] sm:$0x1]
  %vm37 = vcmask 523264
  %v38 = vsel %vm37, %v33, 0.0
  %39 = vadd.xlane.f32.xlu0 %v38
  %v40 = vpop.xlane.xlu0 %39
  %v41 = vsel %vm37, %v34, 0.0
  %42 = vadd.xlane.f32.xlu0 %v41
  %v43 = vpop.xlane.xlu0 %42
  %v44 = vrcp.pop 64.0
  %v45 = vmul.f32 %v40, %v44
  %v46 = vmul.f32 %v43, %v44
  %v47 = vsub.f32 %v33, %v45
  %v48 = vsub.f32 %v34, %v46
  %v49 = vmul.f32 %v47, %v47
  %v50 = vmul.f32 %v48, %v48
  %v51 = vsel %vm37, %v49, 0.0
  %52 = vadd.xlane.f32.xlu0 %v51
  %v53 = vpop.xlane.xlu0 %52
  %v54 = vsel %vm37, %v50, 0.0
  %55 = vadd.xlane.f32.xlu0 %v54
  %v56 = vpop.xlane.xlu0 %55
  %v57 = vmul.f32 %v53, %v44
  %v58 = vmul.f32 %v56, %v44
  %v59 = vadd.f32 %v57, 1e-05
  %v60 = vadd.f32 %v58, 1e-05
  %v61 = vrsqrt.pop %v59
  %v62 = vrsqrt.pop %v60
  %v63 = vmul.f32 %v47, %v61
  %v64 = vmul.f32 %v48, %v62
  %v66 = vlaneseq
  %v67 = vshrl.u32 %v66, 7
  %v68 = vsub.s32 0, %v67
  %v69 = vrot.slane %v35, %v68
  %v71 = vmul.f32 %v63, %v69
  %v72 = vmul.f32 %v64, %v69
  %v74 = vlaneseq
  %v75 = vshrl.u32 %v74, 7
  %v76 = vsub.s32 0, %v75
  %v77 = vrot.slane %v36, %v76
  %v79 = vadd.f32 %v71, %v77
  %v80 = vadd.f32 %v72, %v77
  %v81 = vpack.c.bf16 %v80, %v79
  %v82 = vld [vmem:[%s3] sm:$0xff]
  %v83 = vld [vmem:[%s3 + $0x8] sm:$0xff]
  %v84 = vld [vmem:[%s3 + $0x10] sm:$0xff]
  %v85 = vld [vmem:[%s3 + $0x18] sm:$0xff]
  %v86 = vld [vmem:[%s3 + $0x20] sm:$0xff]
  %v87 = vld [vmem:[%s3 + $0x28] sm:$0xff]
  %v88 = vld [vmem:[%s3 + $0x30] sm:$0xff]
  %v89 = vld [vmem:[%s3 + $0x38] sm:$0xff]
  %v90 = vld [vmem:[%s4] sm:$0x3]
  %v92 = vlaneseq
  %v93 = vshrl.u32 %v92, 7
  %v94 = vsub.s32 0, %v93
  %v95 = vrot.slane %v90, %v94
  %v96 = vlaneseq
  %v97 = vshrl.u32 %v96, 7
  %v98 = vsub.s32 1, %v97
  %v99 = vrot.slane %v90, %v98
  %v110 = vunpack.c.l.b16 %v82
  %v111 = vunpack.c.h.b16 %v82
  %v112 = vunpack.c.l.b16 %v83
  %v113 = vunpack.c.h.b16 %v83
  %v114 = vunpack.c.l.b16 %v84
  %v115 = vunpack.c.h.b16 %v84
  %v116 = vunpack.c.l.b16 %v85
  %v117 = vunpack.c.h.b16 %v85
  %v118 = vunpack.c.l.b16 %v86
  %v119 = vunpack.c.h.b16 %v86
  %v120 = vunpack.c.l.b16 %v87
  %v121 = vunpack.c.h.b16 %v87
  %v122 = vunpack.c.l.b16 %v88
  %v123 = vunpack.c.h.b16 %v88
  %v124 = vunpack.c.l.b16 %v89
  %v125 = vunpack.c.h.b16 %v89
  %v126 = vpack.c.b16 %v112, %v110
  %v127 = vpack.c.b16 %v113, %v111
  %v128 = vpack.c.b16 %v116, %v114
  %v129 = vpack.c.b16 %v117, %v115
  %v130 = vpack.c.b16 %v120, %v118
  %v131 = vpack.c.b16 %v121, %v119
  %v132 = vpack.c.b16 %v124, %v122
  %v133 = vpack.c.b16 %v125, %v123
  %v143 = vsel %vm37, %v81, 0
  %145 = vmatprep.subr.bf16.mxu0 %v127
  %146 = vmatpush1.bf16.msra.mxu0 %v126
  %147 = vmatprep.subr.bf16.mxu0 %v129
  %148 = vmatpush1.bf16.msra.mxu0 %v128
  %149 = vmatprep.subr.bf16.mxu0 %v131
  %150 = vmatpush1.bf16.msra.mxu0 %v130
  %151 = vmatprep.subr.bf16.mxu0 %v133
  %152 = vmatpush1.bf16.msra.mxu0 %v132
  %153 = vmatprep.subr.bf16.mxu0 0
  %154 = vmatpush1.bf16.msra.mxu0 0
  %155 = vmatprep.subr.bf16.mxu0 0
  %156 = vmatpush1.bf16.msra.mxu0 0
  %157 = vmatprep.subr.bf16.mxu0 0
  %158 = vmatpush1.bf16.msra.mxu0 0
  %159 = vmatprep.subr.bf16.mxu0 0
  %160 = vmatpush1.bf16.msra.mxu0 0
  %161 = vmatprep.subr.bf16.mxu0 0
  %162 = vmatpush1.bf16.msra.mxu0 0
  %163 = vmatprep.subr.bf16.mxu0 0
  %164 = vmatpush1.bf16.msra.mxu0 0
  %165 = vmatprep.subr.bf16.mxu0 0
  %166 = vmatpush1.bf16.msra.mxu0 0
  %167 = vmatprep.subr.bf16.mxu0 0
  %168 = vmatpush1.bf16.msra.mxu0 0
  %169 = vmatprep.subr.bf16.mxu0 0
  %170 = vmatpush1.bf16.msra.mxu0 0
  %171 = vmatprep.subr.bf16.mxu0 0
  %172 = vmatpush1.bf16.msra.mxu0 0
  %173 = vmatprep.subr.bf16.mxu0 0
  %174 = vmatpush1.bf16.msra.mxu0 0
  %175 = vmatprep.subr.bf16.mxu0 0
  %176 = vmatpush1.bf16.msra.mxu0 0
  %177 = vmatprep.mubr.bf16.mxu0 0
  %178 = vmatmul.mubr.bf16.gmra.mrb[0].mxu0 %v143
  %v179 = vpop.f32.mrb[0].mxu0
  %v180 = vadd.f32 %v95, %v179
  %v181 = vpop.f32.mrb[0].mxu0
  %v182 = vadd.f32 %v99, %v181
  %v183 = vpop.f32.mrb[0].mxu0
  %v184 = vadd.f32 %v95, %v183
  %v185 = vpop.f32.mrb[0].mxu0
  %v186 = vadd.f32 %v99, %v185
  %187 = vdwg.mxu0
  %v188 = vxor.u32 %v180, 2147483648
  %v189 = vxor.u32 %v182, 2147483648
  %v190 = vxor.u32 %v184, 2147483648
  %v191 = vxor.u32 %v186, 2147483648
  %v192 = vmul.f32 %v188, 1.442695
  %v193 = vpow.pop %v192
  %v194 = vmul.f32 %v189, 1.442695
  %v195 = vpow.pop %v194
  %v196 = vmul.f32 %v190, 1.442695
  %v197 = vpow.pop %v196
  %v198 = vmul.f32 %v191, 1.442695
  %v199 = vpow.pop %v198
  %v200 = vadd.f32 %v193, 1.0
  %v201 = vadd.f32 %v195, 1.0
  %v202 = vadd.f32 %v197, 1.0
  %v203 = vadd.f32 %v199, 1.0
  %v204 = vrcp.pop %v200
  %v205 = vmul.f32 1.0, %v204
  %v206 = vrcp.pop %v201
  %v207 = vmul.f32 1.0, %v206
  %v208 = vrcp.pop %v202
  %v209 = vmul.f32 1.0, %v208
  %v210 = vrcp.pop %v203
  %v211 = vmul.f32 1.0, %v210
  %v212 = vmul.f32 %v180, %v205
  %v213 = vmul.f32 %v182, %v207
  %v214 = vmul.f32 %v184, %v209
  %v215 = vmul.f32 %v186, %v211
  %v216 = vpack.c.bf16 %v214, %v212
  %v217 = vpack.c.bf16 %v215, %v213
  %v218 = vld [vmem:[%s5] sm:$0xf]
  %v219 = vld [vmem:[%s5 + $0x4] sm:$0xf]
  %v220 = vld [vmem:[%s5 + $0x8] sm:$0xf]
  %v221 = vld [vmem:[%s5 + $0xc] sm:$0xf]
  %v222 = vld [vmem:[%s5 + $0x10] sm:$0xf]
  %v223 = vld [vmem:[%s5 + $0x14] sm:$0xf]
  %v224 = vld [vmem:[%s5 + $0x18] sm:$0xf]
  %v225 = vld [vmem:[%s5 + $0x1c] sm:$0xf]
  %v226 = vld [vmem:[%s5 + $0x20] sm:$0xf]
  %v227 = vld [vmem:[%s5 + $0x24] sm:$0xf]
  %v228 = vld [vmem:[%s5 + $0x28] sm:$0xf]
  %v229 = vld [vmem:[%s5 + $0x2c] sm:$0xf]
  %v230 = vld [vmem:[%s5 + $0x30] sm:$0xf]
  %v231 = vld [vmem:[%s5 + $0x34] sm:$0xf]
  %v232 = vld [vmem:[%s5 + $0x38] sm:$0xf]
  %v233 = vld [vmem:[%s5 + $0x3c] sm:$0xf]
  %v234 = vld [vmem:[%s5 + $0x40] sm:$0xf]
  %v235 = vld [vmem:[%s5 + $0x44] sm:$0xf]
  %v236 = vld [vmem:[%s5 + $0x48] sm:$0xf]
  %v237 = vld [vmem:[%s5 + $0x4c] sm:$0xf]
  %v238 = vld [vmem:[%s5 + $0x50] sm:$0xf]
  %v239 = vld [vmem:[%s5 + $0x54] sm:$0xf]
  %v240 = vld [vmem:[%s5 + $0x58] sm:$0xf]
  %v241 = vld [vmem:[%s5 + $0x5c] sm:$0xf]
  %v242 = vld [vmem:[%s5 + $0x60] sm:$0xf]
  %v243 = vld [vmem:[%s5 + $0x64] sm:$0xf]
  %v244 = vld [vmem:[%s5 + $0x68] sm:$0xf]
  %v245 = vld [vmem:[%s5 + $0x6c] sm:$0xf]
  %v246 = vld [vmem:[%s5 + $0x70] sm:$0xf]
  %v247 = vld [vmem:[%s5 + $0x74] sm:$0xf]
  %v248 = vld [vmem:[%s5 + $0x78] sm:$0xf]
  %v249 = vld [vmem:[%s5 + $0x7c] sm:$0xf]
  %v250 = vld [vmem:[%s6] sm:$0x1]
  %v252 = vlaneseq
  %v253 = vshrl.u32 %v252, 7
  %v254 = vsub.s32 0, %v253
  %v255 = vrot.slane %v250, %v254
  %v289 = vunpack.c.l.b16 %v218
  %v290 = vunpack.c.l.b16 %v219
  %v291 = vunpack.c.l.b16 %v220
  %v292 = vunpack.c.l.b16 %v221
  %v293 = vunpack.c.l.b16 %v222
  %v294 = vunpack.c.l.b16 %v223
  %v295 = vunpack.c.l.b16 %v224
  %v296 = vunpack.c.l.b16 %v225
  %v297 = vunpack.c.l.b16 %v226
  %v298 = vunpack.c.l.b16 %v227
  %v299 = vunpack.c.l.b16 %v228
  %v300 = vunpack.c.l.b16 %v229
  %v301 = vunpack.c.l.b16 %v230
  %v302 = vunpack.c.l.b16 %v231
  %v303 = vunpack.c.l.b16 %v232
  %v304 = vunpack.c.l.b16 %v233
  %v305 = vunpack.c.l.b16 %v234
  %v306 = vunpack.c.l.b16 %v235
  %v307 = vunpack.c.l.b16 %v236
  %v308 = vunpack.c.l.b16 %v237
  %v309 = vunpack.c.l.b16 %v238
  %v310 = vunpack.c.l.b16 %v239
  %v311 = vunpack.c.l.b16 %v240
  %v312 = vunpack.c.l.b16 %v241
  %v313 = vunpack.c.l.b16 %v242
  %v314 = vunpack.c.l.b16 %v243
  %v315 = vunpack.c.l.b16 %v244
  %v316 = vunpack.c.l.b16 %v245
  %v317 = vunpack.c.l.b16 %v246
  %v318 = vunpack.c.l.b16 %v247
  %v319 = vunpack.c.l.b16 %v248
  %v320 = vunpack.c.l.b16 %v249
  %v321 = vpack.c.b16 %v290, %v289
  %v322 = vpack.c.b16 %v292, %v291
  %v323 = vpack.c.b16 %v294, %v293
  %v324 = vpack.c.b16 %v296, %v295
  %v325 = vpack.c.b16 %v298, %v297
  %v326 = vpack.c.b16 %v300, %v299
  %v327 = vpack.c.b16 %v302, %v301
  %v328 = vpack.c.b16 %v304, %v303
  %v329 = vpack.c.b16 %v306, %v305
  %v330 = vpack.c.b16 %v308, %v307
  %v331 = vpack.c.b16 %v310, %v309
  %v332 = vpack.c.b16 %v312, %v311
  %v333 = vpack.c.b16 %v314, %v313
  %v334 = vpack.c.b16 %v316, %v315
  %v335 = vpack.c.b16 %v318, %v317
  %v336 = vpack.c.b16 %v320, %v319
  %353 = vmatprep.subr.bf16.mxu0 0
  %354 = vmatpush1.bf16.msra.mxu0 %v321
  %355 = vmatprep.subr.bf16.mxu0 0
  %356 = vmatpush1.bf16.msra.mxu0 %v322
  %357 = vmatprep.subr.bf16.mxu0 0
  %358 = vmatpush1.bf16.msra.mxu0 %v323
  %359 = vmatprep.subr.bf16.mxu0 0
  %360 = vmatpush1.bf16.msra.mxu0 %v324
  %361 = vmatprep.subr.bf16.mxu0 0
  %362 = vmatpush1.bf16.msra.mxu0 %v325
  %363 = vmatprep.subr.bf16.mxu0 0
  %364 = vmatpush1.bf16.msra.mxu0 %v326
  %365 = vmatprep.subr.bf16.mxu0 0
  %366 = vmatpush1.bf16.msra.mxu0 %v327
  %367 = vmatprep.subr.bf16.mxu0 0
  %368 = vmatpush1.bf16.msra.mxu0 %v328
  %369 = vmatprep.subr.bf16.mxu0 0
  %370 = vmatpush1.bf16.msra.mxu0 %v329
  %371 = vmatprep.subr.bf16.mxu0 0
  %372 = vmatpush1.bf16.msra.mxu0 %v330
  %373 = vmatprep.subr.bf16.mxu0 0
  %374 = vmatpush1.bf16.msra.mxu0 %v331
  %375 = vmatprep.subr.bf16.mxu0 0
  %376 = vmatpush1.bf16.msra.mxu0 %v332
  %377 = vmatprep.subr.bf16.mxu0 0
  %378 = vmatpush1.bf16.msra.mxu0 %v333
  %379 = vmatprep.subr.bf16.mxu0 0
  %380 = vmatpush1.bf16.msra.mxu0 %v334
  %381 = vmatprep.subr.bf16.mxu0 0
  %382 = vmatpush1.bf16.msra.mxu0 %v335
  %383 = vmatprep.subr.bf16.mxu0 0
  %384 = vmatpush1.bf16.msra.mxu0 %v336
  %385 = vmatprep.mubr.bf16.mxu0 %v217
  %386 = vmatmul.mubr.bf16.gmra.mrb[0].mxu0 %v216
  %v387 = vpop.f32.mrb[0].mxu0
  %v388 = vadd.f32 %v255, %v387
  %v389 = vpop.f32.mrb[0].mxu0
  %v390 = vpop.f32.mrb[0].mxu0
  %v391 = vadd.f32 %v255, %v390
  %v392 = vpop.f32.mrb[0].mxu0
  %393 = vdwg.mxu0
  %v394 = vmul.f32 %v388, 0.5
  %v395 = vmul.f32 %v391, 0.5
  %v396 = vadd.f32 %v33, %v394
  %v397 = vadd.f32 %v34, %v395
  %v398 = vld [vmem:[%s7] sm:$0x1]
  %v399 = vld [vmem:[%s8] sm:$0x1]
  %v400 = vsel %vm37, %v396, 0.0
  %401 = vadd.xlane.f32.xlu0 %v400
  %v402 = vpop.xlane.xlu0 %401
  %v403 = vsel %vm37, %v397, 0.0
  %404 = vadd.xlane.f32.xlu0 %v403
  %v405 = vpop.xlane.xlu0 %404
  %v406 = vmul.f32 %v402, %v44
  %v407 = vmul.f32 %v405, %v44
  %v408 = vsub.f32 %v396, %v406
  %v409 = vsub.f32 %v397, %v407
  %v410 = vmul.f32 %v408, %v408
  %v411 = vmul.f32 %v409, %v409
  %v412 = vsel %vm37, %v410, 0.0
  %413 = vadd.xlane.f32.xlu0 %v412
  %v414 = vpop.xlane.xlu0 %413
  %v415 = vsel %vm37, %v411, 0.0
  %416 = vadd.xlane.f32.xlu0 %v415
  %v417 = vpop.xlane.xlu0 %416
  %v418 = vmul.f32 %v414, %v44
  %v419 = vmul.f32 %v417, %v44
  %v420 = vadd.f32 %v418, 1e-05
  %v421 = vadd.f32 %v419, 1e-05
  %v422 = vrsqrt.pop %v420
  %v423 = vrsqrt.pop %v421
  %v424 = vmul.f32 %v408, %v422
  %v425 = vmul.f32 %v409, %v423
  %v427 = vlaneseq
  %v428 = vshrl.u32 %v427, 7
  %v429 = vsub.s32 0, %v428
  %v430 = vrot.slane %v398, %v429
  %v432 = vmul.f32 %v424, %v430
  %v433 = vmul.f32 %v425, %v430
  %v435 = vlaneseq
  %v436 = vshrl.u32 %v435, 7
  %v437 = vsub.s32 0, %v436
  %v438 = vrot.slane %v399, %v437
  %v440 = vadd.f32 %v432, %v438
  %v441 = vadd.f32 %v433, %v438
  %442 = vst.msk [vmem:[%s9] sm:$0xff] %vm37, %v440
  %443 = vst.msk [vmem:[%s9 + $0x8] sm:$0xff] %vm37, %v441
  // Predicated region
  $region38: #{conformer_feature_extractor.14} parent=0 // pred_check
    _
  $region39: #{conformer_feature_extractor.14} parent=0 // pred_check_branch
    %445 = sbr.rel (0) target = $region41
  $region40: #{conformer_feature_extractor.14} parent=0 // pred_region
    _
  $region41: #{conformer_feature_extractor.14} parent=0 // pred_fallthru
    _
  // Predicated region
  $region42: #{conformer_feature_extractor.14} parent=0 // pred_check
    _
  $region43: #{conformer_feature_extractor.14} parent=0 // pred_check_branch
    %447 = sbr.rel (0) target = $region45
  $region44: #{conformer_feature_extractor.14} parent=0 // pred_region
    _
  $region45: #{conformer_feature_extractor.14} parent=0 // pred_fallthru
    _

// kernel: conformer_feature_extractor.19
$region0: #{conformer_feature_extractor.19}
  #allocation0 [shape = 'u32[]', space=smem, size = 0x4, offset = 0x4, fixed_abs, tag = 'smem constant byte address 0x4 - core index']
  #allocation1 [shape = 'u32[144,128]{1,0:T(1,128)}', space=vmem, size = 0x12000, scoped, tag = 'internal scratch']
  %s0 = inlined_call_operand.vmem [shape: f32[16,64], index: 0, kind: input, shape index: {}]
  %s1 = inlined_call_operand.vmem [shape: bf16[64,32], index: 1, kind: input, shape index: {}]
  %s2 = inlined_call_operand.vmem [shape: f32[1,32], index: 2, kind: input, shape index: {}]
  %s3 = inlined_call_operand.hbm [shape: f32[16,32], index: 3, kind: output, shape index: {}]
  %s4 = sld [smem:[#allocation0]]
  $region22: #{conformer_feature_extractor.19} parent=0
    _
  %s6 = ssub.s32 1, %s4
  %s7 = scalar_select 0, %s6, %s4
  $region1: #{conformer_feature_extractor.19} parent=0
    #allocation2 [shape = 'u8[8192]{0}', space=vmem, size = 0x2000, scoped, tag = 'output window, operand 0, single buffered']
    #allocation3 [shape = 's32[1]{0}', space=sflag, size = 0x4, scoped, tag = 'scoped memory for conformer_feature_extractor.19']
    %8 = vsyncpa [#allocation3], 0
    // Predicated region
    $region2: #{conformer_feature_extractor.19} parent=1 // pred_check
      _
    $region3: #{conformer_feature_extractor.19} parent=1 // pred_check_branch
      %10 = sbr.rel (0) target = $region5
    $region4: #{conformer_feature_extractor.19} parent=1 // pred_region
      _
    $region5: #{conformer_feature_extractor.19} parent=1 // pred_fallthru
      _
    // Predicated region
    $region6: #{conformer_feature_extractor.19} parent=1 // pred_check
      _
    $region7: #{conformer_feature_extractor.19} parent=1 // pred_check_branch
      %12 = sbr.rel (0) target = $region9
    $region8: #{conformer_feature_extractor.19} parent=1 // pred_region
      _
    $region9: #{conformer_feature_extractor.19} parent=1 // pred_fallthru
      _
    // Predicated region
    $region10: #{conformer_feature_extractor.19} parent=1 // pred_check
      _
    $region11: #{conformer_feature_extractor.19} parent=1 // pred_check_branch
      %14 = sbr.rel (0) target = $region13
    $region12: #{conformer_feature_extractor.19} parent=1 // pred_region
      _
    $region13: #{conformer_feature_extractor.19} parent=1 // pred_fallthru
      _
    %v16 = vld [vmem:[%s0] sm:$0xff]
    %v17 = vld [vmem:[%s0 + $0x8] sm:$0xff]
    %v18 = vpack.c.bf16 %v17, %v16
    %v19 = vld [vmem:[%s1] sm:$0xf]
    %v20 = vld [vmem:[%s1 + $0x4] sm:$0xf]
    %v21 = vld [vmem:[%s1 + $0x8] sm:$0xf]
    %v22 = vld [vmem:[%s1 + $0xc] sm:$0xf]
    %v23 = vld [vmem:[%s1 + $0x10] sm:$0xf]
    %v24 = vld [vmem:[%s1 + $0x14] sm:$0xf]
    %v25 = vld [vmem:[%s1 + $0x18] sm:$0xf]
    %v26 = vld [vmem:[%s1 + $0x1c] sm:$0xf]
    %v27 = vld [vmem:[%s2] sm:$0x1]
    %v29 = vlaneseq
    %v30 = vshrl.u32 %v29, 7
    %v31 = vsub.s32 0, %v30
    %v32 = vrot.slane %v27, %v31
    %v42 = vunpack.c.l.b16 %v19
    %v43 = vunpack.c.l.b16 %v20
    %v44 = vunpack.c.l.b16 %v21
    %v45 = vunpack.c.l.b16 %v22
    %v46 = vunpack.c.l.b16 %v23
    %v47 = vunpack.c.l.b16 %v24
    %v48 = vunpack.c.l.b16 %v25
    %v49 = vunpack.c.l.b16 %v26
    %v50 = vpack.c.b16 %v43, %v42
    %v51 = vpack.c.b16 %v45, %v44
    %v52 = vpack.c.b16 %v47, %v46
    %v53 = vpack.c.b16 %v49, %v48
    %vm58 = vcmask 523264
    %v60 = vsel %vm58, %v18, 0
    %62 = vmatprep.subr.bf16.mxu0 0
    %63 = vmatpush1.bf16.msra.mxu0 %v50
    %64 = vmatprep.subr.bf16.mxu0 0
    %65 = vmatpush1.bf16.msra.mxu0 %v51
    %66 = vmatprep.subr.bf16.mxu0 0
    %67 = vmatpush1.bf16.msra.mxu0 %v52
    %68 = vmatprep.subr.bf16.mxu0 0
    %69 = vmatpush1.bf16.msra.mxu0 %v53
    %70 = vmatprep.subr.bf16.mxu0 0
    %71 = vmatpush1.bf16.msra.mxu0 0
    %72 = vmatprep.subr.bf16.mxu0 0
    %73 = vmatpush1.bf16.msra.mxu0 0
    %74 = vmatprep.subr.bf16.mxu0 0
    %75 = vmatpush1.bf16.msra.mxu0 0
    %76 = vmatprep.subr.bf16.mxu0 0
    %77 = vmatpush1.bf16.msra.mxu0 0
    %78 = vmatprep.subr.bf16.mxu0 0
    %79 = vmatpush1.bf16.msra.mxu0 0
    %80 = vmatprep.subr.bf16.mxu0 0
    %81 = vmatpush1.bf16.msra.mxu0 0
    %82 = vmatprep.subr.bf16.mxu0 0
    %83 = vmatpush1.bf16.msra.mxu0 0
    %84 = vmatprep.subr.bf16.mxu0 0
    %85 = vmatpush1.bf16.msra.mxu0 0
    %86 = vmatprep.subr.bf16.mxu0 0
    %87 = vmatpush1.bf16.msra.mxu0 0
    %88 = vmatprep.subr.bf16.mxu0 0
    %89 = vmatpush1.bf16.msra.mxu0 0
    %90 = vmatprep.subr.bf16.mxu0 0
    %91 = vmatpush1.bf16.msra.mxu0 0
    %92 = vmatprep.subr.bf16.mxu0 0
    %93 = vmatpush1.bf16.msra.mxu0 0
    %94 = vmatprep.mubr.bf16.mxu0 0
    %95 = vmatmul.mubr.bf16.gmra.mrb[0].mxu0 %v60
    %v96 = vpop.f32.mrb[0].mxu0
    %v97 = vadd.f32 %v32, %v96
    %v98 = vpop.f32.mrb[0].mxu0
    %v99 = vpop.f32.mrb[0].mxu0
    %v100 = vadd.f32 %v32, %v99
    %v101 = vpop.f32.mrb[0].mxu0
    %102 = vdwg.mxu0
    %vm103 = vcmask 261120
    %104 = vst.msk [vmem:[#allocation2] sm:$0xff] %vm103, %v97
    %105 = vst.msk [vmem:[#allocation2 + $0x8] sm:$0xff] %vm103, %v100
    // Predicated region
    $region14: #{conformer_feature_extractor.19} parent=1 // pred_check
      _
    $region15: #{conformer_feature_extractor.19} parent=1 // pred_check_branch
      %107 = sbr.rel (0) target = $region17
    $region16: #{conformer_feature_extractor.19} parent=1 // pred_region
      %s109 = ssub.s32 256, 256
      %110 = vsyncadd [#allocation3], %s109
      %s111 = sshll.u32 [#allocation2], 4
      %s112 = int_to_ptr.vmem [resolvable:$true] %s111
      %117 = dma.vmem_to_hbm [thread:$0]  %s112, 256, %s3, [#allocation3], 128, 128, 8
    $region17: #{conformer_feature_extractor.19} parent=1 // pred_fallthru
      _
    // Predicated region
    $region18: #{conformer_feature_extractor.19} parent=1 // pred_check
      _
    $region19: #{conformer_feature_extractor.19} parent=1 // pred_check_branch
      %119 = sbr.rel (0) target = $region21
    $region20: #{conformer_feature_extractor.19} parent=1 // pred_region
      %120 = dma.done [#allocation3], 256
    $region21: #{conformer_feature_extractor.19} parent=1 // pred_fallthru
      _
    %121 = vsyncpa [#allocation3], 1

</llo_original>
